<compile_context>
chip_gen: v7x
topology: tpu7x:2x2x1
jax: 0.10.0
libtpu: 0.0.40
codegen_flags: <defaults>
</compile_context>

<pallas_src>
import jax
import jax.numpy as jnp
from jax import lax
from jax.experimental import pallas as pl
from jax.experimental.pallas import tpu as pltpu


def _round_up(x, m):
    return ((x + m - 1) // m) * m


def _mlp_kernel(x_ref, w1_ref, b1_ref, w2_ref, b2_ref, w3_ref, b3_ref, o_ref):
    # x_ref: (TM, E) bf16     w1: (E, H) bf16   b1: (1, H) f32
    # w2: (H, H) bf16  b2: (1, H) f32   w3: (8, H) bf16 (8 identical rows)
    # b3: (1, 1) f32   o_ref: (1, TM) f32  -- lane-dense output row
    x = x_ref[...]
    h1 = jnp.maximum(
        jnp.dot(x, w1_ref[...], preferred_element_type=jnp.float32) + b1_ref[...],
        0.0).astype(jnp.bfloat16)                                  # (TM, H)
    h2 = jnp.maximum(
        jnp.dot(h1, w2_ref[...], preferred_element_type=jnp.float32) + b2_ref[...],
        0.0).astype(jnp.bfloat16)                                  # (TM, H)
    # Final Linear(H, 1): contract w3's hidden dim against h2's hidden dim
    # (q @ k^T pattern): (8, H) x (TM, H) -> (8, TM).  Row 0 is the real
    # result; keeps logits in the lane dimension so the store is lane-dense.
    # Kernel is HBM-bound on the x stream, so even if this lowers with an
    # RHS-transpose it stays hidden under the x-tile DMA at these sizes.
    z8 = lax.dot_general(
        w3_ref[...], h2,
        dimension_numbers=(((1,), (1,)), ((), ())),
        preferred_element_type=jnp.float32)                        # (8, TM)
    z = z8[0:1, :] + b3_ref[...]                                   # (1, TM)
    o_ref[...] = jax.nn.sigmoid(z).astype(o_ref.dtype)             # Sigmoid


def _vmem_budget_bytes():
    phys = 64 << 20        # conservative default = v7x per-TC physical VMEM
    try:
        info = pltpu.get_tpu_info()
        phys = int(getattr(info, "vmem_capacity_bytes", phys))
    except Exception:
        pass
    # Keep ~25% headroom for Mosaic internal scratch / pipeline state;
    # -> ~48 MiB on v7x, 96 MiB on v5e/v6e.
    return int(min(phys * 3 // 4, 96 << 20))


def nn_clf_forward(emb, params, *, tm=4096):
    """Fused MLP forward. emb: (N, E). Returns (N, 1) float32."""
    w1, b1, w2, b2, w3, b3 = params
    assert emb.ndim == 2
    N, E = emb.shape
    H = w1.shape[1]

    # bf16 MXU operands; f32 accumulation happens inside the kernel.
    x = emb if emb.dtype == jnp.bfloat16 else emb.astype(jnp.bfloat16)
    w1b = w1.astype(jnp.bfloat16)
    w2b = w2.astype(jnp.bfloat16)
    # Sublane-replicate the (1, H) final-layer weight to (8, H) so the last
    # contraction's LHS is sublane-aligned (tiny, done once outside the grid).
    w3b = jnp.tile(w3, (8, 1)).astype(jnp.bfloat16)
    b1f = b1.astype(jnp.float32)
    b2f = b2.astype(jnp.float32)
    b3f = b3.astype(jnp.float32)

    # ---- row-tile selection -------------------------------------------------
    # Multiple of 128 (lane-dense output stores; also satisfies the sublane
    # rule on the (tm, E) x-block).  Cap derived from the generation-aware
    # VMEM budget so the cap -- not the default -- decides tm.
    budget = _vmem_budget_bytes()
    weight_bytes = 2 * (E * H + H * H + 8 * H) + 4 * (2 * H + 1)
    resident = 2 * weight_bytes                      # worst case: double-buffered
    # x (2x buf, bf16) + f32/bf16 activations + z8 + out (2x buf, f32)
    bytes_per_row = 4 * E + 12 * H + 48
    usable = max(budget - resident - (4 << 20), 1 << 20)
    tm_cap = max(128, (usable // bytes_per_row) // 128 * 128)

    tm = max(128, (int(tm) // 128) * 128)
    tm = min(tm, tm_cap, _round_up(N, 128))
    # Keep >= 2 grid steps whenever there is enough work so both v7x
    # TensorCores are used (measured-neutral on single-TC v5e/v6e).
    if N > 128:
        tm = min(tm, _round_up(pl.cdiv(N, 2), 128))
    num_tiles = pl.cdiv(N, tm)

    cost = pl.CostEstimate(
        flops=2 * N * (E * H + H * H + H),
        transcendentals=N,
        bytes_accessed=N * E * x.dtype.itemsize + weight_bytes + N * 4,
    )

    def run(single_buffer_weights):
        def wspec(shape):
            if single_buffer_weights:
                # Constant block index -> a single VMEM buffer is enough.
                return pl.BlockSpec(shape, lambda i: (0, 0),
                                    pipeline_mode=pl.Buffered(1))
            return pl.BlockSpec(shape, lambda i: (0, 0))

        return pl.pallas_call(
            _mlp_kernel,
            out_shape=jax.ShapeDtypeStruct((1, N), jnp.float32),
            grid_spec=pltpu.PrefetchScalarGridSpec(
                num_scalar_prefetch=0,
                grid=(num_tiles,),
                in_specs=[
                    pl.BlockSpec((tm, E), lambda i: (i, 0)),   # streamed x tile
                    wspec((E, H)),                             # w1 (VMEM-resident)
                    wspec((1, H)),                             # b1
                    wspec((H, H)),                             # w2
                    wspec((1, H)),                             # b2
                    wspec((8, H)),                             # w3 (replicated rows)
                    wspec((1, 1)),                             # b3
                ],
                out_specs=pl.BlockSpec((1, tm), lambda i: (0, i)),  # lane-dense
            ),
            compiler_params=pltpu.CompilerParams(
                dimension_semantics=("parallel",),
                vmem_limit_bytes=int(budget),
            ),
            cost_estimate=cost,
        )(x, w1b, b1f, w2b, b2f, w3b, b3f)

    try:
        out = jax.block_until_ready(run(True))
    except Exception:
        # Fallback for JAX versions without BlockSpec(pipeline_mode=...):
        # default double-buffered resident weights, identical numerics.
        out = jax.block_until_ready(run(False))

    return out.reshape(N, 1)


def init_params(key, embedding_size, hidden=64):
    """Deterministic init mimicking PyTorch nn.Linear default (uniform +-1/sqrt(fan_in))."""
    def linear(k, fan_in, w_shape, b_shape):
        kw, kb = jax.random.split(k)
        bound = 1.0 / jnp.sqrt(fan_in)
        w = jax.random.uniform(kw, w_shape, jnp.float32, -bound, bound)
        b = jax.random.uniform(kb, b_shape, jnp.float32, -bound, bound)
        return w, b

    k1, k2, k3 = jax.random.split(key, 3)
    w1, b1 = linear(k1, embedding_size, (embedding_size, hidden), (1, hidden))
    w2, b2 = linear(k2, hidden, (hidden, hidden), (1, hidden))
    w3, b3 = linear(k3, hidden, (1, hidden), (1, 1))   # PyTorch (out=1, in=H) layout
    return (w1, b1, w2, b2, w3, b3)


def nn_clf_forward_ref(emb, params):
    """Pure-JAX f32 reference for correctness checking."""
    w1, b1, w2, b2, w3, b3 = params
    h1 = jnp.maximum(emb @ w1 + b1, 0.0)
    h2 = jnp.maximum(h1 @ w2 + b2, 0.0)
    return jax.nn.sigmoid(h2 @ w3.T + b3)


# TODO(synk): NNClf.fit (Adam + BCE training loop) is host-side training code,
# not part of the forward pass; only forward/predict is implemented here.

if __name__ == "__main__":
    key = jax.random.PRNGKey(0)
    k_emb, k_par = jax.random.split(key)

    embedding_size = 32
    N = 1000  # not a tile multiple on purpose: exercises the partial last block
    emb = jax.random.normal(k_emb, (N, embedding_size), jnp.float32)
    params = init_params(k_par, embedding_size)

    out = jax.block_until_ready(nn_clf_forward(emb, params))

    ref = nn_clf_forward_ref(emb, params)
    assert out.shape == (N, 1)
    # bf16 MXU inputs -> looser tolerance than the pure-f32 path.
    assert jnp.allclose(out, ref, atol=2e-2, rtol=2e-2), "mismatch vs reference"

    print("KERNEL_OK")
</pallas_src>

<mosaic_0001>
module attributes {stable_mosaic.version = 11 : i64} {
  func.func @_mlp_kernel(%arg0: i32, %arg1: memref<512x32xbf16, #tpu.memory_space<vmem>>, %arg2: memref<32x64xbf16, #tpu.memory_space<vmem>>, %arg3: memref<1x64xf32, #tpu.memory_space<vmem>>, %arg4: memref<64x64xbf16, #tpu.memory_space<vmem>>, %arg5: memref<1x64xf32, #tpu.memory_space<vmem>>, %arg6: memref<8x64xbf16, #tpu.memory_space<vmem>>, %arg7: memref<1x1xf32, #tpu.memory_space<vmem>>, %arg8: memref<1x512xf32, #tpu.memory_space<vmem>>) attributes {dimension_semantics = [#tpu.dimension_semantics<parallel>], iteration_bounds = array<i64: 2>, scalar_prefetch = 0 : i64, scratch_operands = 0 : i64, tpu.core_type = #tpu.core_type<tc>, window_params = [{transform_indices = @transform_0, window_bounds = array<i64: 512, 32>}, {pipeline_mode = #tpu.pipeline_mode<synchronous>, transform_indices = @transform_1, window_bounds = array<i64: 32, 64>}, {pipeline_mode = #tpu.pipeline_mode<synchronous>, transform_indices = @transform_2, window_bounds = array<i64: 1, 64>}, {pipeline_mode = #tpu.pipeline_mode<synchronous>, transform_indices = @transform_3, window_bounds = array<i64: 64, 64>}, {pipeline_mode = #tpu.pipeline_mode<synchronous>, transform_indices = @transform_4, window_bounds = array<i64: 1, 64>}, {pipeline_mode = #tpu.pipeline_mode<synchronous>, transform_indices = @transform_5, window_bounds = array<i64: 8, 64>}, {pipeline_mode = #tpu.pipeline_mode<synchronous>, transform_indices = @transform_6, window_bounds = array<i64: 1, 1>}, {transform_indices = @transform_7, window_bounds = array<i64: 1, 512>}]} {
    %c0 = arith.constant 0 : index
    %c0_0 = arith.constant 0 : index
    %0 = vector.load %arg1[%c0, %c0_0] : memref<512x32xbf16, #tpu.memory_space<vmem>>, vector<512x32xbf16>
    %c0_1 = arith.constant 0 : index
    %c0_2 = arith.constant 0 : index
    %1 = vector.load %arg2[%c0_1, %c0_2] : memref<32x64xbf16, #tpu.memory_space<vmem>>, vector<32x64xbf16>
    %cst = arith.constant dense<0.000000e+00> : vector<512x64xf32>
    %2 = tpu.matmul %0, %1, %cst {dimension_numbers = #tpu.dot_dimension_numbers<[1], [0], [0], [1], [0, 0, 1, 1], [], []>} : vector<512x32xbf16>, vector<32x64xbf16>, vector<512x64xf32> -> vector<512x64xf32>
    %c0_3 = arith.constant 0 : index
    %c0_4 = arith.constant 0 : index
    %3 = vector.load %arg3[%c0_3, %c0_4] : memref<1x64xf32, #tpu.memory_space<vmem>>, vector<1x64xf32>
    %4 = vector.broadcast %3 : vector<1x64xf32> to vector<512x64xf32>
    %5 = arith.addf %2, %4 : vector<512x64xf32>
    %cst_5 = arith.constant 0.000000e+00 : f32
    %6 = vector.broadcast %cst_5 : f32 to vector<512x64xf32>
    %7 = arith.maximumf %5, %6 : vector<512x64xf32>
    %8 = arith.truncf %7 : vector<512x64xf32> to vector<512x64xbf16>
    %c0_6 = arith.constant 0 : index
    %c0_7 = arith.constant 0 : index
    %9 = vector.load %arg4[%c0_6, %c0_7] : memref<64x64xbf16, #tpu.memory_space<vmem>>, vector<64x64xbf16>
    %cst_8 = arith.constant dense<0.000000e+00> : vector<512x64xf32>
    %10 = tpu.matmul %8, %9, %cst_8 {dimension_numbers = #tpu.dot_dimension_numbers<[1], [0], [0], [1], [0, 0, 1, 1], [], []>} : vector<512x64xbf16>, vector<64x64xbf16>, vector<512x64xf32> -> vector<512x64xf32>
    %c0_9 = arith.constant 0 : index
    %c0_10 = arith.constant 0 : index
    %11 = vector.load %arg5[%c0_9, %c0_10] : memref<1x64xf32, #tpu.memory_space<vmem>>, vector<1x64xf32>
    %12 = vector.broadcast %11 : vector<1x64xf32> to vector<512x64xf32>
    %13 = arith.addf %10, %12 : vector<512x64xf32>
    %cst_11 = arith.constant 0.000000e+00 : f32
    %14 = vector.broadcast %cst_11 : f32 to vector<512x64xf32>
    %15 = arith.maximumf %13, %14 : vector<512x64xf32>
    %16 = arith.truncf %15 : vector<512x64xf32> to vector<512x64xbf16>
    %c0_12 = arith.constant 0 : index
    %c0_13 = arith.constant 0 : index
    %17 = vector.load %arg6[%c0_12, %c0_13] : memref<8x64xbf16, #tpu.memory_space<vmem>>, vector<8x64xbf16>
    %cst_14 = arith.constant dense<0.000000e+00> : vector<8x512xf32>
    %18 = tpu.matmul %17, %16, %cst_14 {dimension_numbers = #tpu.dot_dimension_numbers<[1], [1], [0], [0], [0, 0, 1, 0], [], []>} : vector<8x64xbf16>, vector<512x64xbf16>, vector<8x512xf32> -> vector<8x512xf32>
    %19 = vector.extract_strided_slice %18 {offsets = [0, 0], sizes = [1, 512], strides = [1, 1]} : vector<8x512xf32> to vector<1x512xf32>
    %c0_15 = arith.constant 0 : index
    %c0_16 = arith.constant 0 : index
    %20 = vector.load %arg7[%c0_15, %c0_16] : memref<1x1xf32, #tpu.memory_space<vmem>>, vector<1x1xf32>
    %21 = vector.broadcast %20 : vector<1x1xf32> to vector<1x512xf32>
    %22 = arith.addf %19, %21 : vector<1x512xf32>
    %23 = arith.negf %22 : vector<1x512xf32>
    %24 = math.exp %23 : vector<1x512xf32>
    %cst_17 = arith.constant 1.000000e+00 : f32
    %25 = vector.broadcast %cst_17 : f32 to vector<1x512xf32>
    %26 = arith.addf %25, %24 : vector<1x512xf32>
    %27 = arith.divf %25, %26 : vector<1x512xf32>
    %c0_18 = arith.constant 0 : index
    %c0_19 = arith.constant 0 : index
    %28 = vector.load %arg8[%c0_18, %c0_19] : memref<1x512xf32, #tpu.memory_space<vmem>>, vector<1x512xf32>
    tpu.vector_store %arg8[%c0_18, %c0_19], %27 {strides = array<i32>} : memref<1x512xf32, #tpu.memory_space<vmem>>, vector<1x512xf32>,
    return
  }
  func.func @transform_0(%arg0: i32) -> (i32, i32) {
    %c0_i32 = arith.constant 0 : i32
    %c0_i32_0 = arith.constant 0 : i32
    return %arg0, %c0_i32 : i32, i32
  }
  func.func @transform_1(%arg0: i32) -> (i32, i32) {
    %c0_i32 = arith.constant 0 : i32
    %c0_i32_0 = arith.constant 0 : i32
    %c0_i32_1 = arith.constant 0 : i32
    return %c0_i32, %c0_i32_0 : i32, i32
  }
  func.func @transform_2(%arg0: i32) -> (i32, i32) {
    %c0_i32 = arith.constant 0 : i32
    %c0_i32_0 = arith.constant 0 : i32
    %c0_i32_1 = arith.constant 0 : i32
    return %c0_i32, %c0_i32_0 : i32, i32
  }
  func.func @transform_3(%arg0: i32) -> (i32, i32) {
    %c0_i32 = arith.constant 0 : i32
    %c0_i32_0 = arith.constant 0 : i32
    %c0_i32_1 = arith.constant 0 : i32
    return %c0_i32, %c0_i32_0 : i32, i32
  }
  func.func @transform_4(%arg0: i32) -> (i32, i32) {
    %c0_i32 = arith.constant 0 : i32
    %c0_i32_0 = arith.constant 0 : i32
    %c0_i32_1 = arith.constant 0 : i32
    return %c0_i32, %c0_i32_0 : i32, i32
  }
  func.func @transform_5(%arg0: i32) -> (i32, i32) {
    %c0_i32 = arith.constant 0 : i32
    %c0_i32_0 = arith.constant 0 : i32
    %c0_i32_1 = arith.constant 0 : i32
    return %c0_i32, %c0_i32_0 : i32, i32
  }
  func.func @transform_6(%arg0: i32) -> (i32, i32) {
    %c0_i32 = arith.constant 0 : i32
    %c0_i32_0 = arith.constant 0 : i32
    %c0_i32_1 = arith.constant 0 : i32
    return %c0_i32, %c0_i32_0 : i32, i32
  }
  func.func @transform_7(%arg0: i32) -> (i32, i32) {
    %c0_i32 = arith.constant 0 : i32
    %c0_i32_0 = arith.constant 0 : i32
    return %c0_i32, %arg0 : i32, i32
  }
}

module attributes {stable_mosaic.version = 11 : i64} {
  func.func @_mlp_kernel(%arg0: i32, %arg1: memref<512x32xbf16, #tpu.memory_space<vmem>>, %arg2: memref<32x64xbf16, #tpu.memory_space<vmem>>, %arg3: memref<1x64xf32, #tpu.memory_space<vmem>>, %arg4: memref<64x64xbf16, #tpu.memory_space<vmem>>, %arg5: memref<1x64xf32, #tpu.memory_space<vmem>>, %arg6: memref<8x64xbf16, #tpu.memory_space<vmem>>, %arg7: memref<1x1xf32, #tpu.memory_space<vmem>>, %arg8: memref<1x512xf32, #tpu.memory_space<vmem>>) attributes {dimension_semantics = [#tpu.dimension_semantics<parallel>], iteration_bounds = array<i64: 2>, scalar_prefetch = 0 : i64, scratch_operands = 0 : i64, tpu.core_type = #tpu.core_type<tc>, window_params = [{transform_indices = @transform_0, window_bounds = array<i64: 512, 32>}, {pipeline_mode = #tpu.pipeline_mode<synchronous>, transform_indices = @transform_1, window_bounds = array<i64: 32, 64>}, {pipeline_mode = #tpu.pipeline_mode<synchronous>, transform_indices = @transform_2, window_bounds = array<i64: 1, 64>}, {pipeline_mode = #tpu.pipeline_mode<synchronous>, transform_indices = @transform_3, window_bounds = array<i64: 64, 64>}, {pipeline_mode = #tpu.pipeline_mode<synchronous>, transform_indices = @transform_4, window_bounds = array<i64: 1, 64>}, {pipeline_mode = #tpu.pipeline_mode<synchronous>, transform_indices = @transform_5, window_bounds = array<i64: 8, 64>}, {pipeline_mode = #tpu.pipeline_mode<synchronous>, transform_indices = @transform_6, window_bounds = array<i64: 1, 1>}, {transform_indices = @transform_7, window_bounds = array<i64: 1, 512>}]} {
    %c0 = arith.constant 0 : index
    %c0_0 = arith.constant 0 : index
    %0 = vector.load %arg1[%c0, %c0_0] : memref<512x32xbf16, #tpu.memory_space<vmem>>, vector<512x32xbf16>
    %c0_1 = arith.constant 0 : index
    %c0_2 = arith.constant 0 : index
    %1 = vector.load %arg2[%c0_1, %c0_2] : memref<32x64xbf16, #tpu.memory_space<vmem>>, vector<32x64xbf16>
    %cst = arith.constant dense<0.000000e+00> : vector<512x64xf32>
    %2 = tpu.matmul %0, %1, %cst {dimension_numbers = #tpu.dot_dimension_numbers<[1], [0], [0], [1], [0, 0, 1, 1], [], []>} : vector<512x32xbf16>, vector<32x64xbf16>, vector<512x64xf32> -> vector<512x64xf32>
    %c0_3 = arith.constant 0 : index
    %c0_4 = arith.constant 0 : index
    %3 = vector.load %arg3[%c0_3, %c0_4] : memref<1x64xf32, #tpu.memory_space<vmem>>, vector<1x64xf32>
    %4 = vector.broadcast %3 : vector<1x64xf32> to vector<512x64xf32>
    %5 = arith.addf %2, %4 : vector<512x64xf32>
    %cst_5 = arith.constant 0.000000e+00 : f32
    %6 = vector.broadcast %cst_5 : f32 to vector<512x64xf32>
    %7 = arith.maximumf %5, %6 : vector<512x64xf32>
    %8 = arith.truncf %7 : vector<512x64xf32> to vector<512x64xbf16>
    %c0_6 = arith.constant 0 : index
    %c0_7 = arith.constant 0 : index
    %9 = vector.load %arg4[%c0_6, %c0_7] : memref<64x64xbf16, #tpu.memory_space<vmem>>, vector<64x64xbf16>
    %cst_8 = arith.constant dense<0.000000e+00> : vector<512x64xf32>
    %10 = tpu.matmul %8, %9, %cst_8 {dimension_numbers = #tpu.dot_dimension_numbers<[1], [0], [0], [1], [0, 0, 1, 1], [], []>} : vector<512x64xbf16>, vector<64x64xbf16>, vector<512x64xf32> -> vector<512x64xf32>
    %c0_9 = arith.constant 0 : index
    %c0_10 = arith.constant 0 : index
    %11 = vector.load %arg5[%c0_9, %c0_10] : memref<1x64xf32, #tpu.memory_space<vmem>>, vector<1x64xf32>
    %12 = vector.broadcast %11 : vector<1x64xf32> to vector<512x64xf32>
    %13 = arith.addf %10, %12 : vector<512x64xf32>
    %cst_11 = arith.constant 0.000000e+00 : f32
    %14 = vector.broadcast %cst_11 : f32 to vector<512x64xf32>
    %15 = arith.maximumf %13, %14 : vector<512x64xf32>
    %16 = arith.truncf %15 : vector<512x64xf32> to vector<512x64xbf16>
    %c0_12 = arith.constant 0 : index
    %c0_13 = arith.constant 0 : index
    %17 = vector.load %arg6[%c0_12, %c0_13] : memref<8x64xbf16, #tpu.memory_space<vmem>>, vector<8x64xbf16>
    %cst_14 = arith.constant dense<0.000000e+00> : vector<8x512xf32>
    %18 = tpu.matmul %17, %16, %cst_14 {dimension_numbers = #tpu.dot_dimension_numbers<[1], [1], [0], [0], [0, 0, 1, 0], [], []>} : vector<8x64xbf16>, vector<512x64xbf16>, vector<8x512xf32> -> vector<8x512xf32>
    %19 = vector.extract_strided_slice %18 {offsets = [0, 0], sizes = [1, 512], strides = [1, 1]} : vector<8x512xf32> to vector<1x512xf32>
    %c0_15 = arith.constant 0 : index
    %c0_16 = arith.constant 0 : index
    %20 = vector.load %arg7[%c0_15, %c0_16] : memref<1x1xf32, #tpu.memory_space<vmem>>, vector<1x1xf32>
    %21 = vector.broadcast %20 : vector<1x1xf32> to vector<1x512xf32>
    %22 = arith.addf %19, %21 : vector<1x512xf32>
    %23 = arith.negf %22 : vector<1x512xf32>
    %24 = math.exp %23 : vector<1x512xf32>
    %cst_17 = arith.constant 1.000000e+00 : f32
    %25 = vector.broadcast %cst_17 : f32 to vector<1x512xf32>
    %26 = arith.addf %25, %24 : vector<1x512xf32>
    %27 = arith.divf %25, %26 : vector<1x512xf32>
    %c0_18 = arith.constant 0 : index
    %c0_19 = arith.constant 0 : index
    %28 = vector.load %arg8[%c0_18, %c0_19] : memref<1x512xf32, #tpu.memory_space<vmem>>, vector<1x512xf32>
    tpu.vector_store %arg8[%c0_18, %c0_19], %27 {strides = array<i32>} : memref<1x512xf32, #tpu.memory_space<vmem>>, vector<1x512xf32>,
    return
  }
  func.func @transform_0(%arg0: i32) -> (i32, i32) {
    %c0_i32 = arith.constant 0 : i32
    %c0_i32_0 = arith.constant 0 : i32
    return %arg0, %c0_i32 : i32, i32
  }
  func.func @transform_1(%arg0: i32) -> (i32, i32) {
    %c0_i32 = arith.constant 0 : i32
    %c0_i32_0 = arith.constant 0 : i32
    %c0_i32_1 = arith.constant 0 : i32
    return %c0_i32, %c0_i32_0 : i32, i32
  }
  func.func @transform_2(%arg0: i32) -> (i32, i32) {
    %c0_i32 = arith.constant 0 : i32
    %c0_i32_0 = arith.constant 0 : i32
    %c0_i32_1 = arith.constant 0 : i32
    return %c0_i32, %c0_i32_0 : i32, i32
  }
  func.func @transform_3(%arg0: i32) -> (i32, i32) {
    %c0_i32 = arith.constant 0 : i32
    %c0_i32_0 = arith.constant 0 : i32
    %c0_i32_1 = arith.constant 0 : i32
    return %c0_i32, %c0_i32_0 : i32, i32
  }
  func.func @transform_4(%arg0: i32) -> (i32, i32) {
    %c0_i32 = arith.constant 0 : i32
    %c0_i32_0 = arith.constant 0 : i32
    %c0_i32_1 = arith.constant 0 : i32
    return %c0_i32, %c0_i32_0 : i32, i32
  }
  func.func @transform_5(%arg0: i32) -> (i32, i32) {
    %c0_i32 = arith.constant 0 : i32
    %c0_i32_0 = arith.constant 0 : i32
    %c0_i32_1 = arith.constant 0 : i32
    return %c0_i32, %c0_i32_0 : i32, i32
  }
  func.func @transform_6(%arg0: i32) -> (i32, i32) {
    %c0_i32 = arith.constant 0 : i32
    %c0_i32_0 = arith.constant 0 : i32
    %c0_i32_1 = arith.constant 0 : i32
    return %c0_i32, %c0_i32_0 : i32, i32
  }
  func.func @transform_7(%arg0: i32) -> (i32, i32) {
    %c0_i32 = arith.constant 0 : i32
    %c0_i32_0 = arith.constant 0 : i32
    return %c0_i32, %arg0 : i32, i32
  }
}

</mosaic_0001>

<llo_original>
// kernel: tpu_custom_call.1
$region0: #{tpu_custom_call.1}
  #allocation0 [shape = 'u32[]', space=smem, size = 0x4, offset = 0x4, fixed_abs, tag = 'smem constant byte address 0x4 - core index']
  #allocation1 [shape = 'u32[144,128]{1,0:T(1,128)}', space=vmem, size = 0x12000, scoped, tag = 'internal scratch']
  #allocation2 [shape = 'f32[1,1]{1,0:T(1,128)S(1)}', space=vmem, size = 0x200, scoped, tag = 'scoped memory for tpu_custom_call.1']
  %s0 = inlined_call_operand.vmem [shape: bf16[1000,32], index: 0, kind: input, shape index: {}]
  %s1 = inlined_call_operand.vmem [shape: bf16[32,64], index: 1, kind: input, shape index: {}]
  %s2 = inlined_call_operand.vmem [shape: f32[1,64], index: 2, kind: input, shape index: {}]
  %s3 = inlined_call_operand.vmem [shape: bf16[64,64], index: 3, kind: input, shape index: {}]
  %s4 = inlined_call_operand.vmem [shape: f32[1,64], index: 4, kind: input, shape index: {}]
  %s5 = inlined_call_operand.vmem [shape: bf16[8,64], index: 5, kind: input, shape index: {}]
  %s6 = inlined_call_operand.<no memory space> [shape: f32[1,1], index: 6, kind: input, shape index: {}]
  %s7 = inlined_call_operand.hbm [shape: f32[1,1000], index: 7, kind: output, shape index: {}]
  %s8 = sld [smem:[#allocation0]]
  $region61: #{tpu_custom_call.1} parent=0
    _
  %s10 = ssub.s32 1, %s8
  %s11 = scalar_select 0, %s10, %s8
  %v12 = vstv %s6
  %13 = vst [vmem:[#allocation2] sm:$0x1] %v12
  $region1: #{tpu_custom_call.1} parent=0
    #allocation3 [shape = 'u8[4096]{0}', space=vmem, size = 0x1000, scoped, tag = 'output window, operand 0']
    #allocation4 [shape = 's32[2]{0}', space=sflag, size = 0x8, scoped, tag = 'scoped memory for tpu_custom_call.1']
    %14 = vsyncpa [#allocation4], 0
    %s15 = scalar_lea.sflag [#allocation4], 1
    %16 = vsyncpa %s15, 0
    loop: start=0, step=1, limit=4
    $region2: #{tpu_custom_call.1} parent=1 // loop_pre_header
      _
    $region3: #{tpu_custom_call.1} parent=1 // loop_header
      %s18 = sphi 0, %s22
      %p19 = scmp.ge.s32.totalorder %s18, 4
      %s28 = sphi 0, %s30
      %s31 = sphi 0, %s28
      %s32 = sphi 0, %s31
      %s48 = sphi 0, %s32
      %s52 = sphi 0, %s52
      %s54 = sphi 0, %s52
      %s55 = sphi 0, %s54
      %s69 = sphi 0, %s55
      %s73 = sphi 0, %s73
      %s75 = sphi 0, %s73
      %s76 = sphi 0, %s75
      %s90 = sphi 0, %s76
      %s94 = sphi 0, %s94
      %s96 = sphi 0, %s94
      %s97 = sphi 0, %s96
      %s111 = sphi 0, %s97
      %s115 = sphi 0, %s115
      %s117 = sphi 0, %s115
      %s118 = sphi 0, %s117
      %s132 = sphi 0, %s118
      %s136 = sphi 0, %s136
      %s138 = sphi 0, %s136
      %s139 = sphi 0, %s138
      %s153 = sphi 0, %s139
      %s157 = sphi 0, %s157
      %s159 = sphi 0, %s157
      %s160 = sphi 0, %s159
      %s174 = sphi 0, %s160
      %s180 = sphi 0, %s182
      %s183 = sphi 0, %s180
      %s184 = sphi 0, %s183
      %s200 = sphi 0, %s184
    $region4: #{tpu_custom_call.1} parent=1 // loop_header_branch
      %21 = sbr.rel (%p19) target = $region8
    $region5: #{tpu_custom_call.1} parent=1 // loop_body
      %s23 = ssub.s32 %s18, 1
      %s24 = ssub.s32 %s18, 2
      %s25 = sadd.s32 %s18, 1
      %s26 = ssub.s32 %s18, %s25
      %p27 = scmp.eq.s32.totalorder %s26, 0
      %s29 = sadd.s32 %s28, 1
      %s30 = scalar_select %p27, %s28, %s29
      %p33 = pneg %p27
      %p34 = scmp.eq.s32.totalorder %s18, 1
      %p35 = por %p33, %p34
      %p36 = scmp.ne.s32.totalorder %s28, %s31
      %p37 = scmp.eq.s32.totalorder %s18, 0
      %p38 = por %p36, %p37
      %p39 = scmp.ne.s32.totalorder %s28, %s31
      %p40 = scmp.eq.s32.totalorder %s23, 1
      %p41 = por %p39, %p40
      %p42 = scmp.ne.s32.totalorder %s31, %s32
      %p43 = scmp.eq.s32.totalorder %s23, 0
      %p44 = por %p42, %p43
      %p45 = scmp.ne.s32.totalorder %s31, %s32
      %p46 = scmp.eq.s32.totalorder %s24, 1
      %p47 = por %p45, %p46
      %p49 = scmp.ne.s32.totalorder %s32, %s48
      %p50 = scmp.eq.s32.totalorder %s24, 0
      %p51 = por %p49, %p50
      %s53 = sadd.s32 %s52, 1
      %p56 = scmp.eq.s32.totalorder %s18, 1
      %p57 = scmp.ne.s32.totalorder %s52, %s54
      %p58 = scmp.eq.s32.totalorder %s18, 0
      %p59 = por %p57, %p58
      %p60 = scmp.ne.s32.totalorder %s52, %s54
      %p61 = scmp.eq.s32.totalorder %s23, 1
      %p62 = por %p60, %p61
      %p63 = scmp.ne.s32.totalorder %s54, %s55
      %p64 = scmp.eq.s32.totalorder %s23, 0
      %p65 = por %p63, %p64
      %p66 = scmp.ne.s32.totalorder %s54, %s55
      %p67 = scmp.eq.s32.totalorder %s24, 1
      %p68 = por %p66, %p67
      %p70 = scmp.ne.s32.totalorder %s55, %s69
      %p71 = scmp.eq.s32.totalorder %s24, 0
      %p72 = por %p70, %p71
      %s74 = sadd.s32 %s73, 1
      %p77 = scmp.eq.s32.totalorder %s18, 1
      %p78 = scmp.ne.s32.totalorder %s73, %s75
      %p79 = scmp.eq.s32.totalorder %s18, 0
      %p80 = por %p78, %p79
      %p81 = scmp.ne.s32.totalorder %s73, %s75
      %p82 = scmp.eq.s32.totalorder %s23, 1
      %p83 = por %p81, %p82
      %p84 = scmp.ne.s32.totalorder %s75, %s76
      %p85 = scmp.eq.s32.totalorder %s23, 0
      %p86 = por %p84, %p85
      %p87 = scmp.ne.s32.totalorder %s75, %s76
      %p88 = scmp.eq.s32.totalorder %s24, 1
      %p89 = por %p87, %p88
      %p91 = scmp.ne.s32.totalorder %s76, %s90
      %p92 = scmp.eq.s32.totalorder %s24, 0
      %p93 = por %p91, %p92
      %s95 = sadd.s32 %s94, 1
      %p98 = scmp.eq.s32.totalorder %s18, 1
      %p99 = scmp.ne.s32.totalorder %s94, %s96
      %p100 = scmp.eq.s32.totalorder %s18, 0
      %p101 = por %p99, %p100
      %p102 = scmp.ne.s32.totalorder %s94, %s96
      %p103 = scmp.eq.s32.totalorder %s23, 1
      %p104 = por %p102, %p103
      %p105 = scmp.ne.s32.totalorder %s96, %s97
      %p106 = scmp.eq.s32.totalorder %s23, 0
      %p107 = por %p105, %p106
      %p108 = scmp.ne.s32.totalorder %s96, %s97
      %p109 = scmp.eq.s32.totalorder %s24, 1
      %p110 = por %p108, %p109
      %p112 = scmp.ne.s32.totalorder %s97, %s111
      %p113 = scmp.eq.s32.totalorder %s24, 0
      %p114 = por %p112, %p113
      %s116 = sadd.s32 %s115, 1
      %p119 = scmp.eq.s32.totalorder %s18, 1
      %p120 = scmp.ne.s32.totalorder %s115, %s117
      %p121 = scmp.eq.s32.totalorder %s18, 0
      %p122 = por %p120, %p121
      %p123 = scmp.ne.s32.totalorder %s115, %s117
      %p124 = scmp.eq.s32.totalorder %s23, 1
      %p125 = por %p123, %p124
      %p126 = scmp.ne.s32.totalorder %s117, %s118
      %p127 = scmp.eq.s32.totalorder %s23, 0
      %p128 = por %p126, %p127
      %p129 = scmp.ne.s32.totalorder %s117, %s118
      %p130 = scmp.eq.s32.totalorder %s24, 1
      %p131 = por %p129, %p130
      %p133 = scmp.ne.s32.totalorder %s118, %s132
      %p134 = scmp.eq.s32.totalorder %s24, 0
      %p135 = por %p133, %p134
      %s137 = sadd.s32 %s136, 1
      %p140 = scmp.eq.s32.totalorder %s18, 1
      %p141 = scmp.ne.s32.totalorder %s136, %s138
      %p142 = scmp.eq.s32.totalorder %s18, 0
      %p143 = por %p141, %p142
      %p144 = scmp.ne.s32.totalorder %s136, %s138
      %p145 = scmp.eq.s32.totalorder %s23, 1
      %p146 = por %p144, %p145
      %p147 = scmp.ne.s32.totalorder %s138, %s139
      %p148 = scmp.eq.s32.totalorder %s23, 0
      %p149 = por %p147, %p148
      %p150 = scmp.ne.s32.totalorder %s138, %s139
      %p151 = scmp.eq.s32.totalorder %s24, 1
      %p152 = por %p150, %p151
      %p154 = scmp.ne.s32.totalorder %s139, %s153
      %p155 = scmp.eq.s32.totalorder %s24, 0
      %p156 = por %p154, %p155
      %s158 = sadd.s32 %s157, 1
      %p161 = scmp.eq.s32.totalorder %s18, 1
      %p162 = scmp.ne.s32.totalorder %s157, %s159
      %p163 = scmp.eq.s32.totalorder %s18, 0
      %p164 = por %p162, %p163
      %p165 = scmp.ne.s32.totalorder %s157, %s159
      %p166 = scmp.eq.s32.totalorder %s23, 1
      %p167 = por %p165, %p166
      %p168 = scmp.ne.s32.totalorder %s159, %s160
      %p169 = scmp.eq.s32.totalorder %s23, 0
      %p170 = por %p168, %p169
      %p171 = scmp.ne.s32.totalorder %s159, %s160
      %p172 = scmp.eq.s32.totalorder %s24, 1
      %p173 = por %p171, %p172
      %p175 = scmp.ne.s32.totalorder %s160, %s174
      %p176 = scmp.eq.s32.totalorder %s24, 0
      %p177 = por %p175, %p176
      %s178 = ssub.s32 %s18, %s25
      %p179 = scmp.eq.s32.totalorder %s178, 0
      %s181 = sadd.s32 %s180, 1
      %s182 = scalar_select %p179, %s180, %s181
      %p185 = pneg %p179
      %p186 = scmp.eq.s32.totalorder %s18, 1
      %p187 = por %p185, %p186
      %p188 = scmp.ne.s32.totalorder %s180, %s183
      %p189 = scmp.eq.s32.totalorder %s18, 0
      %p190 = por %p188, %p189
      %p191 = scmp.ne.s32.totalorder %s180, %s183
      %p192 = scmp.eq.s32.totalorder %s23, 1
      %p193 = por %p191, %p192
      %p194 = scmp.ne.s32.totalorder %s183, %s184
      %p195 = scmp.eq.s32.totalorder %s23, 0
      %p196 = por %p194, %p195
      %p197 = scmp.ne.s32.totalorder %s183, %s184
      %p198 = scmp.eq.s32.totalorder %s24, 1
      %p199 = por %p197, %p198
      %p201 = scmp.ne.s32.totalorder %s184, %s200
      %p202 = scmp.eq.s32.totalorder %s24, 0
      %p203 = por %p201, %p202
      %p204 = scmp.le.s32.totalorder 1, %s18
      %p205 = scmp.lt.s32.totalorder %s18, 3
      %p206 = pnand %p204, %p205
      %p207 = pneg %p206
      // Predicated region
      $region9: #{tpu_custom_call.1} parent=5 // pred_check
        _
      $region10: #{tpu_custom_call.1} parent=5 // pred_check_branch
        %209 = sbr.rel (%p206) target = $region12
      $region11: #{tpu_custom_call.1} parent=5 // pred_region
        %s210 = ssub.s32 %s18, 1
        // Predicated region
        $region13: #{tpu_custom_call.1} parent=11 // pred_check
          %p211 = pneg %p65
        $region14: #{tpu_custom_call.1} parent=11 // pred_check_branch
          %213 = sbr.rel (%p211) target = $region16
        $region15: #{tpu_custom_call.1} parent=11 // pred_region
          _
        $region16: #{tpu_custom_call.1} parent=11 // pred_fallthru
          _
        // Predicated region
        $region17: #{tpu_custom_call.1} parent=11 // pred_check
          %p214 = pneg %p86
        $region18: #{tpu_custom_call.1} parent=11 // pred_check_branch
          %216 = sbr.rel (%p214) target = $region20
        $region19: #{tpu_custom_call.1} parent=11 // pred_region
          _
        $region20: #{tpu_custom_call.1} parent=11 // pred_fallthru
          _
        // Predicated region
        $region21: #{tpu_custom_call.1} parent=11 // pred_check
          %p217 = pneg %p107
        $region22: #{tpu_custom_call.1} parent=11 // pred_check_branch
          %219 = sbr.rel (%p217) target = $region24
        $region23: #{tpu_custom_call.1} parent=11 // pred_region
          _
        $region24: #{tpu_custom_call.1} parent=11 // pred_fallthru
          _
        // Predicated region
        $region25: #{tpu_custom_call.1} parent=11 // pred_check
          %p220 = pneg %p128
        $region26: #{tpu_custom_call.1} parent=11 // pred_check_branch
          %222 = sbr.rel (%p220) target = $region28
        $region27: #{tpu_custom_call.1} parent=11 // pred_region
          _
        $region28: #{tpu_custom_call.1} parent=11 // pred_fallthru
          _
        // Predicated region
        $region29: #{tpu_custom_call.1} parent=11 // pred_check
          %p223 = pneg %p149
        $region30: #{tpu_custom_call.1} parent=11 // pred_check_branch
          %225 = sbr.rel (%p223) target = $region32
        $region31: #{tpu_custom_call.1} parent=11 // pred_region
          _
        $region32: #{tpu_custom_call.1} parent=11 // pred_fallthru
          _
        // Predicated region
        $region33: #{tpu_custom_call.1} parent=11 // pred_check
          %p226 = pneg %p170
        $region34: #{tpu_custom_call.1} parent=11 // pred_check_branch
          %228 = sbr.rel (%p226) target = $region36
        $region35: #{tpu_custom_call.1} parent=11 // pred_region
          _
        $region36: #{tpu_custom_call.1} parent=11 // pred_fallthru
          _
      $region12: #{tpu_custom_call.1} parent=5 // pred_fallthru
        _
      %p229 = scmp.lt.s32.totalorder %s18, 2
      // Predicated region
      $region37: #{tpu_custom_call.1} parent=5 // pred_check
        %p230 = pneg %p229
      $region38: #{tpu_custom_call.1} parent=5 // pred_check_branch
        %232 = sbr.rel (%p230) target = $region40
      $region39: #{tpu_custom_call.1} parent=5 // pred_region
        // Predicated region
        $region41: #{tpu_custom_call.1} parent=39 // pred_check
          %p233 = pneg %p38
        $region42: #{tpu_custom_call.1} parent=39 // pred_check_branch
          %235 = sbr.rel (%p233) target = $region44
        $region43: #{tpu_custom_call.1} parent=39 // pred_region
          %s236 = smul.u32 64, %s18
          %s237 = ssub.s32 125, %s236
          %p238 = scmp.lt.s32.totalorder %s237, 64
          %s239 = scalar_select %p238, %s237, 64
          %s240 = smul.u32 64, %s239
          %p241 = scmp.lt.s32.totalorder %s236, 124
          %s242 = scalar_select %p241, %s236, 124
          %s243 = smul.addr %s242, 4
          %s244 = scalar_lea.vmem %s0, %s243
          %s245 = smul.u32 64, %s18
          %s246 = ssub.s32 125, %s245
          %p247 = scmp.lt.s32.totalorder %s246, 64
          %s248 = scalar_select %p247, %s246, 64
          %s249 = smul.u32 64, %s248
        $region44: #{tpu_custom_call.1} parent=39 // pred_fallthru
          _
      $region40: #{tpu_custom_call.1} parent=5 // pred_fallthru
        _
      %p250 = scmp.le.s32.totalorder 1, %s18
      %p251 = scmp.lt.s32.totalorder %s18, 3
      %p252 = pnand %p250, %p251
      %p253 = pneg %p252
      // Predicated region
      $region45: #{tpu_custom_call.1} parent=5 // pred_check
        _
      $region46: #{tpu_custom_call.1} parent=5 // pred_check_branch
        %255 = sbr.rel (%p252) target = $region48
      $region47: #{tpu_custom_call.1} parent=5 // pred_region
        %s256 = ssub.s32 %s18, 1
        %s257 = smul.u32 64, %s23
        %s258 = ssub.s32 125, %s257
        %p259 = scmp.lt.s32.totalorder %s258, 64
        %s260 = scalar_select %p259, %s258, 64
        %s261 = smul.u32 64, %s260
        %p262 = scmp.lt.s32.totalorder %s257, 124
        %s263 = scalar_select %p262, %s257, 124
        %s264 = smul.addr %s263, 4
        %s265 = scalar_lea.vmem %s0, %s264
        %p266 = pneg %p44
        %p267 = pneg %p41
        %p268 = pneg %p65
        %p269 = pneg %p62
        %p270 = pneg %p86
        %p271 = pneg %p83
        %p272 = pneg %p107
        %p273 = pneg %p104
        %p274 = pneg %p128
        %p275 = pneg %p125
        %p276 = pneg %p149
        %p277 = pneg %p146
        %p278 = pneg %p170
        %p279 = pneg %p167
        %p280 = pneg %p196
        %p281 = pneg %p193
        %s282 = sand.u32 %s183, 1
        %s283 = scalar_lea.sflag [#allocation4], %s282
        %s284 = sand.u32 %s183, 1
        %s285 = smul.addr %s284, 4
        %s286 = scalar_lea.vmem [#allocation3], %s285
        %s287 = smul.u32 64, %s23
        %s288 = ssub.s32 125, %s287
        %p289 = scmp.lt.s32.totalorder %s288, 64
        %s290 = scalar_select %p289, %s288, 64
        %s291 = smul.u32 64, %s290
        %p292 = scmp.lt.s32.totalorder %s287, 124
        %s293 = scalar_select %p292, %s287, 124
        %s294 = smul.addr %s293, 4
        %s295 = scalar_lea.vmem %s0, %s294
        %s296 = smul.u32 64, %s23
        %s297 = ssub.s32 125, %s296
        %p298 = scmp.lt.s32.totalorder %s297, 64
        %s299 = scalar_select %p298, %s297, 64
        %s300 = smul.u32 64, %s299
        %s301 = smul.u32 4, %s23
        %v303 = vld [vmem:[%s295] sm:$0xf]
        %v304 = vld [vmem:[%s295 + $0x4] sm:$0xf]
        %v305 = vld [vmem:[%s295 + $0x8] sm:$0xf]
        %v306 = vld [vmem:[%s295 + $0xc] sm:$0xf]
        %v307 = vld [vmem:[%s295 + $0x10] sm:$0xf]
        %v308 = vld [vmem:[%s295 + $0x14] sm:$0xf]
        %v309 = vld [vmem:[%s295 + $0x18] sm:$0xf]
        %v310 = vld [vmem:[%s295 + $0x1c] sm:$0xf]
        %v311 = vld [vmem:[%s295 + $0x20] sm:$0xf]
        %v312 = vld [vmem:[%s295 + $0x24] sm:$0xf]
        %v313 = vld [vmem:[%s295 + $0x28] sm:$0xf]
        %v314 = vld [vmem:[%s295 + $0x2c] sm:$0xf]
        %v315 = vld [vmem:[%s295 + $0x30] sm:$0xf]
        %v316 = vld [vmem:[%s295 + $0x34] sm:$0xf]
        %v317 = vld [vmem:[%s295 + $0x38] sm:$0xf]
        %v318 = vld [vmem:[%s295 + $0x3c] sm:$0xf]
        %v319 = vld [vmem:[%s295 + $0x40] sm:$0xf]
        %v320 = vld [vmem:[%s295 + $0x44] sm:$0xf]
        %v321 = vld [vmem:[%s295 + $0x48] sm:$0xf]
        %v322 = vld [vmem:[%s295 + $0x4c] sm:$0xf]
        %v323 = vld [vmem:[%s295 + $0x50] sm:$0xf]
        %v324 = vld [vmem:[%s295 + $0x54] sm:$0xf]
        %v325 = vld [vmem:[%s295 + $0x58] sm:$0xf]
        %v326 = vld [vmem:[%s295 + $0x5c] sm:$0xf]
        %v327 = vld [vmem:[%s295 + $0x60] sm:$0xf]
        %v328 = vld [vmem:[%s295 + $0x64] sm:$0xf]
        %v329 = vld [vmem:[%s295 + $0x68] sm:$0xf]
        %v330 = vld [vmem:[%s295 + $0x6c] sm:$0xf]
        %v331 = vld [vmem:[%s295 + $0x70] sm:$0xf]
        %v332 = vld [vmem:[%s295 + $0x74] sm:$0xf]
        %v333 = vld [vmem:[%s295 + $0x78] sm:$0xf]
        %v334 = vld [vmem:[%s295 + $0x7c] sm:$0xf]
        %v335 = vld [vmem:[%s295 + $0x80] sm:$0xf]
        %v336 = vld [vmem:[%s295 + $0x84] sm:$0xf]
        %v337 = vld [vmem:[%s295 + $0x88] sm:$0xf]
        %v338 = vld [vmem:[%s295 + $0x8c] sm:$0xf]
        %v339 = vld [vmem:[%s295 + $0x90] sm:$0xf]
        %v340 = vld [vmem:[%s295 + $0x94] sm:$0xf]
        %v341 = vld [vmem:[%s295 + $0x98] sm:$0xf]
        %v342 = vld [vmem:[%s295 + $0x9c] sm:$0xf]
        %v343 = vld [vmem:[%s295 + $0xa0] sm:$0xf]
        %v344 = vld [vmem:[%s295 + $0xa4] sm:$0xf]
        %v345 = vld [vmem:[%s295 + $0xa8] sm:$0xf]
        %v346 = vld [vmem:[%s295 + $0xac] sm:$0xf]
        %v347 = vld [vmem:[%s295 + $0xb0] sm:$0xf]
        %v348 = vld [vmem:[%s295 + $0xb4] sm:$0xf]
        %v349 = vld [vmem:[%s295 + $0xb8] sm:$0xf]
        %v350 = vld [vmem:[%s295 + $0xbc] sm:$0xf]
        %v351 = vld [vmem:[%s295 + $0xc0] sm:$0xf]
        %v352 = vld [vmem:[%s295 + $0xc4] sm:$0xf]
        %v353 = vld [vmem:[%s295 + $0xc8] sm:$0xf]
        %v354 = vld [vmem:[%s295 + $0xcc] sm:$0xf]
        %v355 = vld [vmem:[%s295 + $0xd0] sm:$0xf]
        %v356 = vld [vmem:[%s295 + $0xd4] sm:$0xf]
        %v357 = vld [vmem:[%s295 + $0xd8] sm:$0xf]
        %v358 = vld [vmem:[%s295 + $0xdc] sm:$0xf]
        %v359 = vld [vmem:[%s295 + $0xe0] sm:$0xf]
        %v360 = vld [vmem:[%s295 + $0xe4] sm:$0xf]
        %v361 = vld [vmem:[%s295 + $0xe8] sm:$0xf]
        %v362 = vld [vmem:[%s295 + $0xec] sm:$0xf]
        %v363 = vld [vmem:[%s295 + $0xf0] sm:$0xf]
        %v364 = vld [vmem:[%s295 + $0xf4] sm:$0xf]
        %v365 = vld [vmem:[%s295 + $0xf8] sm:$0xf]
        %v366 = vld [vmem:[%s295 + $0xfc] sm:$0xf]
        %v367 = vld [vmem:[%s1] sm:$0xf]
        %v368 = vld [vmem:[%s1 + $0x4] sm:$0xf]
        %v369 = vld [vmem:[%s1 + $0x8] sm:$0xf]
        %v370 = vld [vmem:[%s1 + $0xc] sm:$0xf]
        %v371 = vld [vmem:[%s2] sm:$0x1]
        %v373 = vlaneseq
        %v374 = vshrl.u32 %v373, 7
        %v375 = vsub.s32 0, %v374
        %v376 = vrot.slane %v371, %v375
        %v442 = vunpack.c.l.b16 %v303
        %v443 = vunpack.c.l.b16 %v304
        %v444 = vunpack.c.l.b16 %v305
        %v445 = vunpack.c.l.b16 %v306
        %v446 = vunpack.c.l.b16 %v307
        %v447 = vunpack.c.l.b16 %v308
        %v448 = vunpack.c.l.b16 %v309
        %v449 = vunpack.c.l.b16 %v310
        %v450 = vunpack.c.l.b16 %v311
        %v451 = vunpack.c.l.b16 %v312
        %v452 = vunpack.c.l.b16 %v313
        %v453 = vunpack.c.l.b16 %v314
        %v454 = vunpack.c.l.b16 %v315
        %v455 = vunpack.c.l.b16 %v316
        %v456 = vunpack.c.l.b16 %v317
        %v457 = vunpack.c.l.b16 %v318
        %v458 = vunpack.c.l.b16 %v319
        %v459 = vunpack.c.l.b16 %v320
        %v460 = vunpack.c.l.b16 %v321
        %v461 = vunpack.c.l.b16 %v322
        %v462 = vunpack.c.l.b16 %v323
        %v463 = vunpack.c.l.b16 %v324
        %v464 = vunpack.c.l.b16 %v325
        %v465 = vunpack.c.l.b16 %v326
        %v466 = vunpack.c.l.b16 %v327
        %v467 = vunpack.c.l.b16 %v328
        %v468 = vunpack.c.l.b16 %v329
        %v469 = vunpack.c.l.b16 %v330
        %v470 = vunpack.c.l.b16 %v331
        %v471 = vunpack.c.l.b16 %v332
        %v472 = vunpack.c.l.b16 %v333
        %v473 = vunpack.c.l.b16 %v334
        %v474 = vunpack.c.l.b16 %v335
        %v475 = vunpack.c.l.b16 %v336
        %v476 = vunpack.c.l.b16 %v337
        %v477 = vunpack.c.l.b16 %v338
        %v478 = vunpack.c.l.b16 %v339
        %v479 = vunpack.c.l.b16 %v340
        %v480 = vunpack.c.l.b16 %v341
        %v481 = vunpack.c.l.b16 %v342
        %v482 = vunpack.c.l.b16 %v343
        %v483 = vunpack.c.l.b16 %v344
        %v484 = vunpack.c.l.b16 %v345
        %v485 = vunpack.c.l.b16 %v346
        %v486 = vunpack.c.l.b16 %v347
        %v487 = vunpack.c.l.b16 %v348
        %v488 = vunpack.c.l.b16 %v349
        %v489 = vunpack.c.l.b16 %v350
        %v490 = vunpack.c.l.b16 %v351
        %v491 = vunpack.c.l.b16 %v352
        %v492 = vunpack.c.l.b16 %v353
        %v493 = vunpack.c.l.b16 %v354
        %v494 = vunpack.c.l.b16 %v355
        %v495 = vunpack.c.l.b16 %v356
        %v496 = vunpack.c.l.b16 %v357
        %v497 = vunpack.c.l.b16 %v358
        %v498 = vunpack.c.l.b16 %v359
        %v499 = vunpack.c.l.b16 %v360
        %v500 = vunpack.c.l.b16 %v361
        %v501 = vunpack.c.l.b16 %v362
        %v502 = vunpack.c.l.b16 %v363
        %v503 = vunpack.c.l.b16 %v364
        %v504 = vunpack.c.l.b16 %v365
        %v505 = vunpack.c.l.b16 %v366
        %v506 = vpack.c.b16 %v443, %v442
        %v507 = vpack.c.b16 %v445, %v444
        %v508 = vpack.c.b16 %v447, %v446
        %v509 = vpack.c.b16 %v449, %v448
        %v510 = vpack.c.b16 %v451, %v450
        %v511 = vpack.c.b16 %v453, %v452
        %v512 = vpack.c.b16 %v455, %v454
        %v513 = vpack.c.b16 %v457, %v456
        %v514 = vpack.c.b16 %v459, %v458
        %v515 = vpack.c.b16 %v461, %v460
        %v516 = vpack.c.b16 %v463, %v462
        %v517 = vpack.c.b16 %v465, %v464
        %v518 = vpack.c.b16 %v467, %v466
        %v519 = vpack.c.b16 %v469, %v468
        %v520 = vpack.c.b16 %v471, %v470
        %v521 = vpack.c.b16 %v473, %v472
        %v522 = vpack.c.b16 %v475, %v474
        %v523 = vpack.c.b16 %v477, %v476
        %v524 = vpack.c.b16 %v479, %v478
        %v525 = vpack.c.b16 %v481, %v480
        %v526 = vpack.c.b16 %v483, %v482
        %v527 = vpack.c.b16 %v485, %v484
        %v528 = vpack.c.b16 %v487, %v486
        %v529 = vpack.c.b16 %v489, %v488
        %v530 = vpack.c.b16 %v491, %v490
        %v531 = vpack.c.b16 %v493, %v492
        %v532 = vpack.c.b16 %v495, %v494
        %v533 = vpack.c.b16 %v497, %v496
        %v534 = vpack.c.b16 %v499, %v498
        %v535 = vpack.c.b16 %v501, %v500
        %v536 = vpack.c.b16 %v503, %v502
        %v537 = vpack.c.b16 %v505, %v504
        %v542 = vunpack.c.l.b16 %v367
        %v543 = vunpack.c.l.b16 %v368
        %v544 = vunpack.c.l.b16 %v369
        %v545 = vunpack.c.l.b16 %v370
        %v546 = vpack.c.b16 %v543, %v542
        %v547 = vpack.c.b16 %v545, %v544
        %vm550 = vcmask 261120
        %v552 = vsel %vm550, %v506, 0
        %v555 = vsel %vm550, %v507, 0
        %v558 = vsel %vm550, %v508, 0
        %v561 = vsel %vm550, %v509, 0
        %v564 = vsel %vm550, %v510, 0
        %v567 = vsel %vm550, %v511, 0
        %v570 = vsel %vm550, %v512, 0
        %v573 = vsel %vm550, %v513, 0
        %v576 = vsel %vm550, %v514, 0
        %v579 = vsel %vm550, %v515, 0
        %v582 = vsel %vm550, %v516, 0
        %v585 = vsel %vm550, %v517, 0
        %v588 = vsel %vm550, %v518, 0
        %v591 = vsel %vm550, %v519, 0
        %v594 = vsel %vm550, %v520, 0
        %v597 = vsel %vm550, %v521, 0
        %v600 = vsel %vm550, %v522, 0
        %v603 = vsel %vm550, %v523, 0
        %v606 = vsel %vm550, %v524, 0
        %v609 = vsel %vm550, %v525, 0
        %v612 = vsel %vm550, %v526, 0
        %v615 = vsel %vm550, %v527, 0
        %v618 = vsel %vm550, %v528, 0
        %v621 = vsel %vm550, %v529, 0
        %v624 = vsel %vm550, %v530, 0
        %v627 = vsel %vm550, %v531, 0
        %v630 = vsel %vm550, %v532, 0
        %v633 = vsel %vm550, %v533, 0
        %v636 = vsel %vm550, %v534, 0
        %v639 = vsel %vm550, %v535, 0
        %v642 = vsel %vm550, %v536, 0
        %v645 = vsel %vm550, %v537, 0
        %647 = vmatprep.subr.bf16.mxu0 0
        %648 = vmatpush1.bf16.msra.mxu0 %v546
        %649 = vmatprep.subr.bf16.mxu0 0
        %650 = vmatpush1.bf16.msra.mxu0 %v547
        %651 = vmatprep.subr.bf16.mxu0 0
        %652 = vmatpush1.bf16.msra.mxu0 0
        %653 = vmatprep.subr.bf16.mxu0 0
        %654 = vmatpush1.bf16.msra.mxu0 0
        %655 = vmatprep.subr.bf16.mxu0 0
        %656 = vmatpush1.bf16.msra.mxu0 0
        %657 = vmatprep.subr.bf16.mxu0 0
        %658 = vmatpush1.bf16.msra.mxu0 0
        %659 = vmatprep.subr.bf16.mxu0 0
        %660 = vmatpush1.bf16.msra.mxu0 0
        %661 = vmatprep.subr.bf16.mxu0 0
        %662 = vmatpush1.bf16.msra.mxu0 0
        %663 = vmatprep.subr.bf16.mxu0 0
        %664 = vmatpush1.bf16.msra.mxu0 0
        %665 = vmatprep.subr.bf16.mxu0 0
        %666 = vmatpush1.bf16.msra.mxu0 0
        %667 = vmatprep.subr.bf16.mxu0 0
        %668 = vmatpush1.bf16.msra.mxu0 0
        %669 = vmatprep.subr.bf16.mxu0 0
        %670 = vmatpush1.bf16.msra.mxu0 0
        %671 = vmatprep.subr.bf16.mxu0 0
        %672 = vmatpush1.bf16.msra.mxu0 0
        %673 = vmatprep.subr.bf16.mxu0 0
        %674 = vmatpush1.bf16.msra.mxu0 0
        %675 = vmatprep.subr.bf16.mxu0 0
        %676 = vmatpush1.bf16.msra.mxu0 0
        %677 = vmatprep.subr.bf16.mxu0 0
        %678 = vmatpush1.bf16.msra.mxu0 0
        %679 = vmatprep.mubr.bf16.mxu0 0
        %680 = vmatmul.mubr.bf16.gmra.mrb[0].mxu0 %v552
        %v681 = vpop.f32.mrb[0].mxu0
        %v682 = vadd.f32 %v376, %v681
        %v683 = vpop.f32.mrb[0].mxu0
        %v684 = vpop.f32.mrb[0].mxu0
        %v685 = vadd.f32 %v376, %v684
        %v686 = vpop.f32.mrb[0].mxu0
        %687 = vmatprep.mubr.bf16.mxu0 0
        %688 = vmatmul.mubr.bf16.gmra.mrb[0].mxu0 %v555
        %v689 = vpop.f32.mrb[0].mxu0
        %v690 = vadd.f32 %v376, %v689
        %v691 = vpop.f32.mrb[0].mxu0
        %v692 = vpop.f32.mrb[0].mxu0
        %v693 = vadd.f32 %v376, %v692
        %v694 = vpop.f32.mrb[0].mxu0
        %695 = vmatprep.mubr.bf16.mxu0 0
        %696 = vmatmul.mubr.bf16.gmra.mrb[0].mxu0 %v558
        %v697 = vpop.f32.mrb[0].mxu0
        %v698 = vadd.f32 %v376, %v697
        %v699 = vpop.f32.mrb[0].mxu0
        %v700 = vpop.f32.mrb[0].mxu0
        %v701 = vadd.f32 %v376, %v700
        %v702 = vpop.f32.mrb[0].mxu0
        %703 = vmatprep.mubr.bf16.mxu0 0
        %704 = vmatmul.mubr.bf16.gmra.mrb[0].mxu0 %v561
        %v705 = vpop.f32.mrb[0].mxu0
        %v706 = vadd.f32 %v376, %v705
        %v707 = vpop.f32.mrb[0].mxu0
        %v708 = vpop.f32.mrb[0].mxu0
        %v709 = vadd.f32 %v376, %v708
        %v710 = vpop.f32.mrb[0].mxu0
        %711 = vmatprep.mubr.bf16.mxu0 0
        %712 = vmatmul.mubr.bf16.gmra.mrb[0].mxu0 %v564
        %v713 = vpop.f32.mrb[0].mxu0
        %v714 = vadd.f32 %v376, %v713
        %v715 = vpop.f32.mrb[0].mxu0
        %v716 = vpop.f32.mrb[0].mxu0
        %v717 = vadd.f32 %v376, %v716
        %v718 = vpop.f32.mrb[0].mxu0
        %719 = vmatprep.mubr.bf16.mxu0 0
        %720 = vmatmul.mubr.bf16.gmra.mrb[0].mxu0 %v567
        %v721 = vpop.f32.mrb[0].mxu0
        %v722 = vadd.f32 %v376, %v721
        %v723 = vpop.f32.mrb[0].mxu0
        %v724 = vpop.f32.mrb[0].mxu0
        %v725 = vadd.f32 %v376, %v724
        %v726 = vpop.f32.mrb[0].mxu0
        %727 = vmatprep.mubr.bf16.mxu0 0
        %728 = vmatmul.mubr.bf16.gmra.mrb[0].mxu0 %v570
        %v729 = vpop.f32.mrb[0].mxu0
        %v730 = vadd.f32 %v376, %v729
        %v731 = vpop.f32.mrb[0].mxu0
        %v732 = vpop.f32.mrb[0].mxu0
        %v733 = vadd.f32 %v376, %v732
        %v734 = vpop.f32.mrb[0].mxu0
        %735 = vmatprep.mubr.bf16.mxu0 0
        %736 = vmatmul.mubr.bf16.gmra.mrb[0].mxu0 %v573
        %v737 = vpop.f32.mrb[0].mxu0
        %v738 = vadd.f32 %v376, %v737
        %v739 = vpop.f32.mrb[0].mxu0
        %v740 = vpop.f32.mrb[0].mxu0
        %v741 = vadd.f32 %v376, %v740
        %v742 = vpop.f32.mrb[0].mxu0
        %743 = vmatprep.mubr.bf16.mxu0 0
        %744 = vmatmul.mubr.bf16.gmra.mrb[0].mxu0 %v576
        %v745 = vpop.f32.mrb[0].mxu0
        %v746 = vadd.f32 %v376, %v745
        %v747 = vpop.f32.mrb[0].mxu0
        %v748 = vpop.f32.mrb[0].mxu0
        %v749 = vadd.f32 %v376, %v748
        %v750 = vpop.f32.mrb[0].mxu0
        %751 = vmatprep.mubr.bf16.mxu0 0
        %752 = vmatmul.mubr.bf16.gmra.mrb[0].mxu0 %v579
        %v753 = vpop.f32.mrb[0].mxu0
        %v754 = vadd.f32 %v376, %v753
        %v755 = vpop.f32.mrb[0].mxu0
        %v756 = vpop.f32.mrb[0].mxu0
        %v757 = vadd.f32 %v376, %v756
        %v758 = vpop.f32.mrb[0].mxu0
        %759 = vmatprep.mubr.bf16.mxu0 0
        %760 = vmatmul.mubr.bf16.gmra.mrb[0].mxu0 %v582
        %v761 = vpop.f32.mrb[0].mxu0
        %v762 = vadd.f32 %v376, %v761
        %v763 = vpop.f32.mrb[0].mxu0
        %v764 = vpop.f32.mrb[0].mxu0
        %v765 = vadd.f32 %v376, %v764
        %v766 = vpop.f32.mrb[0].mxu0
        %767 = vmatprep.mubr.bf16.mxu0 0
        %768 = vmatmul.mubr.bf16.gmra.mrb[0].mxu0 %v585
        %v769 = vpop.f32.mrb[0].mxu0
        %v770 = vadd.f32 %v376, %v769
        %v771 = vpop.f32.mrb[0].mxu0
        %v772 = vpop.f32.mrb[0].mxu0
        %v773 = vadd.f32 %v376, %v772
        %v774 = vpop.f32.mrb[0].mxu0
        %775 = vmatprep.mubr.bf16.mxu0 0
        %776 = vmatmul.mubr.bf16.gmra.mrb[0].mxu0 %v588
        %v777 = vpop.f32.mrb[0].mxu0
        %v778 = vadd.f32 %v376, %v777
        %v779 = vpop.f32.mrb[0].mxu0
        %v780 = vpop.f32.mrb[0].mxu0
        %v781 = vadd.f32 %v376, %v780
        %v782 = vpop.f32.mrb[0].mxu0
        %783 = vmatprep.mubr.bf16.mxu0 0
        %784 = vmatmul.mubr.bf16.gmra.mrb[0].mxu0 %v591
        %v785 = vpop.f32.mrb[0].mxu0
        %v786 = vadd.f32 %v376, %v785
        %v787 = vpop.f32.mrb[0].mxu0
        %v788 = vpop.f32.mrb[0].mxu0
        %v789 = vadd.f32 %v376, %v788
        %v790 = vpop.f32.mrb[0].mxu0
        %791 = vmatprep.mubr.bf16.mxu0 0
        %792 = vmatmul.mubr.bf16.gmra.mrb[0].mxu0 %v594
        %v793 = vpop.f32.mrb[0].mxu0
        %v794 = vadd.f32 %v376, %v793
        %v795 = vpop.f32.mrb[0].mxu0
        %v796 = vpop.f32.mrb[0].mxu0
        %v797 = vadd.f32 %v376, %v796
        %v798 = vpop.f32.mrb[0].mxu0
        %799 = vmatprep.mubr.bf16.mxu0 0
        %800 = vmatmul.mubr.bf16.gmra.mrb[0].mxu0 %v597
        %v801 = vpop.f32.mrb[0].mxu0
        %v802 = vadd.f32 %v376, %v801
        %v803 = vpop.f32.mrb[0].mxu0
        %v804 = vpop.f32.mrb[0].mxu0
        %v805 = vadd.f32 %v376, %v804
        %v806 = vpop.f32.mrb[0].mxu0
        %807 = vmatprep.mubr.bf16.mxu0 0
        %808 = vmatmul.mubr.bf16.gmra.mrb[0].mxu0 %v600
        %v809 = vpop.f32.mrb[0].mxu0
        %v810 = vadd.f32 %v376, %v809
        %v811 = vpop.f32.mrb[0].mxu0
        %v812 = vpop.f32.mrb[0].mxu0
        %v813 = vadd.f32 %v376, %v812
        %v814 = vpop.f32.mrb[0].mxu0
        %815 = vmatprep.mubr.bf16.mxu0 0
        %816 = vmatmul.mubr.bf16.gmra.mrb[0].mxu0 %v603
        %v817 = vpop.f32.mrb[0].mxu0
        %v818 = vadd.f32 %v376, %v817
        %v819 = vpop.f32.mrb[0].mxu0
        %v820 = vpop.f32.mrb[0].mxu0
        %v821 = vadd.f32 %v376, %v820
        %v822 = vpop.f32.mrb[0].mxu0
        %823 = vmatprep.mubr.bf16.mxu0 0
        %824 = vmatmul.mubr.bf16.gmra.mrb[0].mxu0 %v606
        %v825 = vpop.f32.mrb[0].mxu0
        %v826 = vadd.f32 %v376, %v825
        %v827 = vpop.f32.mrb[0].mxu0
        %v828 = vpop.f32.mrb[0].mxu0
        %v829 = vadd.f32 %v376, %v828
        %v830 = vpop.f32.mrb[0].mxu0
        %831 = vmatprep.mubr.bf16.mxu0 0
        %832 = vmatmul.mubr.bf16.gmra.mrb[0].mxu0 %v609
        %v833 = vpop.f32.mrb[0].mxu0
        %v834 = vadd.f32 %v376, %v833
        %v835 = vpop.f32.mrb[0].mxu0
        %v836 = vpop.f32.mrb[0].mxu0
        %v837 = vadd.f32 %v376, %v836
        %v838 = vpop.f32.mrb[0].mxu0
        %839 = vmatprep.mubr.bf16.mxu0 0
        %840 = vmatmul.mubr.bf16.gmra.mrb[0].mxu0 %v612
        %v841 = vpop.f32.mrb[0].mxu0
        %v842 = vadd.f32 %v376, %v841
        %v843 = vpop.f32.mrb[0].mxu0
        %v844 = vpop.f32.mrb[0].mxu0
        %v845 = vadd.f32 %v376, %v844
        %v846 = vpop.f32.mrb[0].mxu0
        %847 = vmatprep.mubr.bf16.mxu0 0
        %848 = vmatmul.mubr.bf16.gmra.mrb[0].mxu0 %v615
        %v849 = vpop.f32.mrb[0].mxu0
        %v850 = vadd.f32 %v376, %v849
        %v851 = vpop.f32.mrb[0].mxu0
        %v852 = vpop.f32.mrb[0].mxu0
        %v853 = vadd.f32 %v376, %v852
        %v854 = vpop.f32.mrb[0].mxu0
        %855 = vmatprep.mubr.bf16.mxu0 0
        %856 = vmatmul.mubr.bf16.gmra.mrb[0].mxu0 %v618
        %v857 = vpop.f32.mrb[0].mxu0
        %v858 = vadd.f32 %v376, %v857
        %v859 = vpop.f32.mrb[0].mxu0
        %v860 = vpop.f32.mrb[0].mxu0
        %v861 = vadd.f32 %v376, %v860
        %v862 = vpop.f32.mrb[0].mxu0
        %863 = vmatprep.mubr.bf16.mxu0 0
        %864 = vmatmul.mubr.bf16.gmra.mrb[0].mxu0 %v621
        %v865 = vpop.f32.mrb[0].mxu0
        %v866 = vadd.f32 %v376, %v865
        %v867 = vpop.f32.mrb[0].mxu0
        %v868 = vpop.f32.mrb[0].mxu0
        %v869 = vadd.f32 %v376, %v868
        %v870 = vpop.f32.mrb[0].mxu0
        %871 = vmatprep.mubr.bf16.mxu0 0
        %872 = vmatmul.mubr.bf16.gmra.mrb[0].mxu0 %v624
        %v873 = vpop.f32.mrb[0].mxu0
        %v874 = vadd.f32 %v376, %v873
        %v875 = vpop.f32.mrb[0].mxu0
        %v876 = vpop.f32.mrb[0].mxu0
        %v877 = vadd.f32 %v376, %v876
        %v878 = vpop.f32.mrb[0].mxu0
        %879 = vmatprep.mubr.bf16.mxu0 0
        %880 = vmatmul.mubr.bf16.gmra.mrb[0].mxu0 %v627
        %v881 = vpop.f32.mrb[0].mxu0
        %v882 = vadd.f32 %v376, %v881
        %v883 = vpop.f32.mrb[0].mxu0
        %v884 = vpop.f32.mrb[0].mxu0
        %v885 = vadd.f32 %v376, %v884
        %v886 = vpop.f32.mrb[0].mxu0
        %887 = vmatprep.mubr.bf16.mxu0 0
        %888 = vmatmul.mubr.bf16.gmra.mrb[0].mxu0 %v630
        %v889 = vpop.f32.mrb[0].mxu0
        %v890 = vadd.f32 %v376, %v889
        %v891 = vpop.f32.mrb[0].mxu0
        %v892 = vpop.f32.mrb[0].mxu0
        %v893 = vadd.f32 %v376, %v892
        %v894 = vpop.f32.mrb[0].mxu0
        %895 = vmatprep.mubr.bf16.mxu0 0
        %896 = vmatmul.mubr.bf16.gmra.mrb[0].mxu0 %v633
        %v897 = vpop.f32.mrb[0].mxu0
        %v898 = vadd.f32 %v376, %v897
        %v899 = vpop.f32.mrb[0].mxu0
        %v900 = vpop.f32.mrb[0].mxu0
        %v901 = vadd.f32 %v376, %v900
        %v902 = vpop.f32.mrb[0].mxu0
        %903 = vmatprep.mubr.bf16.mxu0 0
        %904 = vmatmul.mubr.bf16.gmra.mrb[0].mxu0 %v636
        %v905 = vpop.f32.mrb[0].mxu0
        %v906 = vadd.f32 %v376, %v905
        %v907 = vpop.f32.mrb[0].mxu0
        %v908 = vpop.f32.mrb[0].mxu0
        %v909 = vadd.f32 %v376, %v908
        %v910 = vpop.f32.mrb[0].mxu0
        %911 = vmatprep.mubr.bf16.mxu0 0
        %912 = vmatmul.mubr.bf16.gmra.mrb[0].mxu0 %v639
        %v913 = vpop.f32.mrb[0].mxu0
        %v914 = vadd.f32 %v376, %v913
        %v915 = vpop.f32.mrb[0].mxu0
        %v916 = vpop.f32.mrb[0].mxu0
        %v917 = vadd.f32 %v376, %v916
        %v918 = vpop.f32.mrb[0].mxu0
        %919 = vmatprep.mubr.bf16.mxu0 0
        %920 = vmatmul.mubr.bf16.gmra.mrb[0].mxu0 %v642
        %v921 = vpop.f32.mrb[0].mxu0
        %v922 = vadd.f32 %v376, %v921
        %v923 = vpop.f32.mrb[0].mxu0
        %v924 = vpop.f32.mrb[0].mxu0
        %v925 = vadd.f32 %v376, %v924
        %v926 = vpop.f32.mrb[0].mxu0
        %927 = vmatprep.mubr.bf16.mxu0 0
        %928 = vmatmul.mubr.bf16.gmra.mrb[0].mxu0 %v645
        %v929 = vpop.f32.mrb[0].mxu0
        %v930 = vadd.f32 %v376, %v929
        %v931 = vpop.f32.mrb[0].mxu0
        %v932 = vpop.f32.mrb[0].mxu0
        %v933 = vadd.f32 %v376, %v932
        %v934 = vpop.f32.mrb[0].mxu0
        %935 = vdwg.mxu0
        %v936 = vmax.f32 %v682, 0.0
        %v937 = vmax.f32 %v685, 0.0
        %v938 = vmax.f32 %v690, 0.0
        %v939 = vmax.f32 %v693, 0.0
        %v940 = vmax.f32 %v698, 0.0
        %v941 = vmax.f32 %v701, 0.0
        %v942 = vmax.f32 %v706, 0.0
        %v943 = vmax.f32 %v709, 0.0
        %v944 = vmax.f32 %v714, 0.0
        %v945 = vmax.f32 %v717, 0.0
        %v946 = vmax.f32 %v722, 0.0
        %v947 = vmax.f32 %v725, 0.0
        %v948 = vmax.f32 %v730, 0.0
        %v949 = vmax.f32 %v733, 0.0
        %v950 = vmax.f32 %v738, 0.0
        %v951 = vmax.f32 %v741, 0.0
        %v952 = vmax.f32 %v746, 0.0
        %v953 = vmax.f32 %v749, 0.0
        %v954 = vmax.f32 %v754, 0.0
        %v955 = vmax.f32 %v757, 0.0
        %v956 = vmax.f32 %v762, 0.0
        %v957 = vmax.f32 %v765, 0.0
        %v958 = vmax.f32 %v770, 0.0
        %v959 = vmax.f32 %v773, 0.0
        %v960 = vmax.f32 %v778, 0.0
        %v961 = vmax.f32 %v781, 0.0
        %v962 = vmax.f32 %v786, 0.0
        %v963 = vmax.f32 %v789, 0.0
        %v964 = vmax.f32 %v794, 0.0
        %v965 = vmax.f32 %v797, 0.0
        %v966 = vmax.f32 %v802, 0.0
        %v967 = vmax.f32 %v805, 0.0
        %v968 = vmax.f32 %v810, 0.0
        %v969 = vmax.f32 %v813, 0.0
        %v970 = vmax.f32 %v818, 0.0
        %v971 = vmax.f32 %v821, 0.0
        %v972 = vmax.f32 %v826, 0.0
        %v973 = vmax.f32 %v829, 0.0
        %v974 = vmax.f32 %v834, 0.0
        %v975 = vmax.f32 %v837, 0.0
        %v976 = vmax.f32 %v842, 0.0
        %v977 = vmax.f32 %v845, 0.0
        %v978 = vmax.f32 %v850, 0.0
        %v979 = vmax.f32 %v853, 0.0
        %v980 = vmax.f32 %v858, 0.0
        %v981 = vmax.f32 %v861, 0.0
        %v982 = vmax.f32 %v866, 0.0
        %v983 = vmax.f32 %v869, 0.0
        %v984 = vmax.f32 %v874, 0.0
        %v985 = vmax.f32 %v877, 0.0
        %v986 = vmax.f32 %v882, 0.0
        %v987 = vmax.f32 %v885, 0.0
        %v988 = vmax.f32 %v890, 0.0
        %v989 = vmax.f32 %v893, 0.0
        %v990 = vmax.f32 %v898, 0.0
        %v991 = vmax.f32 %v901, 0.0
        %v992 = vmax.f32 %v906, 0.0
        %v993 = vmax.f32 %v909, 0.0
        %v994 = vmax.f32 %v914, 0.0
        %v995 = vmax.f32 %v917, 0.0
        %v996 = vmax.f32 %v922, 0.0
        %v997 = vmax.f32 %v925, 0.0
        %v998 = vmax.f32 %v930, 0.0
        %v999 = vmax.f32 %v933, 0.0
        %v1000 = vpack.c.bf16 %v937, %v936
        %v1001 = vpack.c.bf16 %v939, %v938
        %v1002 = vpack.c.bf16 %v941, %v940
        %v1003 = vpack.c.bf16 %v943, %v942
        %v1004 = vpack.c.bf16 %v945, %v944
        %v1005 = vpack.c.bf16 %v947, %v946
        %v1006 = vpack.c.bf16 %v949, %v948
        %v1007 = vpack.c.bf16 %v951, %v950
        %v1008 = vpack.c.bf16 %v953, %v952
        %v1009 = vpack.c.bf16 %v955, %v954
        %v1010 = vpack.c.bf16 %v957, %v956
        %v1011 = vpack.c.bf16 %v959, %v958
        %v1012 = vpack.c.bf16 %v961, %v960
        %v1013 = vpack.c.bf16 %v963, %v962
        %v1014 = vpack.c.bf16 %v965, %v964
        %v1015 = vpack.c.bf16 %v967, %v966
        %v1016 = vpack.c.bf16 %v969, %v968
        %v1017 = vpack.c.bf16 %v971, %v970
        %v1018 = vpack.c.bf16 %v973, %v972
        %v1019 = vpack.c.bf16 %v975, %v974
        %v1020 = vpack.c.bf16 %v977, %v976
        %v1021 = vpack.c.bf16 %v979, %v978
        %v1022 = vpack.c.bf16 %v981, %v980
        %v1023 = vpack.c.bf16 %v983, %v982
        %v1024 = vpack.c.bf16 %v985, %v984
        %v1025 = vpack.c.bf16 %v987, %v986
        %v1026 = vpack.c.bf16 %v989, %v988
        %v1027 = vpack.c.bf16 %v991, %v990
        %v1028 = vpack.c.bf16 %v993, %v992
        %v1029 = vpack.c.bf16 %v995, %v994
        %v1030 = vpack.c.bf16 %v997, %v996
        %v1031 = vpack.c.bf16 %v999, %v998
        %v1032 = vld [vmem:[%s3] sm:$0xf]
        %v1033 = vld [vmem:[%s3 + $0x4] sm:$0xf]
        %v1034 = vld [vmem:[%s3 + $0x8] sm:$0xf]
        %v1035 = vld [vmem:[%s3 + $0xc] sm:$0xf]
        %v1036 = vld [vmem:[%s3 + $0x10] sm:$0xf]
        %v1037 = vld [vmem:[%s3 + $0x14] sm:$0xf]
        %v1038 = vld [vmem:[%s3 + $0x18] sm:$0xf]
        %v1039 = vld [vmem:[%s3 + $0x1c] sm:$0xf]
        %v1040 = vld [vmem:[%s4] sm:$0x1]
        %v1042 = vlaneseq
        %v1043 = vshrl.u32 %v1042, 7
        %v1044 = vsub.s32 0, %v1043
        %v1045 = vrot.slane %v1040, %v1044
        %v1055 = vunpack.c.l.b16 %v1032
        %v1056 = vunpack.c.l.b16 %v1033
        %v1057 = vunpack.c.l.b16 %v1034
        %v1058 = vunpack.c.l.b16 %v1035
        %v1059 = vunpack.c.l.b16 %v1036
        %v1060 = vunpack.c.l.b16 %v1037
        %v1061 = vunpack.c.l.b16 %v1038
        %v1062 = vunpack.c.l.b16 %v1039
        %v1063 = vpack.c.b16 %v1056, %v1055
        %v1064 = vpack.c.b16 %v1058, %v1057
        %v1065 = vpack.c.b16 %v1060, %v1059
        %v1066 = vpack.c.b16 %v1062, %v1061
        %vm1071 = vcmask 523264
        %v1073 = vsel %vm1071, %v1000, 0
        %v1076 = vsel %vm1071, %v1001, 0
        %v1079 = vsel %vm1071, %v1002, 0
        %v1082 = vsel %vm1071, %v1003, 0
        %v1085 = vsel %vm1071, %v1004, 0
        %v1088 = vsel %vm1071, %v1005, 0
        %v1091 = vsel %vm1071, %v1006, 0
        %v1094 = vsel %vm1071, %v1007, 0
        %v1097 = vsel %vm1071, %v1008, 0
        %v1100 = vsel %vm1071, %v1009, 0
        %v1103 = vsel %vm1071, %v1010, 0
        %v1106 = vsel %vm1071, %v1011, 0
        %v1109 = vsel %vm1071, %v1012, 0
        %v1112 = vsel %vm1071, %v1013, 0
        %v1115 = vsel %vm1071, %v1014, 0
        %v1118 = vsel %vm1071, %v1015, 0
        %v1121 = vsel %vm1071, %v1016, 0
        %v1124 = vsel %vm1071, %v1017, 0
        %v1127 = vsel %vm1071, %v1018, 0
        %v1130 = vsel %vm1071, %v1019, 0
        %v1133 = vsel %vm1071, %v1020, 0
        %v1136 = vsel %vm1071, %v1021, 0
        %v1139 = vsel %vm1071, %v1022, 0
        %v1142 = vsel %vm1071, %v1023, 0
        %v1145 = vsel %vm1071, %v1024, 0
        %v1148 = vsel %vm1071, %v1025, 0
        %v1151 = vsel %vm1071, %v1026, 0
        %v1154 = vsel %vm1071, %v1027, 0
        %v1157 = vsel %vm1071, %v1028, 0
        %v1160 = vsel %vm1071, %v1029, 0
        %v1163 = vsel %vm1071, %v1030, 0
        %v1166 = vsel %vm1071, %v1031, 0
        %1168 = vmatprep.subr.bf16.mxu0 0
        %1169 = vmatpush1.bf16.msra.mxu0 %v1063
        %1170 = vmatprep.subr.bf16.mxu0 0
        %1171 = vmatpush1.bf16.msra.mxu0 %v1064
        %1172 = vmatprep.subr.bf16.mxu0 0
        %1173 = vmatpush1.bf16.msra.mxu0 %v1065
        %1174 = vmatprep.subr.bf16.mxu0 0
        %1175 = vmatpush1.bf16.msra.mxu0 %v1066
        %1176 = vmatprep.subr.bf16.mxu0 0
        %1177 = vmatpush1.bf16.msra.mxu0 0
        %1178 = vmatprep.subr.bf16.mxu0 0
        %1179 = vmatpush1.bf16.msra.mxu0 0
        %1180 = vmatprep.subr.bf16.mxu0 0
        %1181 = vmatpush1.bf16.msra.mxu0 0
        %1182 = vmatprep.subr.bf16.mxu0 0
        %1183 = vmatpush1.bf16.msra.mxu0 0
        %1184 = vmatprep.subr.bf16.mxu0 0
        %1185 = vmatpush1.bf16.msra.mxu0 0
        %1186 = vmatprep.subr.bf16.mxu0 0
        %1187 = vmatpush1.bf16.msra.mxu0 0
        %1188 = vmatprep.subr.bf16.mxu0 0
        %1189 = vmatpush1.bf16.msra.mxu0 0
        %1190 = vmatprep.subr.bf16.mxu0 0
        %1191 = vmatpush1.bf16.msra.mxu0 0
        %1192 = vmatprep.subr.bf16.mxu0 0
        %1193 = vmatpush1.bf16.msra.mxu0 0
        %1194 = vmatprep.subr.bf16.mxu0 0
        %1195 = vmatpush1.bf16.msra.mxu0 0
        %1196 = vmatprep.subr.bf16.mxu0 0
        %1197 = vmatpush1.bf16.msra.mxu0 0
        %1198 = vmatprep.subr.bf16.mxu0 0
        %1199 = vmatpush1.bf16.msra.mxu0 0
        %1200 = vmatprep.mubr.bf16.mxu0 0
        %1201 = vmatmul.mubr.bf16.gmra.mrb[0].mxu0 %v1073
        %v1202 = vpop.f32.mrb[0].mxu0
        %v1203 = vadd.f32 %v1045, %v1202
        %v1204 = vpop.f32.mrb[0].mxu0
        %v1205 = vpop.f32.mrb[0].mxu0
        %v1206 = vadd.f32 %v1045, %v1205
        %v1207 = vpop.f32.mrb[0].mxu0
        %1208 = vmatprep.mubr.bf16.mxu0 0
        %1209 = vmatmul.mubr.bf16.gmra.mrb[0].mxu0 %v1076
        %v1210 = vpop.f32.mrb[0].mxu0
        %v1211 = vadd.f32 %v1045, %v1210
        %v1212 = vpop.f32.mrb[0].mxu0
        %v1213 = vpop.f32.mrb[0].mxu0
        %v1214 = vadd.f32 %v1045, %v1213
        %v1215 = vpop.f32.mrb[0].mxu0
        %1216 = vmatprep.mubr.bf16.mxu0 0
        %1217 = vmatmul.mubr.bf16.gmra.mrb[0].mxu0 %v1079
        %v1218 = vpop.f32.mrb[0].mxu0
        %v1219 = vadd.f32 %v1045, %v1218
        %v1220 = vpop.f32.mrb[0].mxu0
        %v1221 = vpop.f32.mrb[0].mxu0
        %v1222 = vadd.f32 %v1045, %v1221
        %v1223 = vpop.f32.mrb[0].mxu0
        %1224 = vmatprep.mubr.bf16.mxu0 0
        %1225 = vmatmul.mubr.bf16.gmra.mrb[0].mxu0 %v1082
        %v1226 = vpop.f32.mrb[0].mxu0
        %v1227 = vadd.f32 %v1045, %v1226
        %v1228 = vpop.f32.mrb[0].mxu0
        %v1229 = vpop.f32.mrb[0].mxu0
        %v1230 = vadd.f32 %v1045, %v1229
        %v1231 = vpop.f32.mrb[0].mxu0
        %1232 = vmatprep.mubr.bf16.mxu0 0
        %1233 = vmatmul.mubr.bf16.gmra.mrb[0].mxu0 %v1085
        %v1234 = vpop.f32.mrb[0].mxu0
        %v1235 = vadd.f32 %v1045, %v1234
        %v1236 = vpop.f32.mrb[0].mxu0
        %v1237 = vpop.f32.mrb[0].mxu0
        %v1238 = vadd.f32 %v1045, %v1237
        %v1239 = vpop.f32.mrb[0].mxu0
        %1240 = vmatprep.mubr.bf16.mxu0 0
        %1241 = vmatmul.mubr.bf16.gmra.mrb[0].mxu0 %v1088
        %v1242 = vpop.f32.mrb[0].mxu0
        %v1243 = vadd.f32 %v1045, %v1242
        %v1244 = vpop.f32.mrb[0].mxu0
        %v1245 = vpop.f32.mrb[0].mxu0
        %v1246 = vadd.f32 %v1045, %v1245
        %v1247 = vpop.f32.mrb[0].mxu0
        %1248 = vmatprep.mubr.bf16.mxu0 0
        %1249 = vmatmul.mubr.bf16.gmra.mrb[0].mxu0 %v1091
        %v1250 = vpop.f32.mrb[0].mxu0
        %v1251 = vadd.f32 %v1045, %v1250
        %v1252 = vpop.f32.mrb[0].mxu0
        %v1253 = vpop.f32.mrb[0].mxu0
        %v1254 = vadd.f32 %v1045, %v1253
        %v1255 = vpop.f32.mrb[0].mxu0
        %1256 = vmatprep.mubr.bf16.mxu0 0
        %1257 = vmatmul.mubr.bf16.gmra.mrb[0].mxu0 %v1094
        %v1258 = vpop.f32.mrb[0].mxu0
        %v1259 = vadd.f32 %v1045, %v1258
        %v1260 = vpop.f32.mrb[0].mxu0
        %v1261 = vpop.f32.mrb[0].mxu0
        %v1262 = vadd.f32 %v1045, %v1261
        %v1263 = vpop.f32.mrb[0].mxu0
        %1264 = vmatprep.mubr.bf16.mxu0 0
        %1265 = vmatmul.mubr.bf16.gmra.mrb[0].mxu0 %v1097
        %v1266 = vpop.f32.mrb[0].mxu0
        %v1267 = vadd.f32 %v1045, %v1266
        %v1268 = vpop.f32.mrb[0].mxu0
        %v1269 = vpop.f32.mrb[0].mxu0
        %v1270 = vadd.f32 %v1045, %v1269
        %v1271 = vpop.f32.mrb[0].mxu0
        %1272 = vmatprep.mubr.bf16.mxu0 0
        %1273 = vmatmul.mubr.bf16.gmra.mrb[0].mxu0 %v1100
        %v1274 = vpop.f32.mrb[0].mxu0
        %v1275 = vadd.f32 %v1045, %v1274
        %v1276 = vpop.f32.mrb[0].mxu0
        %v1277 = vpop.f32.mrb[0].mxu0
        %v1278 = vadd.f32 %v1045, %v1277
        %v1279 = vpop.f32.mrb[0].mxu0
        %1280 = vmatprep.mubr.bf16.mxu0 0
        %1281 = vmatmul.mubr.bf16.gmra.mrb[0].mxu0 %v1103
        %v1282 = vpop.f32.mrb[0].mxu0
        %v1283 = vadd.f32 %v1045, %v1282
        %v1284 = vpop.f32.mrb[0].mxu0
        %v1285 = vpop.f32.mrb[0].mxu0
        %v1286 = vadd.f32 %v1045, %v1285
        %v1287 = vpop.f32.mrb[0].mxu0
        %1288 = vmatprep.mubr.bf16.mxu0 0
        %1289 = vmatmul.mubr.bf16.gmra.mrb[0].mxu0 %v1106
        %v1290 = vpop.f32.mrb[0].mxu0
        %v1291 = vadd.f32 %v1045, %v1290
        %v1292 = vpop.f32.mrb[0].mxu0
        %v1293 = vpop.f32.mrb[0].mxu0
        %v1294 = vadd.f32 %v1045, %v1293
        %v1295 = vpop.f32.mrb[0].mxu0
        %1296 = vmatprep.mubr.bf16.mxu0 0
        %1297 = vmatmul.mubr.bf16.gmra.mrb[0].mxu0 %v1109
        %v1298 = vpop.f32.mrb[0].mxu0
        %v1299 = vadd.f32 %v1045, %v1298
        %v1300 = vpop.f32.mrb[0].mxu0
        %v1301 = vpop.f32.mrb[0].mxu0
        %v1302 = vadd.f32 %v1045, %v1301
        %v1303 = vpop.f32.mrb[0].mxu0
        %1304 = vmatprep.mubr.bf16.mxu0 0
        %1305 = vmatmul.mubr.bf16.gmra.mrb[0].mxu0 %v1112
        %v1306 = vpop.f32.mrb[0].mxu0
        %v1307 = vadd.f32 %v1045, %v1306
        %v1308 = vpop.f32.mrb[0].mxu0
        %v1309 = vpop.f32.mrb[0].mxu0
        %v1310 = vadd.f32 %v1045, %v1309
        %v1311 = vpop.f32.mrb[0].mxu0
        %1312 = vmatprep.mubr.bf16.mxu0 0
        %1313 = vmatmul.mubr.bf16.gmra.mrb[0].mxu0 %v1115
        %v1314 = vpop.f32.mrb[0].mxu0
        %v1315 = vadd.f32 %v1045, %v1314
        %v1316 = vpop.f32.mrb[0].mxu0
        %v1317 = vpop.f32.mrb[0].mxu0
        %v1318 = vadd.f32 %v1045, %v1317
        %v1319 = vpop.f32.mrb[0].mxu0
        %1320 = vmatprep.mubr.bf16.mxu0 0
        %1321 = vmatmul.mubr.bf16.gmra.mrb[0].mxu0 %v1118
        %v1322 = vpop.f32.mrb[0].mxu0
        %v1323 = vadd.f32 %v1045, %v1322
        %v1324 = vpop.f32.mrb[0].mxu0
        %v1325 = vpop.f32.mrb[0].mxu0
        %v1326 = vadd.f32 %v1045, %v1325
        %v1327 = vpop.f32.mrb[0].mxu0
        %1328 = vmatprep.mubr.bf16.mxu0 0
        %1329 = vmatmul.mubr.bf16.gmra.mrb[0].mxu0 %v1121
        %v1330 = vpop.f32.mrb[0].mxu0
        %v1331 = vadd.f32 %v1045, %v1330
        %v1332 = vpop.f32.mrb[0].mxu0
        %v1333 = vpop.f32.mrb[0].mxu0
        %v1334 = vadd.f32 %v1045, %v1333
        %v1335 = vpop.f32.mrb[0].mxu0
        %1336 = vmatprep.mubr.bf16.mxu0 0
        %1337 = vmatmul.mubr.bf16.gmra.mrb[0].mxu0 %v1124
        %v1338 = vpop.f32.mrb[0].mxu0
        %v1339 = vadd.f32 %v1045, %v1338
        %v1340 = vpop.f32.mrb[0].mxu0
        %v1341 = vpop.f32.mrb[0].mxu0
        %v1342 = vadd.f32 %v1045, %v1341
        %v1343 = vpop.f32.mrb[0].mxu0
        %1344 = vmatprep.mubr.bf16.mxu0 0
        %1345 = vmatmul.mubr.bf16.gmra.mrb[0].mxu0 %v1127
        %v1346 = vpop.f32.mrb[0].mxu0
        %v1347 = vadd.f32 %v1045, %v1346
        %v1348 = vpop.f32.mrb[0].mxu0
        %v1349 = vpop.f32.mrb[0].mxu0
        %v1350 = vadd.f32 %v1045, %v1349
        %v1351 = vpop.f32.mrb[0].mxu0
        %1352 = vmatprep.mubr.bf16.mxu0 0
        %1353 = vmatmul.mubr.bf16.gmra.mrb[0].mxu0 %v1130
        %v1354 = vpop.f32.mrb[0].mxu0
        %v1355 = vadd.f32 %v1045, %v1354
        %v1356 = vpop.f32.mrb[0].mxu0
        %v1357 = vpop.f32.mrb[0].mxu0
        %v1358 = vadd.f32 %v1045, %v1357
        %v1359 = vpop.f32.mrb[0].mxu0
        %1360 = vmatprep.mubr.bf16.mxu0 0
        %1361 = vmatmul.mubr.bf16.gmra.mrb[0].mxu0 %v1133
        %v1362 = vpop.f32.mrb[0].mxu0
        %v1363 = vadd.f32 %v1045, %v1362
        %v1364 = vpop.f32.mrb[0].mxu0
        %v1365 = vpop.f32.mrb[0].mxu0
        %v1366 = vadd.f32 %v1045, %v1365
        %v1367 = vpop.f32.mrb[0].mxu0
        %1368 = vmatprep.mubr.bf16.mxu0 0
        %1369 = vmatmul.mubr.bf16.gmra.mrb[0].mxu0 %v1136
        %v1370 = vpop.f32.mrb[0].mxu0
        %v1371 = vadd.f32 %v1045, %v1370
        %v1372 = vpop.f32.mrb[0].mxu0
        %v1373 = vpop.f32.mrb[0].mxu0
        %v1374 = vadd.f32 %v1045, %v1373
        %v1375 = vpop.f32.mrb[0].mxu0
        %1376 = vmatprep.mubr.bf16.mxu0 0
        %1377 = vmatmul.mubr.bf16.gmra.mrb[0].mxu0 %v1139
        %v1378 = vpop.f32.mrb[0].mxu0
        %v1379 = vadd.f32 %v1045, %v1378
        %v1380 = vpop.f32.mrb[0].mxu0
        %v1381 = vpop.f32.mrb[0].mxu0
        %v1382 = vadd.f32 %v1045, %v1381
        %v1383 = vpop.f32.mrb[0].mxu0
        %1384 = vmatprep.mubr.bf16.mxu0 0
        %1385 = vmatmul.mubr.bf16.gmra.mrb[0].mxu0 %v1142
        %v1386 = vpop.f32.mrb[0].mxu0
        %v1387 = vadd.f32 %v1045, %v1386
        %v1388 = vpop.f32.mrb[0].mxu0
        %v1389 = vpop.f32.mrb[0].mxu0
        %v1390 = vadd.f32 %v1045, %v1389
        %v1391 = vpop.f32.mrb[0].mxu0
        %1392 = vmatprep.mubr.bf16.mxu0 0
        %1393 = vmatmul.mubr.bf16.gmra.mrb[0].mxu0 %v1145
        %v1394 = vpop.f32.mrb[0].mxu0
        %v1395 = vadd.f32 %v1045, %v1394
        %v1396 = vpop.f32.mrb[0].mxu0
        %v1397 = vpop.f32.mrb[0].mxu0
        %v1398 = vadd.f32 %v1045, %v1397
        %v1399 = vpop.f32.mrb[0].mxu0
        %1400 = vmatprep.mubr.bf16.mxu0 0
        %1401 = vmatmul.mubr.bf16.gmra.mrb[0].mxu0 %v1148
        %v1402 = vpop.f32.mrb[0].mxu0
        %v1403 = vadd.f32 %v1045, %v1402
        %v1404 = vpop.f32.mrb[0].mxu0
        %v1405 = vpop.f32.mrb[0].mxu0
        %v1406 = vadd.f32 %v1045, %v1405
        %v1407 = vpop.f32.mrb[0].mxu0
        %1408 = vmatprep.mubr.bf16.mxu0 0
        %1409 = vmatmul.mubr.bf16.gmra.mrb[0].mxu0 %v1151
        %v1410 = vpop.f32.mrb[0].mxu0
        %v1411 = vadd.f32 %v1045, %v1410
        %v1412 = vpop.f32.mrb[0].mxu0
        %v1413 = vpop.f32.mrb[0].mxu0
        %v1414 = vadd.f32 %v1045, %v1413
        %v1415 = vpop.f32.mrb[0].mxu0
        %1416 = vmatprep.mubr.bf16.mxu0 0
        %1417 = vmatmul.mubr.bf16.gmra.mrb[0].mxu0 %v1154
        %v1418 = vpop.f32.mrb[0].mxu0
        %v1419 = vadd.f32 %v1045, %v1418
        %v1420 = vpop.f32.mrb[0].mxu0
        %v1421 = vpop.f32.mrb[0].mxu0
        %v1422 = vadd.f32 %v1045, %v1421
        %v1423 = vpop.f32.mrb[0].mxu0
        %1424 = vmatprep.mubr.bf16.mxu0 0
        %1425 = vmatmul.mubr.bf16.gmra.mrb[0].mxu0 %v1157
        %v1426 = vpop.f32.mrb[0].mxu0
        %v1427 = vadd.f32 %v1045, %v1426
        %v1428 = vpop.f32.mrb[0].mxu0
        %v1429 = vpop.f32.mrb[0].mxu0
        %v1430 = vadd.f32 %v1045, %v1429
        %v1431 = vpop.f32.mrb[0].mxu0
        %1432 = vmatprep.mubr.bf16.mxu0 0
        %1433 = vmatmul.mubr.bf16.gmra.mrb[0].mxu0 %v1160
        %v1434 = vpop.f32.mrb[0].mxu0
        %v1435 = vadd.f32 %v1045, %v1434
        %v1436 = vpop.f32.mrb[0].mxu0
        %v1437 = vpop.f32.mrb[0].mxu0
        %v1438 = vadd.f32 %v1045, %v1437
        %v1439 = vpop.f32.mrb[0].mxu0
        %1440 = vmatprep.mubr.bf16.mxu0 0
        %1441 = vmatmul.mubr.bf16.gmra.mrb[0].mxu0 %v1163
        %v1442 = vpop.f32.mrb[0].mxu0
        %v1443 = vadd.f32 %v1045, %v1442
        %v1444 = vpop.f32.mrb[0].mxu0
        %v1445 = vpop.f32.mrb[0].mxu0
        %v1446 = vadd.f32 %v1045, %v1445
        %v1447 = vpop.f32.mrb[0].mxu0
        %1448 = vmatprep.mubr.bf16.mxu0 0
        %1449 = vmatmul.mubr.bf16.gmra.mrb[0].mxu0 %v1166
        %v1450 = vpop.f32.mrb[0].mxu0
        %v1451 = vadd.f32 %v1045, %v1450
        %v1452 = vpop.f32.mrb[0].mxu0
        %v1453 = vpop.f32.mrb[0].mxu0
        %v1454 = vadd.f32 %v1045, %v1453
        %v1455 = vpop.f32.mrb[0].mxu0
        %1456 = vdwg.mxu0
        %v1457 = vmax.f32 %v1203, 0.0
        %v1458 = vmax.f32 %v1206, 0.0
        %v1459 = vmax.f32 %v1211, 0.0
        %v1460 = vmax.f32 %v1214, 0.0
        %v1461 = vmax.f32 %v1219, 0.0
        %v1462 = vmax.f32 %v1222, 0.0
        %v1463 = vmax.f32 %v1227, 0.0
        %v1464 = vmax.f32 %v1230, 0.0
        %v1465 = vmax.f32 %v1235, 0.0
        %v1466 = vmax.f32 %v1238, 0.0
        %v1467 = vmax.f32 %v1243, 0.0
        %v1468 = vmax.f32 %v1246, 0.0
        %v1469 = vmax.f32 %v1251, 0.0
        %v1470 = vmax.f32 %v1254, 0.0
        %v1471 = vmax.f32 %v1259, 0.0
        %v1472 = vmax.f32 %v1262, 0.0
        %v1473 = vmax.f32 %v1267, 0.0
        %v1474 = vmax.f32 %v1270, 0.0
        %v1475 = vmax.f32 %v1275, 0.0
        %v1476 = vmax.f32 %v1278, 0.0
        %v1477 = vmax.f32 %v1283, 0.0
        %v1478 = vmax.f32 %v1286, 0.0
        %v1479 = vmax.f32 %v1291, 0.0
        %v1480 = vmax.f32 %v1294, 0.0
        %v1481 = vmax.f32 %v1299, 0.0
        %v1482 = vmax.f32 %v1302, 0.0
        %v1483 = vmax.f32 %v1307, 0.0
        %v1484 = vmax.f32 %v1310, 0.0
        %v1485 = vmax.f32 %v1315, 0.0
        %v1486 = vmax.f32 %v1318, 0.0
        %v1487 = vmax.f32 %v1323, 0.0
        %v1488 = vmax.f32 %v1326, 0.0
        %v1489 = vmax.f32 %v1331, 0.0
        %v1490 = vmax.f32 %v1334, 0.0
        %v1491 = vmax.f32 %v1339, 0.0
        %v1492 = vmax.f32 %v1342, 0.0
        %v1493 = vmax.f32 %v1347, 0.0
        %v1494 = vmax.f32 %v1350, 0.0
        %v1495 = vmax.f32 %v1355, 0.0
        %v1496 = vmax.f32 %v1358, 0.0
        %v1497 = vmax.f32 %v1363, 0.0
        %v1498 = vmax.f32 %v1366, 0.0
        %v1499 = vmax.f32 %v1371, 0.0
        %v1500 = vmax.f32 %v1374, 0.0
        %v1501 = vmax.f32 %v1379, 0.0
        %v1502 = vmax.f32 %v1382, 0.0
        %v1503 = vmax.f32 %v1387, 0.0
        %v1504 = vmax.f32 %v1390, 0.0
        %v1505 = vmax.f32 %v1395, 0.0
        %v1506 = vmax.f32 %v1398, 0.0
        %v1507 = vmax.f32 %v1403, 0.0
        %v1508 = vmax.f32 %v1406, 0.0
        %v1509 = vmax.f32 %v1411, 0.0
        %v1510 = vmax.f32 %v1414, 0.0
        %v1511 = vmax.f32 %v1419, 0.0
        %v1512 = vmax.f32 %v1422, 0.0
        %v1513 = vmax.f32 %v1427, 0.0
        %v1514 = vmax.f32 %v1430, 0.0
        %v1515 = vmax.f32 %v1435, 0.0
        %v1516 = vmax.f32 %v1438, 0.0
        %v1517 = vmax.f32 %v1443, 0.0
        %v1518 = vmax.f32 %v1446, 0.0
        %v1519 = vmax.f32 %v1451, 0.0
        %v1520 = vmax.f32 %v1454, 0.0
        %v1521 = vpack.c.bf16 %v1458, %v1457
        %v1522 = vpack.c.bf16 %v1460, %v1459
        %v1523 = vpack.c.bf16 %v1462, %v1461
        %v1524 = vpack.c.bf16 %v1464, %v1463
        %v1525 = vpack.c.bf16 %v1466, %v1465
        %v1526 = vpack.c.bf16 %v1468, %v1467
        %v1527 = vpack.c.bf16 %v1470, %v1469
        %v1528 = vpack.c.bf16 %v1472, %v1471
        %v1529 = vpack.c.bf16 %v1474, %v1473
        %v1530 = vpack.c.bf16 %v1476, %v1475
        %v1531 = vpack.c.bf16 %v1478, %v1477
        %v1532 = vpack.c.bf16 %v1480, %v1479
        %v1533 = vpack.c.bf16 %v1482, %v1481
        %v1534 = vpack.c.bf16 %v1484, %v1483
        %v1535 = vpack.c.bf16 %v1486, %v1485
        %v1536 = vpack.c.bf16 %v1488, %v1487
        %v1537 = vpack.c.bf16 %v1490, %v1489
        %v1538 = vpack.c.bf16 %v1492, %v1491
        %v1539 = vpack.c.bf16 %v1494, %v1493
        %v1540 = vpack.c.bf16 %v1496, %v1495
        %v1541 = vpack.c.bf16 %v1498, %v1497
        %v1542 = vpack.c.bf16 %v1500, %v1499
        %v1543 = vpack.c.bf16 %v1502, %v1501
        %v1544 = vpack.c.bf16 %v1504, %v1503
        %v1545 = vpack.c.bf16 %v1506, %v1505
        %v1546 = vpack.c.bf16 %v1508, %v1507
        %v1547 = vpack.c.bf16 %v1510, %v1509
        %v1548 = vpack.c.bf16 %v1512, %v1511
        %v1549 = vpack.c.bf16 %v1514, %v1513
        %v1550 = vpack.c.bf16 %v1516, %v1515
        %v1551 = vpack.c.bf16 %v1518, %v1517
        %v1552 = vpack.c.bf16 %v1520, %v1519
        %v1553 = vld [vmem:[%s5] sm:$0xf]
        %v1555 = vsel %vm1071, %v1553, 0
        %v1558 = vsel %vm1071, %v1521, 0
        %v1561 = vsel %vm1071, %v1522, 0
        %v1564 = vsel %vm1071, %v1523, 0
        %v1567 = vsel %vm1071, %v1524, 0
        %v1570 = vsel %vm1071, %v1525, 0
        %v1573 = vsel %vm1071, %v1526, 0
        %v1576 = vsel %vm1071, %v1527, 0
        %v1579 = vsel %vm1071, %v1528, 0
        %v1582 = vsel %vm1071, %v1529, 0
        %v1585 = vsel %vm1071, %v1530, 0
        %v1588 = vsel %vm1071, %v1531, 0
        %v1591 = vsel %vm1071, %v1532, 0
        %v1594 = vsel %vm1071, %v1533, 0
        %v1597 = vsel %vm1071, %v1534, 0
        %v1600 = vsel %vm1071, %v1535, 0
        %v1603 = vsel %vm1071, %v1536, 0
        %v1606 = vsel %vm1071, %v1537, 0
        %v1609 = vsel %vm1071, %v1538, 0
        %v1612 = vsel %vm1071, %v1539, 0
        %v1615 = vsel %vm1071, %v1540, 0
        %v1618 = vsel %vm1071, %v1541, 0
        %v1621 = vsel %vm1071, %v1542, 0
        %v1624 = vsel %vm1071, %v1543, 0
        %v1627 = vsel %vm1071, %v1544, 0
        %v1630 = vsel %vm1071, %v1545, 0
        %v1633 = vsel %vm1071, %v1546, 0
        %v1636 = vsel %vm1071, %v1547, 0
        %v1639 = vsel %vm1071, %v1548, 0
        %v1642 = vsel %vm1071, %v1549, 0
        %v1645 = vsel %vm1071, %v1550, 0
        %v1648 = vsel %vm1071, %v1551, 0
        %v1651 = vsel %vm1071, %v1552, 0
        %1653 = vmatprep.subr.bf16.mxu0 0
        %1654 = vmatpush1.bf16.xpose.msra.mxu0 %v1558
        %1655 = vmatprep.subr.bf16.mxu0 0
        %1656 = vmatpush1.bf16.xpose.msra.mxu0 %v1561
        %1657 = vmatprep.subr.bf16.mxu0 0
        %1658 = vmatpush1.bf16.xpose.msra.mxu0 %v1564
        %1659 = vmatprep.subr.bf16.mxu0 0
        %1660 = vmatpush1.bf16.xpose.msra.mxu0 %v1567
        %1661 = vmatprep.subr.bf16.mxu0 0
        %1662 = vmatpush1.bf16.xpose.msra.mxu0 %v1570
        %1663 = vmatprep.subr.bf16.mxu0 0
        %1664 = vmatpush1.bf16.xpose.msra.mxu0 %v1573
        %1665 = vmatprep.subr.bf16.mxu0 0
        %1666 = vmatpush1.bf16.xpose.msra.mxu0 %v1576
        %1667 = vmatprep.subr.bf16.mxu0 0
        %1668 = vmatpush1.bf16.xpose.msra.mxu0 %v1579
        %1669 = vmatprep.subr.bf16.mxu0 0
        %1670 = vmatpush1.bf16.xpose.msra.mxu0 %v1582
        %1671 = vmatprep.subr.bf16.mxu0 0
        %1672 = vmatpush1.bf16.xpose.msra.mxu0 %v1585
        %1673 = vmatprep.subr.bf16.mxu0 0
        %1674 = vmatpush1.bf16.xpose.msra.mxu0 %v1588
        %1675 = vmatprep.subr.bf16.mxu0 0
        %1676 = vmatpush1.bf16.xpose.msra.mxu0 %v1591
        %1677 = vmatprep.subr.bf16.mxu0 0
        %1678 = vmatpush1.bf16.xpose.msra.mxu0 %v1594
        %1679 = vmatprep.subr.bf16.mxu0 0
        %1680 = vmatpush1.bf16.xpose.msra.mxu0 %v1597
        %1681 = vmatprep.subr.bf16.mxu0 0
        %1682 = vmatpush1.bf16.xpose.msra.mxu0 %v1600
        %1683 = vmatprep.subr.bf16.mxu0 0
        %1684 = vmatpush1.bf16.xpose.msra.mxu0 %v1603
        %1685 = vmatprep.mubr.bf16.mxu0 0
        %1686 = vmatmul.mubr.bf16.gmra.mrb[0].mxu0 %v1555
        %v1687 = vpop.f32.mrb[0].mxu0
        %v1688 = vadd.f32 0.0, %v1687
        %v1689 = vpop.f32.mrb[0].mxu0
        %v1690 = vadd.f32 0.0, %v1689
        %v1691 = vpop.f32.mrb[0].mxu0
        %v1692 = vpop.f32.mrb[0].mxu0
        %1693 = vdwg.mxu0
        %1694 = vmatprep.subr.bf16.mxu0 0
        %1695 = vmatpush1.bf16.xpose.msra.mxu0 %v1606
        %1696 = vmatprep.subr.bf16.mxu0 0
        %1697 = vmatpush1.bf16.xpose.msra.mxu0 %v1609
        %1698 = vmatprep.subr.bf16.mxu0 0
        %1699 = vmatpush1.bf16.xpose.msra.mxu0 %v1612
        %1700 = vmatprep.subr.bf16.mxu0 0
        %1701 = vmatpush1.bf16.xpose.msra.mxu0 %v1615
        %1702 = vmatprep.subr.bf16.mxu0 0
        %1703 = vmatpush1.bf16.xpose.msra.mxu0 %v1618
        %1704 = vmatprep.subr.bf16.mxu0 0
        %1705 = vmatpush1.bf16.xpose.msra.mxu0 %v1621
        %1706 = vmatprep.subr.bf16.mxu0 0
        %1707 = vmatpush1.bf16.xpose.msra.mxu0 %v1624
        %1708 = vmatprep.subr.bf16.mxu0 0
        %1709 = vmatpush1.bf16.xpose.msra.mxu0 %v1627
        %1710 = vmatprep.subr.bf16.mxu0 0
        %1711 = vmatpush1.bf16.xpose.msra.mxu0 %v1630
        %1712 = vmatprep.subr.bf16.mxu0 0
        %1713 = vmatpush1.bf16.xpose.msra.mxu0 %v1633
        %1714 = vmatprep.subr.bf16.mxu0 0
        %1715 = vmatpush1.bf16.xpose.msra.mxu0 %v1636
        %1716 = vmatprep.subr.bf16.mxu0 0
        %1717 = vmatpush1.bf16.xpose.msra.mxu0 %v1639
        %1718 = vmatprep.subr.bf16.mxu0 0
        %1719 = vmatpush1.bf16.xpose.msra.mxu0 %v1642
        %1720 = vmatprep.subr.bf16.mxu0 0
        %1721 = vmatpush1.bf16.xpose.msra.mxu0 %v1645
        %1722 = vmatprep.subr.bf16.mxu0 0
        %1723 = vmatpush1.bf16.xpose.msra.mxu0 %v1648
        %1724 = vmatprep.subr.bf16.mxu0 0
        %1725 = vmatpush1.bf16.xpose.msra.mxu0 %v1651
        %1726 = vmatprep.mubr.bf16.mxu0 0
        %1727 = vmatmul.mubr.bf16.gmra.mrb[0].mxu0 %v1555
        %v1728 = vpop.f32.mrb[0].mxu0
        %v1729 = vadd.f32 0.0, %v1728
        %v1730 = vpop.f32.mrb[0].mxu0
        %v1731 = vadd.f32 0.0, %v1730
        %v1732 = vpop.f32.mrb[0].mxu0
        %v1733 = vpop.f32.mrb[0].mxu0
        %1734 = vdwg.mxu0
        %v1735 = vld [vmem:[#allocation2] sm:$0x1]
        %1737 = vset.pattern.permute.xlu0 0
        %1738 = vperm.xlu0 %1737, %v1735
        %v1739 = vpop.permute.xlu0 %1738
        %v1741 = vlaneseq
        %v1742 = vshrl.u32 %v1741, 7
        %v1743 = vsub.s32 0, %v1742
        %v1744 = vrot.slane %v1739, %v1743
        %v1745 = vadd.f32 %v1688, %v1744
        %v1746 = vadd.f32 %v1690, %v1744
        %v1747 = vadd.f32 %v1729, %v1744
        %v1748 = vadd.f32 %v1731, %v1744
        %v1749 = vxor.u32 %v1745, 2147483648
        %v1750 = vxor.u32 %v1746, 2147483648
        %v1751 = vxor.u32 %v1747, 2147483648
        %v1752 = vxor.u32 %v1748, 2147483648
        %v1753 = vmul.f32 %v1749, 1.442695
        %v1754 = vpow.pop %v1753
        %v1755 = vmul.f32 %v1750, 1.442695
        %v1756 = vpow.pop %v1755
        %v1757 = vmul.f32 %v1751, 1.442695
        %v1758 = vpow.pop %v1757
        %v1759 = vmul.f32 %v1752, 1.442695
        %v1760 = vpow.pop %v1759
        %v1761 = vadd.f32 %v1754, 1.0
        %v1762 = vadd.f32 %v1756, 1.0
        %v1763 = vadd.f32 %v1758, 1.0
        %v1764 = vadd.f32 %v1760, 1.0
        %v1765 = vrcp.pop %v1761
        %v1766 = vmul.f32 1.0, %v1765
        %v1767 = vrcp.pop %v1762
        %v1768 = vmul.f32 1.0, %v1767
        %v1769 = vrcp.pop %v1763
        %v1770 = vmul.f32 1.0, %v1769
        %v1771 = vrcp.pop %v1764
        %v1772 = vmul.f32 1.0, %v1771
        %v1777 = vcombine.low %v1766, %v1768
        %v1778 = vcombine.low %v1770, %v1772
        %v1780 = vunpack.c.l.s4 1966171168
        %v1781 = vunpack.c.0.s8 %v1780
        %v1782 = vlaneseq
        %v1783 = vshrl.u32 %v1782, 7
        %v1784 = vsub.s32 %v1781, %v1783
        %v1785 = vrot.slane %v1777, %v1784
        %v1787 = vunpack.c.l.s4 1966171168
        %v1788 = vunpack.c.0.s8 %v1787
        %v1789 = vlaneseq
        %v1790 = vshrl.u32 %v1789, 7
        %v1791 = vsub.s32 %v1788, %v1790
        %v1792 = vrot.slane %v1778, %v1791
        %v1793 = vcombine.low %v1785, %v1792
        %v1795 = vunpack.c.l.s4 1966171168
        %v1796 = vunpack.c.0.s8 %v1795
        %v1797 = vlaneseq
        %v1798 = vshrl.u32 %v1797, 7
        %v1799 = vsub.s32 %v1796, %v1798
        %v1800 = vrot.slane %v1793, %v1799
        %v1802 = vlaneseq
        %vm1803 = vcmp.ge.s32.totalorder %v1802, 0
        %vm1804 = vcmp.lt.s32.totalorder %v1802, 512
        %vm1805 = vmand %vm1803, %vm1804
        %1806 = vst.msk [vmem:[%s286] sm:$0xf] %vm1805, %v1800
        %s1807 = sand.u32 %s183, 1
        %s1808 = scalar_lea.sflag [#allocation4], %s1807
        %s1809 = sand.u32 %s183, 1
        %s1810 = smul.addr %s1809, 4
        %s1811 = scalar_lea.vmem [#allocation3], %s1810
        // Predicated region
        $region49: #{tpu_custom_call.1} parent=47 // pred_check
          %p1812 = pneg %p193
        $region50: #{tpu_custom_call.1} parent=47 // pred_check_branch
          %1814 = sbr.rel (%p1812) target = $region52
        $region51: #{tpu_custom_call.1} parent=47 // pred_region
          %s1815 = smul.u32 4, %s23
          %s1817 = ssub.s32 64, 64
          %1818 = vsyncadd %s1808, %s1817
          %s1819 = smul.addr %s1815, 16
          %s1820 = scalar_lea.hbm %s7, %s1819
          %s1822 = sshll.u32 %s1811, 4
          %s1823 = int_to_ptr.vmem [resolvable:$true] %s1822
          %1825 = dma.vmem_to_hbm [thread:$0]  %s1823, 64, %s1820, %s1808
        $region52: #{tpu_custom_call.1} parent=47 // pred_fallthru
          _
      $region48: #{tpu_custom_call.1} parent=5 // pred_fallthru
        _
      %p1826 = scmp.le.s32.totalorder 2, %s18
      // Predicated region
      $region53: #{tpu_custom_call.1} parent=5 // pred_check
        %p1827 = pneg %p1826
      $region54: #{tpu_custom_call.1} parent=5 // pred_check_branch
        %1829 = sbr.rel (%p1827) target = $region56
      $region55: #{tpu_custom_call.1} parent=5 // pred_region
        %s1830 = ssub.s32 %s18, 2
        // Predicated region
        $region57: #{tpu_custom_call.1} parent=55 // pred_check
          %p1831 = pneg %p199
        $region58: #{tpu_custom_call.1} parent=55 // pred_check_branch
          %1833 = sbr.rel (%p1831) target = $region60
        $region59: #{tpu_custom_call.1} parent=55 // pred_region
          %s1834 = sand.u32 %s184, 1
          %s1835 = scalar_lea.sflag [#allocation4], %s1834
          %s1836 = sand.u32 %s184, 1
          %s1837 = smul.addr %s1836, 4
          %s1838 = scalar_lea.vmem [#allocation3], %s1837
          %1839 = dma.done %s1835, 64
        $region60: #{tpu_custom_call.1} parent=55 // pred_fallthru
          _
      $region56: #{tpu_custom_call.1} parent=5 // pred_fallthru
        _
    $region6: #{tpu_custom_call.1} parent=1 // loop_footer
      %s22 = sadd.s32 1, %s18
    $region7: #{tpu_custom_call.1} parent=1 // loop_footer_branch
      %17 = sbr.rel target = $region3
    $region8: #{tpu_custom_call.1} parent=1 // loop_exit
      _
    %1840 = vsyncpa [#allocation4], 1
    %s1841 = scalar_lea.sflag [#allocation4], 1
    %1842 = vsyncpa %s1841, 1

// kernel: tpu_custom_call.1
$region0: #{tpu_custom_call.1}
  #allocation0 [shape = 'u32[]', space=smem, size = 0x4, offset = 0x4, fixed_abs, tag = 'smem constant byte address 0x4 - core index']
  #allocation1 [shape = 'u32[144,128]{1,0:T(1,128)}', space=vmem, size = 0x12000, scoped, tag = 'internal scratch']
  #allocation2 [shape = 'f32[1,1]{1,0:T(1,128)S(1)}', space=vmem, size = 0x200, scoped, tag = 'scoped memory for tpu_custom_call.1']
  %s0 = inlined_call_operand.vmem [shape: bf16[1000,32], index: 0, kind: input, shape index: {}]
  %s1 = inlined_call_operand.vmem [shape: bf16[32,64], index: 1, kind: input, shape index: {}]
  %s2 = inlined_call_operand.vmem [shape: f32[1,64], index: 2, kind: input, shape index: {}]
  %s3 = inlined_call_operand.vmem [shape: bf16[64,64], index: 3, kind: input, shape index: {}]
  %s4 = inlined_call_operand.vmem [shape: f32[1,64], index: 4, kind: input, shape index: {}]
  %s5 = inlined_call_operand.vmem [shape: bf16[8,64], index: 5, kind: input, shape index: {}]
  %s6 = inlined_call_operand.<no memory space> [shape: f32[1,1], index: 6, kind: input, shape index: {}]
  %s7 = inlined_call_operand.hbm [shape: f32[1,1000], index: 7, kind: output, shape index: {}]
  %s8 = sld [smem:[#allocation0]]
  $region61: #{tpu_custom_call.1} parent=0
    _
  %s10 = ssub.s32 1, %s8
  %s11 = scalar_select 0, %s10, %s8
  %v12 = vstv %s6
  %13 = vst [vmem:[#allocation2] sm:$0x1] %v12
  $region1: #{tpu_custom_call.1} parent=0
    #allocation3 [shape = 'u8[4096]{0}', space=vmem, size = 0x1000, scoped, tag = 'output window, operand 0']
    #allocation4 [shape = 's32[2]{0}', space=sflag, size = 0x8, scoped, tag = 'scoped memory for tpu_custom_call.1']
    %14 = vsyncpa [#allocation4], 0
    %s15 = scalar_lea.sflag [#allocation4], 1
    %16 = vsyncpa %s15, 0
    loop: start=0, step=1, limit=4
    $region2: #{tpu_custom_call.1} parent=1 // loop_pre_header
      _
    $region3: #{tpu_custom_call.1} parent=1 // loop_header
      %s18 = sphi 0, %s22
      %p19 = scmp.ge.s32.totalorder %s18, 4
      %s28 = sphi 0, %s30
      %s31 = sphi 0, %s28
      %s32 = sphi 0, %s31
      %s48 = sphi 0, %s32
      %s52 = sphi 0, %s52
      %s54 = sphi 0, %s52
      %s55 = sphi 0, %s54
      %s69 = sphi 0, %s55
      %s73 = sphi 0, %s73
      %s75 = sphi 0, %s73
      %s76 = sphi 0, %s75
      %s90 = sphi 0, %s76
      %s94 = sphi 0, %s94
      %s96 = sphi 0, %s94
      %s97 = sphi 0, %s96
      %s111 = sphi 0, %s97
      %s115 = sphi 0, %s115
      %s117 = sphi 0, %s115
      %s118 = sphi 0, %s117
      %s132 = sphi 0, %s118
      %s136 = sphi 0, %s136
      %s138 = sphi 0, %s136
      %s139 = sphi 0, %s138
      %s153 = sphi 0, %s139
      %s157 = sphi 0, %s157
      %s159 = sphi 0, %s157
      %s160 = sphi 0, %s159
      %s174 = sphi 0, %s160
      %s180 = sphi 0, %s182
      %s183 = sphi 0, %s180
      %s184 = sphi 0, %s183
      %s200 = sphi 0, %s184
    $region4: #{tpu_custom_call.1} parent=1 // loop_header_branch
      %21 = sbr.rel (%p19) target = $region8
    $region5: #{tpu_custom_call.1} parent=1 // loop_body
      %s23 = ssub.s32 %s18, 1
      %s24 = ssub.s32 %s18, 2
      %s25 = sadd.s32 %s18, 1
      %s26 = ssub.s32 %s18, %s25
      %p27 = scmp.eq.s32.totalorder %s26, 0
      %s29 = sadd.s32 %s28, 1
      %s30 = scalar_select %p27, %s28, %s29
      %p33 = pneg %p27
      %p34 = scmp.eq.s32.totalorder %s18, 1
      %p35 = por %p33, %p34
      %p36 = scmp.ne.s32.totalorder %s28, %s31
      %p37 = scmp.eq.s32.totalorder %s18, 0
      %p38 = por %p36, %p37
      %p39 = scmp.ne.s32.totalorder %s28, %s31
      %p40 = scmp.eq.s32.totalorder %s23, 1
      %p41 = por %p39, %p40
      %p42 = scmp.ne.s32.totalorder %s31, %s32
      %p43 = scmp.eq.s32.totalorder %s23, 0
      %p44 = por %p42, %p43
      %p45 = scmp.ne.s32.totalorder %s31, %s32
      %p46 = scmp.eq.s32.totalorder %s24, 1
      %p47 = por %p45, %p46
      %p49 = scmp.ne.s32.totalorder %s32, %s48
      %p50 = scmp.eq.s32.totalorder %s24, 0
      %p51 = por %p49, %p50
      %s53 = sadd.s32 %s52, 1
      %p56 = scmp.eq.s32.totalorder %s18, 1
      %p57 = scmp.ne.s32.totalorder %s52, %s54
      %p58 = scmp.eq.s32.totalorder %s18, 0
      %p59 = por %p57, %p58
      %p60 = scmp.ne.s32.totalorder %s52, %s54
      %p61 = scmp.eq.s32.totalorder %s23, 1
      %p62 = por %p60, %p61
      %p63 = scmp.ne.s32.totalorder %s54, %s55
      %p64 = scmp.eq.s32.totalorder %s23, 0
      %p65 = por %p63, %p64
      %p66 = scmp.ne.s32.totalorder %s54, %s55
      %p67 = scmp.eq.s32.totalorder %s24, 1
      %p68 = por %p66, %p67
      %p70 = scmp.ne.s32.totalorder %s55, %s69
      %p71 = scmp.eq.s32.totalorder %s24, 0
      %p72 = por %p70, %p71
      %s74 = sadd.s32 %s73, 1
      %p77 = scmp.eq.s32.totalorder %s18, 1
      %p78 = scmp.ne.s32.totalorder %s73, %s75
      %p79 = scmp.eq.s32.totalorder %s18, 0
      %p80 = por %p78, %p79
      %p81 = scmp.ne.s32.totalorder %s73, %s75
      %p82 = scmp.eq.s32.totalorder %s23, 1
      %p83 = por %p81, %p82
      %p84 = scmp.ne.s32.totalorder %s75, %s76
      %p85 = scmp.eq.s32.totalorder %s23, 0
      %p86 = por %p84, %p85
      %p87 = scmp.ne.s32.totalorder %s75, %s76
      %p88 = scmp.eq.s32.totalorder %s24, 1
      %p89 = por %p87, %p88
      %p91 = scmp.ne.s32.totalorder %s76, %s90
      %p92 = scmp.eq.s32.totalorder %s24, 0
      %p93 = por %p91, %p92
      %s95 = sadd.s32 %s94, 1
      %p98 = scmp.eq.s32.totalorder %s18, 1
      %p99 = scmp.ne.s32.totalorder %s94, %s96
      %p100 = scmp.eq.s32.totalorder %s18, 0
      %p101 = por %p99, %p100
      %p102 = scmp.ne.s32.totalorder %s94, %s96
      %p103 = scmp.eq.s32.totalorder %s23, 1
      %p104 = por %p102, %p103
      %p105 = scmp.ne.s32.totalorder %s96, %s97
      %p106 = scmp.eq.s32.totalorder %s23, 0
      %p107 = por %p105, %p106
      %p108 = scmp.ne.s32.totalorder %s96, %s97
      %p109 = scmp.eq.s32.totalorder %s24, 1
      %p110 = por %p108, %p109
      %p112 = scmp.ne.s32.totalorder %s97, %s111
      %p113 = scmp.eq.s32.totalorder %s24, 0
      %p114 = por %p112, %p113
      %s116 = sadd.s32 %s115, 1
      %p119 = scmp.eq.s32.totalorder %s18, 1
      %p120 = scmp.ne.s32.totalorder %s115, %s117
      %p121 = scmp.eq.s32.totalorder %s18, 0
      %p122 = por %p120, %p121
      %p123 = scmp.ne.s32.totalorder %s115, %s117
      %p124 = scmp.eq.s32.totalorder %s23, 1
      %p125 = por %p123, %p124
      %p126 = scmp.ne.s32.totalorder %s117, %s118
      %p127 = scmp.eq.s32.totalorder %s23, 0
      %p128 = por %p126, %p127
      %p129 = scmp.ne.s32.totalorder %s117, %s118
      %p130 = scmp.eq.s32.totalorder %s24, 1
      %p131 = por %p129, %p130
      %p133 = scmp.ne.s32.totalorder %s118, %s132
      %p134 = scmp.eq.s32.totalorder %s24, 0
      %p135 = por %p133, %p134
      %s137 = sadd.s32 %s136, 1
      %p140 = scmp.eq.s32.totalorder %s18, 1
      %p141 = scmp.ne.s32.totalorder %s136, %s138
      %p142 = scmp.eq.s32.totalorder %s18, 0
      %p143 = por %p141, %p142
      %p144 = scmp.ne.s32.totalorder %s136, %s138
      %p145 = scmp.eq.s32.totalorder %s23, 1
      %p146 = por %p144, %p145
      %p147 = scmp.ne.s32.totalorder %s138, %s139
      %p148 = scmp.eq.s32.totalorder %s23, 0
      %p149 = por %p147, %p148
      %p150 = scmp.ne.s32.totalorder %s138, %s139
      %p151 = scmp.eq.s32.totalorder %s24, 1
      %p152 = por %p150, %p151
      %p154 = scmp.ne.s32.totalorder %s139, %s153
      %p155 = scmp.eq.s32.totalorder %s24, 0
      %p156 = por %p154, %p155
      %s158 = sadd.s32 %s157, 1
      %p161 = scmp.eq.s32.totalorder %s18, 1
      %p162 = scmp.ne.s32.totalorder %s157, %s159
      %p163 = scmp.eq.s32.totalorder %s18, 0
      %p164 = por %p162, %p163
      %p165 = scmp.ne.s32.totalorder %s157, %s159
      %p166 = scmp.eq.s32.totalorder %s23, 1
      %p167 = por %p165, %p166
      %p168 = scmp.ne.s32.totalorder %s159, %s160
      %p169 = scmp.eq.s32.totalorder %s23, 0
      %p170 = por %p168, %p169
      %p171 = scmp.ne.s32.totalorder %s159, %s160
      %p172 = scmp.eq.s32.totalorder %s24, 1
      %p173 = por %p171, %p172
      %p175 = scmp.ne.s32.totalorder %s160, %s174
      %p176 = scmp.eq.s32.totalorder %s24, 0
      %p177 = por %p175, %p176
      %s178 = ssub.s32 %s18, %s25
      %p179 = scmp.eq.s32.totalorder %s178, 0
      %s181 = sadd.s32 %s180, 1
      %s182 = scalar_select %p179, %s180, %s181
      %p185 = pneg %p179
      %p186 = scmp.eq.s32.totalorder %s18, 1
      %p187 = por %p185, %p186
      %p188 = scmp.ne.s32.totalorder %s180, %s183
      %p189 = scmp.eq.s32.totalorder %s18, 0
      %p190 = por %p188, %p189
      %p191 = scmp.ne.s32.totalorder %s180, %s183
      %p192 = scmp.eq.s32.totalorder %s23, 1
      %p193 = por %p191, %p192
      %p194 = scmp.ne.s32.totalorder %s183, %s184
      %p195 = scmp.eq.s32.totalorder %s23, 0
      %p196 = por %p194, %p195
      %p197 = scmp.ne.s32.totalorder %s183, %s184
      %p198 = scmp.eq.s32.totalorder %s24, 1
      %p199 = por %p197, %p198
      %p201 = scmp.ne.s32.totalorder %s184, %s200
      %p202 = scmp.eq.s32.totalorder %s24, 0
      %p203 = por %p201, %p202
      %p204 = scmp.le.s32.totalorder 1, %s18
      %p205 = scmp.lt.s32.totalorder %s18, 3
      %p206 = pnand %p204, %p205
      %p207 = pneg %p206
      // Predicated region
      $region9: #{tpu_custom_call.1} parent=5 // pred_check
        _
      $region10: #{tpu_custom_call.1} parent=5 // pred_check_branch
        %209 = sbr.rel (%p206) target = $region12
      $region11: #{tpu_custom_call.1} parent=5 // pred_region
        %s210 = ssub.s32 %s18, 1
        // Predicated region
        $region13: #{tpu_custom_call.1} parent=11 // pred_check
          %p211 = pneg %p65
        $region14: #{tpu_custom_call.1} parent=11 // pred_check_branch
          %213 = sbr.rel (%p211) target = $region16
        $region15: #{tpu_custom_call.1} parent=11 // pred_region
          _
        $region16: #{tpu_custom_call.1} parent=11 // pred_fallthru
          _
        // Predicated region
        $region17: #{tpu_custom_call.1} parent=11 // pred_check
          %p214 = pneg %p86
        $region18: #{tpu_custom_call.1} parent=11 // pred_check_branch
          %216 = sbr.rel (%p214) target = $region20
        $region19: #{tpu_custom_call.1} parent=11 // pred_region
          _
        $region20: #{tpu_custom_call.1} parent=11 // pred_fallthru
          _
        // Predicated region
        $region21: #{tpu_custom_call.1} parent=11 // pred_check
          %p217 = pneg %p107
        $region22: #{tpu_custom_call.1} parent=11 // pred_check_branch
          %219 = sbr.rel (%p217) target = $region24
        $region23: #{tpu_custom_call.1} parent=11 // pred_region
          _
        $region24: #{tpu_custom_call.1} parent=11 // pred_fallthru
          _
        // Predicated region
        $region25: #{tpu_custom_call.1} parent=11 // pred_check
          %p220 = pneg %p128
        $region26: #{tpu_custom_call.1} parent=11 // pred_check_branch
          %222 = sbr.rel (%p220) target = $region28
        $region27: #{tpu_custom_call.1} parent=11 // pred_region
          _
        $region28: #{tpu_custom_call.1} parent=11 // pred_fallthru
          _
        // Predicated region
        $region29: #{tpu_custom_call.1} parent=11 // pred_check
          %p223 = pneg %p149
        $region30: #{tpu_custom_call.1} parent=11 // pred_check_branch
          %225 = sbr.rel (%p223) target = $region32
        $region31: #{tpu_custom_call.1} parent=11 // pred_region
          _
        $region32: #{tpu_custom_call.1} parent=11 // pred_fallthru
          _
        // Predicated region
        $region33: #{tpu_custom_call.1} parent=11 // pred_check
          %p226 = pneg %p170
        $region34: #{tpu_custom_call.1} parent=11 // pred_check_branch
          %228 = sbr.rel (%p226) target = $region36
        $region35: #{tpu_custom_call.1} parent=11 // pred_region
          _
        $region36: #{tpu_custom_call.1} parent=11 // pred_fallthru
          _
      $region12: #{tpu_custom_call.1} parent=5 // pred_fallthru
        _
      %p229 = scmp.lt.s32.totalorder %s18, 2
      // Predicated region
      $region37: #{tpu_custom_call.1} parent=5 // pred_check
        %p230 = pneg %p229
      $region38: #{tpu_custom_call.1} parent=5 // pred_check_branch
        %232 = sbr.rel (%p230) target = $region40
      $region39: #{tpu_custom_call.1} parent=5 // pred_region
        // Predicated region
        $region41: #{tpu_custom_call.1} parent=39 // pred_check
          %p233 = pneg %p38
        $region42: #{tpu_custom_call.1} parent=39 // pred_check_branch
          %235 = sbr.rel (%p233) target = $region44
        $region43: #{tpu_custom_call.1} parent=39 // pred_region
          %s236 = smul.u32 64, %s18
          %s237 = ssub.s32 125, %s236
          %p238 = scmp.lt.s32.totalorder %s237, 64
          %s239 = scalar_select %p238, %s237, 64
          %s240 = smul.u32 64, %s239
          %p241 = scmp.lt.s32.totalorder %s236, 124
          %s242 = scalar_select %p241, %s236, 124
          %s243 = smul.addr %s242, 4
          %s244 = scalar_lea.vmem %s0, %s243
          %s245 = smul.u32 64, %s18
          %s246 = ssub.s32 125, %s245
          %p247 = scmp.lt.s32.totalorder %s246, 64
          %s248 = scalar_select %p247, %s246, 64
          %s249 = smul.u32 64, %s248
        $region44: #{tpu_custom_call.1} parent=39 // pred_fallthru
          _
      $region40: #{tpu_custom_call.1} parent=5 // pred_fallthru
        _
      %p250 = scmp.le.s32.totalorder 1, %s18
      %p251 = scmp.lt.s32.totalorder %s18, 3
      %p252 = pnand %p250, %p251
      %p253 = pneg %p252
      // Predicated region
      $region45: #{tpu_custom_call.1} parent=5 // pred_check
        _
      $region46: #{tpu_custom_call.1} parent=5 // pred_check_branch
        %255 = sbr.rel (%p252) target = $region48
      $region47: #{tpu_custom_call.1} parent=5 // pred_region
        %s256 = ssub.s32 %s18, 1
        %s257 = smul.u32 64, %s23
        %s258 = ssub.s32 125, %s257
        %p259 = scmp.lt.s32.totalorder %s258, 64
        %s260 = scalar_select %p259, %s258, 64
        %s261 = smul.u32 64, %s260
        %p262 = scmp.lt.s32.totalorder %s257, 124
        %s263 = scalar_select %p262, %s257, 124
        %s264 = smul.addr %s263, 4
        %s265 = scalar_lea.vmem %s0, %s264
        %p266 = pneg %p44
        %p267 = pneg %p41
        %p268 = pneg %p65
        %p269 = pneg %p62
        %p270 = pneg %p86
        %p271 = pneg %p83
        %p272 = pneg %p107
        %p273 = pneg %p104
        %p274 = pneg %p128
        %p275 = pneg %p125
        %p276 = pneg %p149
        %p277 = pneg %p146
        %p278 = pneg %p170
        %p279 = pneg %p167
        %p280 = pneg %p196
        %p281 = pneg %p193
        %s282 = sand.u32 %s183, 1
        %s283 = scalar_lea.sflag [#allocation4], %s282
        %s284 = sand.u32 %s183, 1
        %s285 = smul.addr %s284, 4
        %s286 = scalar_lea.vmem [#allocation3], %s285
        %s287 = smul.u32 64, %s23
        %s288 = ssub.s32 125, %s287
        %p289 = scmp.lt.s32.totalorder %s288, 64
        %s290 = scalar_select %p289, %s288, 64
        %s291 = smul.u32 64, %s290
        %p292 = scmp.lt.s32.totalorder %s287, 124
        %s293 = scalar_select %p292, %s287, 124
        %s294 = smul.addr %s293, 4
        %s295 = scalar_lea.vmem %s0, %s294
        %s296 = smul.u32 64, %s23
        %s297 = ssub.s32 125, %s296
        %p298 = scmp.lt.s32.totalorder %s297, 64
        %s299 = scalar_select %p298, %s297, 64
        %s300 = smul.u32 64, %s299
        %s301 = smul.u32 4, %s23
        %v303 = vld [vmem:[%s295] sm:$0xf]
        %v304 = vld [vmem:[%s295 + $0x4] sm:$0xf]
        %v305 = vld [vmem:[%s295 + $0x8] sm:$0xf]
        %v306 = vld [vmem:[%s295 + $0xc] sm:$0xf]
        %v307 = vld [vmem:[%s295 + $0x10] sm:$0xf]
        %v308 = vld [vmem:[%s295 + $0x14] sm:$0xf]
        %v309 = vld [vmem:[%s295 + $0x18] sm:$0xf]
        %v310 = vld [vmem:[%s295 + $0x1c] sm:$0xf]
        %v311 = vld [vmem:[%s295 + $0x20] sm:$0xf]
        %v312 = vld [vmem:[%s295 + $0x24] sm:$0xf]
        %v313 = vld [vmem:[%s295 + $0x28] sm:$0xf]
        %v314 = vld [vmem:[%s295 + $0x2c] sm:$0xf]
        %v315 = vld [vmem:[%s295 + $0x30] sm:$0xf]
        %v316 = vld [vmem:[%s295 + $0x34] sm:$0xf]
        %v317 = vld [vmem:[%s295 + $0x38] sm:$0xf]
        %v318 = vld [vmem:[%s295 + $0x3c] sm:$0xf]
        %v319 = vld [vmem:[%s295 + $0x40] sm:$0xf]
        %v320 = vld [vmem:[%s295 + $0x44] sm:$0xf]
        %v321 = vld [vmem:[%s295 + $0x48] sm:$0xf]
        %v322 = vld [vmem:[%s295 + $0x4c] sm:$0xf]
        %v323 = vld [vmem:[%s295 + $0x50] sm:$0xf]
        %v324 = vld [vmem:[%s295 + $0x54] sm:$0xf]
        %v325 = vld [vmem:[%s295 + $0x58] sm:$0xf]
        %v326 = vld [vmem:[%s295 + $0x5c] sm:$0xf]
        %v327 = vld [vmem:[%s295 + $0x60] sm:$0xf]
        %v328 = vld [vmem:[%s295 + $0x64] sm:$0xf]
        %v329 = vld [vmem:[%s295 + $0x68] sm:$0xf]
        %v330 = vld [vmem:[%s295 + $0x6c] sm:$0xf]
        %v331 = vld [vmem:[%s295 + $0x70] sm:$0xf]
        %v332 = vld [vmem:[%s295 + $0x74] sm:$0xf]
        %v333 = vld [vmem:[%s295 + $0x78] sm:$0xf]
        %v334 = vld [vmem:[%s295 + $0x7c] sm:$0xf]
        %v335 = vld [vmem:[%s295 + $0x80] sm:$0xf]
        %v336 = vld [vmem:[%s295 + $0x84] sm:$0xf]
        %v337 = vld [vmem:[%s295 + $0x88] sm:$0xf]
        %v338 = vld [vmem:[%s295 + $0x8c] sm:$0xf]
        %v339 = vld [vmem:[%s295 + $0x90] sm:$0xf]
        %v340 = vld [vmem:[%s295 + $0x94] sm:$0xf]
        %v341 = vld [vmem:[%s295 + $0x98] sm:$0xf]
        %v342 = vld [vmem:[%s295 + $0x9c] sm:$0xf]
        %v343 = vld [vmem:[%s295 + $0xa0] sm:$0xf]
        %v344 = vld [vmem:[%s295 + $0xa4] sm:$0xf]
        %v345 = vld [vmem:[%s295 + $0xa8] sm:$0xf]
        %v346 = vld [vmem:[%s295 + $0xac] sm:$0xf]
        %v347 = vld [vmem:[%s295 + $0xb0] sm:$0xf]
        %v348 = vld [vmem:[%s295 + $0xb4] sm:$0xf]
        %v349 = vld [vmem:[%s295 + $0xb8] sm:$0xf]
        %v350 = vld [vmem:[%s295 + $0xbc] sm:$0xf]
        %v351 = vld [vmem:[%s295 + $0xc0] sm:$0xf]
        %v352 = vld [vmem:[%s295 + $0xc4] sm:$0xf]
        %v353 = vld [vmem:[%s295 + $0xc8] sm:$0xf]
        %v354 = vld [vmem:[%s295 + $0xcc] sm:$0xf]
        %v355 = vld [vmem:[%s295 + $0xd0] sm:$0xf]
        %v356 = vld [vmem:[%s295 + $0xd4] sm:$0xf]
        %v357 = vld [vmem:[%s295 + $0xd8] sm:$0xf]
        %v358 = vld [vmem:[%s295 + $0xdc] sm:$0xf]
        %v359 = vld [vmem:[%s295 + $0xe0] sm:$0xf]
        %v360 = vld [vmem:[%s295 + $0xe4] sm:$0xf]
        %v361 = vld [vmem:[%s295 + $0xe8] sm:$0xf]
        %v362 = vld [vmem:[%s295 + $0xec] sm:$0xf]
        %v363 = vld [vmem:[%s295 + $0xf0] sm:$0xf]
        %v364 = vld [vmem:[%s295 + $0xf4] sm:$0xf]
        %v365 = vld [vmem:[%s295 + $0xf8] sm:$0xf]
        %v366 = vld [vmem:[%s295 + $0xfc] sm:$0xf]
        %v367 = vld [vmem:[%s1] sm:$0xf]
        %v368 = vld [vmem:[%s1 + $0x4] sm:$0xf]
        %v369 = vld [vmem:[%s1 + $0x8] sm:$0xf]
        %v370 = vld [vmem:[%s1 + $0xc] sm:$0xf]
        %v371 = vld [vmem:[%s2] sm:$0x1]
        %v373 = vlaneseq
        %v374 = vshrl.u32 %v373, 7
        %v375 = vsub.s32 0, %v374
        %v376 = vrot.slane %v371, %v375
        %v442 = vunpack.c.l.b16 %v303
        %v443 = vunpack.c.l.b16 %v304
        %v444 = vunpack.c.l.b16 %v305
        %v445 = vunpack.c.l.b16 %v306
        %v446 = vunpack.c.l.b16 %v307
        %v447 = vunpack.c.l.b16 %v308
        %v448 = vunpack.c.l.b16 %v309
        %v449 = vunpack.c.l.b16 %v310
        %v450 = vunpack.c.l.b16 %v311
        %v451 = vunpack.c.l.b16 %v312
        %v452 = vunpack.c.l.b16 %v313
        %v453 = vunpack.c.l.b16 %v314
        %v454 = vunpack.c.l.b16 %v315
        %v455 = vunpack.c.l.b16 %v316
        %v456 = vunpack.c.l.b16 %v317
        %v457 = vunpack.c.l.b16 %v318
        %v458 = vunpack.c.l.b16 %v319
        %v459 = vunpack.c.l.b16 %v320
        %v460 = vunpack.c.l.b16 %v321
        %v461 = vunpack.c.l.b16 %v322
        %v462 = vunpack.c.l.b16 %v323
        %v463 = vunpack.c.l.b16 %v324
        %v464 = vunpack.c.l.b16 %v325
        %v465 = vunpack.c.l.b16 %v326
        %v466 = vunpack.c.l.b16 %v327
        %v467 = vunpack.c.l.b16 %v328
        %v468 = vunpack.c.l.b16 %v329
        %v469 = vunpack.c.l.b16 %v330
        %v470 = vunpack.c.l.b16 %v331
        %v471 = vunpack.c.l.b16 %v332
        %v472 = vunpack.c.l.b16 %v333
        %v473 = vunpack.c.l.b16 %v334
        %v474 = vunpack.c.l.b16 %v335
        %v475 = vunpack.c.l.b16 %v336
        %v476 = vunpack.c.l.b16 %v337
        %v477 = vunpack.c.l.b16 %v338
        %v478 = vunpack.c.l.b16 %v339
        %v479 = vunpack.c.l.b16 %v340
        %v480 = vunpack.c.l.b16 %v341
        %v481 = vunpack.c.l.b16 %v342
        %v482 = vunpack.c.l.b16 %v343
        %v483 = vunpack.c.l.b16 %v344
        %v484 = vunpack.c.l.b16 %v345
        %v485 = vunpack.c.l.b16 %v346
        %v486 = vunpack.c.l.b16 %v347
        %v487 = vunpack.c.l.b16 %v348
        %v488 = vunpack.c.l.b16 %v349
        %v489 = vunpack.c.l.b16 %v350
        %v490 = vunpack.c.l.b16 %v351
        %v491 = vunpack.c.l.b16 %v352
        %v492 = vunpack.c.l.b16 %v353
        %v493 = vunpack.c.l.b16 %v354
        %v494 = vunpack.c.l.b16 %v355
        %v495 = vunpack.c.l.b16 %v356
        %v496 = vunpack.c.l.b16 %v357
        %v497 = vunpack.c.l.b16 %v358
        %v498 = vunpack.c.l.b16 %v359
        %v499 = vunpack.c.l.b16 %v360
        %v500 = vunpack.c.l.b16 %v361
        %v501 = vunpack.c.l.b16 %v362
        %v502 = vunpack.c.l.b16 %v363
        %v503 = vunpack.c.l.b16 %v364
        %v504 = vunpack.c.l.b16 %v365
        %v505 = vunpack.c.l.b16 %v366
        %v506 = vpack.c.b16 %v443, %v442
        %v507 = vpack.c.b16 %v445, %v444
        %v508 = vpack.c.b16 %v447, %v446
        %v509 = vpack.c.b16 %v449, %v448
        %v510 = vpack.c.b16 %v451, %v450
        %v511 = vpack.c.b16 %v453, %v452
        %v512 = vpack.c.b16 %v455, %v454
        %v513 = vpack.c.b16 %v457, %v456
        %v514 = vpack.c.b16 %v459, %v458
        %v515 = vpack.c.b16 %v461, %v460
        %v516 = vpack.c.b16 %v463, %v462
        %v517 = vpack.c.b16 %v465, %v464
        %v518 = vpack.c.b16 %v467, %v466
        %v519 = vpack.c.b16 %v469, %v468
        %v520 = vpack.c.b16 %v471, %v470
        %v521 = vpack.c.b16 %v473, %v472
        %v522 = vpack.c.b16 %v475, %v474
        %v523 = vpack.c.b16 %v477, %v476
        %v524 = vpack.c.b16 %v479, %v478
        %v525 = vpack.c.b16 %v481, %v480
        %v526 = vpack.c.b16 %v483, %v482
        %v527 = vpack.c.b16 %v485, %v484
        %v528 = vpack.c.b16 %v487, %v486
        %v529 = vpack.c.b16 %v489, %v488
        %v530 = vpack.c.b16 %v491, %v490
        %v531 = vpack.c.b16 %v493, %v492
        %v532 = vpack.c.b16 %v495, %v494
        %v533 = vpack.c.b16 %v497, %v496
        %v534 = vpack.c.b16 %v499, %v498
        %v535 = vpack.c.b16 %v501, %v500
        %v536 = vpack.c.b16 %v503, %v502
        %v537 = vpack.c.b16 %v505, %v504
        %v542 = vunpack.c.l.b16 %v367
        %v543 = vunpack.c.l.b16 %v368
        %v544 = vunpack.c.l.b16 %v369
        %v545 = vunpack.c.l.b16 %v370
        %v546 = vpack.c.b16 %v543, %v542
        %v547 = vpack.c.b16 %v545, %v544
        %vm550 = vcmask 261120
        %v552 = vsel %vm550, %v506, 0
        %v555 = vsel %vm550, %v507, 0
        %v558 = vsel %vm550, %v508, 0
        %v561 = vsel %vm550, %v509, 0
        %v564 = vsel %vm550, %v510, 0
        %v567 = vsel %vm550, %v511, 0
        %v570 = vsel %vm550, %v512, 0
        %v573 = vsel %vm550, %v513, 0
        %v576 = vsel %vm550, %v514, 0
        %v579 = vsel %vm550, %v515, 0
        %v582 = vsel %vm550, %v516, 0
        %v585 = vsel %vm550, %v517, 0
        %v588 = vsel %vm550, %v518, 0
        %v591 = vsel %vm550, %v519, 0
        %v594 = vsel %vm550, %v520, 0
        %v597 = vsel %vm550, %v521, 0
        %v600 = vsel %vm550, %v522, 0
        %v603 = vsel %vm550, %v523, 0
        %v606 = vsel %vm550, %v524, 0
        %v609 = vsel %vm550, %v525, 0
        %v612 = vsel %vm550, %v526, 0
        %v615 = vsel %vm550, %v527, 0
        %v618 = vsel %vm550, %v528, 0
        %v621 = vsel %vm550, %v529, 0
        %v624 = vsel %vm550, %v530, 0
        %v627 = vsel %vm550, %v531, 0
        %v630 = vsel %vm550, %v532, 0
        %v633 = vsel %vm550, %v533, 0
        %v636 = vsel %vm550, %v534, 0
        %v639 = vsel %vm550, %v535, 0
        %v642 = vsel %vm550, %v536, 0
        %v645 = vsel %vm550, %v537, 0
        %647 = vmatprep.subr.bf16.mxu0 0
        %648 = vmatpush1.bf16.msra.mxu0 %v546
        %649 = vmatprep.subr.bf16.mxu0 0
        %650 = vmatpush1.bf16.msra.mxu0 %v547
        %651 = vmatprep.subr.bf16.mxu0 0
        %652 = vmatpush1.bf16.msra.mxu0 0
        %653 = vmatprep.subr.bf16.mxu0 0
        %654 = vmatpush1.bf16.msra.mxu0 0
        %655 = vmatprep.subr.bf16.mxu0 0
        %656 = vmatpush1.bf16.msra.mxu0 0
        %657 = vmatprep.subr.bf16.mxu0 0
        %658 = vmatpush1.bf16.msra.mxu0 0
        %659 = vmatprep.subr.bf16.mxu0 0
        %660 = vmatpush1.bf16.msra.mxu0 0
        %661 = vmatprep.subr.bf16.mxu0 0
        %662 = vmatpush1.bf16.msra.mxu0 0
        %663 = vmatprep.subr.bf16.mxu0 0
        %664 = vmatpush1.bf16.msra.mxu0 0
        %665 = vmatprep.subr.bf16.mxu0 0
        %666 = vmatpush1.bf16.msra.mxu0 0
        %667 = vmatprep.subr.bf16.mxu0 0
        %668 = vmatpush1.bf16.msra.mxu0 0
        %669 = vmatprep.subr.bf16.mxu0 0
        %670 = vmatpush1.bf16.msra.mxu0 0
        %671 = vmatprep.subr.bf16.mxu0 0
        %672 = vmatpush1.bf16.msra.mxu0 0
        %673 = vmatprep.subr.bf16.mxu0 0
        %674 = vmatpush1.bf16.msra.mxu0 0
        %675 = vmatprep.subr.bf16.mxu0 0
        %676 = vmatpush1.bf16.msra.mxu0 0
        %677 = vmatprep.subr.bf16.mxu0 0
        %678 = vmatpush1.bf16.msra.mxu0 0
        %679 = vmatprep.mubr.bf16.mxu0 0
        %680 = vmatmul.mubr.bf16.gmra.mrb[0].mxu0 %v552
        %v681 = vpop.f32.mrb[0].mxu0
        %v682 = vadd.f32 %v376, %v681
        %v683 = vpop.f32.mrb[0].mxu0
        %v684 = vpop.f32.mrb[0].mxu0
        %v685 = vadd.f32 %v376, %v684
        %v686 = vpop.f32.mrb[0].mxu0
        %687 = vmatprep.mubr.bf16.mxu0 0
        %688 = vmatmul.mubr.bf16.gmra.mrb[0].mxu0 %v555
        %v689 = vpop.f32.mrb[0].mxu0
        %v690 = vadd.f32 %v376, %v689
        %v691 = vpop.f32.mrb[0].mxu0
        %v692 = vpop.f32.mrb[0].mxu0
        %v693 = vadd.f32 %v376, %v692
        %v694 = vpop.f32.mrb[0].mxu0
        %695 = vmatprep.mubr.bf16.mxu0 0
        %696 = vmatmul.mubr.bf16.gmra.mrb[0].mxu0 %v558
        %v697 = vpop.f32.mrb[0].mxu0
        %v698 = vadd.f32 %v376, %v697
        %v699 = vpop.f32.mrb[0].mxu0
        %v700 = vpop.f32.mrb[0].mxu0
        %v701 = vadd.f32 %v376, %v700
        %v702 = vpop.f32.mrb[0].mxu0
        %703 = vmatprep.mubr.bf16.mxu0 0
        %704 = vmatmul.mubr.bf16.gmra.mrb[0].mxu0 %v561
        %v705 = vpop.f32.mrb[0].mxu0
        %v706 = vadd.f32 %v376, %v705
        %v707 = vpop.f32.mrb[0].mxu0
        %v708 = vpop.f32.mrb[0].mxu0
        %v709 = vadd.f32 %v376, %v708
        %v710 = vpop.f32.mrb[0].mxu0
        %711 = vmatprep.mubr.bf16.mxu0 0
        %712 = vmatmul.mubr.bf16.gmra.mrb[0].mxu0 %v564
        %v713 = vpop.f32.mrb[0].mxu0
        %v714 = vadd.f32 %v376, %v713
        %v715 = vpop.f32.mrb[0].mxu0
        %v716 = vpop.f32.mrb[0].mxu0
        %v717 = vadd.f32 %v376, %v716
        %v718 = vpop.f32.mrb[0].mxu0
        %719 = vmatprep.mubr.bf16.mxu0 0
        %720 = vmatmul.mubr.bf16.gmra.mrb[0].mxu0 %v567
        %v721 = vpop.f32.mrb[0].mxu0
        %v722 = vadd.f32 %v376, %v721
        %v723 = vpop.f32.mrb[0].mxu0
        %v724 = vpop.f32.mrb[0].mxu0
        %v725 = vadd.f32 %v376, %v724
        %v726 = vpop.f32.mrb[0].mxu0
        %727 = vmatprep.mubr.bf16.mxu0 0
        %728 = vmatmul.mubr.bf16.gmra.mrb[0].mxu0 %v570
        %v729 = vpop.f32.mrb[0].mxu0
        %v730 = vadd.f32 %v376, %v729
        %v731 = vpop.f32.mrb[0].mxu0
        %v732 = vpop.f32.mrb[0].mxu0
        %v733 = vadd.f32 %v376, %v732
        %v734 = vpop.f32.mrb[0].mxu0
        %735 = vmatprep.mubr.bf16.mxu0 0
        %736 = vmatmul.mubr.bf16.gmra.mrb[0].mxu0 %v573
        %v737 = vpop.f32.mrb[0].mxu0
        %v738 = vadd.f32 %v376, %v737
        %v739 = vpop.f32.mrb[0].mxu0
        %v740 = vpop.f32.mrb[0].mxu0
        %v741 = vadd.f32 %v376, %v740
        %v742 = vpop.f32.mrb[0].mxu0
        %743 = vmatprep.mubr.bf16.mxu0 0
        %744 = vmatmul.mubr.bf16.gmra.mrb[0].mxu0 %v576
        %v745 = vpop.f32.mrb[0].mxu0
        %v746 = vadd.f32 %v376, %v745
        %v747 = vpop.f32.mrb[0].mxu0
        %v748 = vpop.f32.mrb[0].mxu0
        %v749 = vadd.f32 %v376, %v748
        %v750 = vpop.f32.mrb[0].mxu0
        %751 = vmatprep.mubr.bf16.mxu0 0
        %752 = vmatmul.mubr.bf16.gmra.mrb[0].mxu0 %v579
        %v753 = vpop.f32.mrb[0].mxu0
        %v754 = vadd.f32 %v376, %v753
        %v755 = vpop.f32.mrb[0].mxu0
        %v756 = vpop.f32.mrb[0].mxu0
        %v757 = vadd.f32 %v376, %v756
        %v758 = vpop.f32.mrb[0].mxu0
        %759 = vmatprep.mubr.bf16.mxu0 0
        %760 = vmatmul.mubr.bf16.gmra.mrb[0].mxu0 %v582
        %v761 = vpop.f32.mrb[0].mxu0
        %v762 = vadd.f32 %v376, %v761
        %v763 = vpop.f32.mrb[0].mxu0
        %v764 = vpop.f32.mrb[0].mxu0
        %v765 = vadd.f32 %v376, %v764
        %v766 = vpop.f32.mrb[0].mxu0
        %767 = vmatprep.mubr.bf16.mxu0 0
        %768 = vmatmul.mubr.bf16.gmra.mrb[0].mxu0 %v585
        %v769 = vpop.f32.mrb[0].mxu0
        %v770 = vadd.f32 %v376, %v769
        %v771 = vpop.f32.mrb[0].mxu0
        %v772 = vpop.f32.mrb[0].mxu0
        %v773 = vadd.f32 %v376, %v772
        %v774 = vpop.f32.mrb[0].mxu0
        %775 = vmatprep.mubr.bf16.mxu0 0
        %776 = vmatmul.mubr.bf16.gmra.mrb[0].mxu0 %v588
        %v777 = vpop.f32.mrb[0].mxu0
        %v778 = vadd.f32 %v376, %v777
        %v779 = vpop.f32.mrb[0].mxu0
        %v780 = vpop.f32.mrb[0].mxu0
        %v781 = vadd.f32 %v376, %v780
        %v782 = vpop.f32.mrb[0].mxu0
        %783 = vmatprep.mubr.bf16.mxu0 0
        %784 = vmatmul.mubr.bf16.gmra.mrb[0].mxu0 %v591
        %v785 = vpop.f32.mrb[0].mxu0
        %v786 = vadd.f32 %v376, %v785
        %v787 = vpop.f32.mrb[0].mxu0
        %v788 = vpop.f32.mrb[0].mxu0
        %v789 = vadd.f32 %v376, %v788
        %v790 = vpop.f32.mrb[0].mxu0
        %791 = vmatprep.mubr.bf16.mxu0 0
        %792 = vmatmul.mubr.bf16.gmra.mrb[0].mxu0 %v594
        %v793 = vpop.f32.mrb[0].mxu0
        %v794 = vadd.f32 %v376, %v793
        %v795 = vpop.f32.mrb[0].mxu0
        %v796 = vpop.f32.mrb[0].mxu0
        %v797 = vadd.f32 %v376, %v796
        %v798 = vpop.f32.mrb[0].mxu0
        %799 = vmatprep.mubr.bf16.mxu0 0
        %800 = vmatmul.mubr.bf16.gmra.mrb[0].mxu0 %v597
        %v801 = vpop.f32.mrb[0].mxu0
        %v802 = vadd.f32 %v376, %v801
        %v803 = vpop.f32.mrb[0].mxu0
        %v804 = vpop.f32.mrb[0].mxu0
        %v805 = vadd.f32 %v376, %v804
        %v806 = vpop.f32.mrb[0].mxu0
        %807 = vmatprep.mubr.bf16.mxu0 0
        %808 = vmatmul.mubr.bf16.gmra.mrb[0].mxu0 %v600
        %v809 = vpop.f32.mrb[0].mxu0
        %v810 = vadd.f32 %v376, %v809
        %v811 = vpop.f32.mrb[0].mxu0
        %v812 = vpop.f32.mrb[0].mxu0
        %v813 = vadd.f32 %v376, %v812
        %v814 = vpop.f32.mrb[0].mxu0
        %815 = vmatprep.mubr.bf16.mxu0 0
        %816 = vmatmul.mubr.bf16.gmra.mrb[0].mxu0 %v603
        %v817 = vpop.f32.mrb[0].mxu0
        %v818 = vadd.f32 %v376, %v817
        %v819 = vpop.f32.mrb[0].mxu0
        %v820 = vpop.f32.mrb[0].mxu0
        %v821 = vadd.f32 %v376, %v820
        %v822 = vpop.f32.mrb[0].mxu0
        %823 = vmatprep.mubr.bf16.mxu0 0
        %824 = vmatmul.mubr.bf16.gmra.mrb[0].mxu0 %v606
        %v825 = vpop.f32.mrb[0].mxu0
        %v826 = vadd.f32 %v376, %v825
        %v827 = vpop.f32.mrb[0].mxu0
        %v828 = vpop.f32.mrb[0].mxu0
        %v829 = vadd.f32 %v376, %v828
        %v830 = vpop.f32.mrb[0].mxu0
        %831 = vmatprep.mubr.bf16.mxu0 0
        %832 = vmatmul.mubr.bf16.gmra.mrb[0].mxu0 %v609
        %v833 = vpop.f32.mrb[0].mxu0
        %v834 = vadd.f32 %v376, %v833
        %v835 = vpop.f32.mrb[0].mxu0
        %v836 = vpop.f32.mrb[0].mxu0
        %v837 = vadd.f32 %v376, %v836
        %v838 = vpop.f32.mrb[0].mxu0
        %839 = vmatprep.mubr.bf16.mxu0 0
        %840 = vmatmul.mubr.bf16.gmra.mrb[0].mxu0 %v612
        %v841 = vpop.f32.mrb[0].mxu0
        %v842 = vadd.f32 %v376, %v841
        %v843 = vpop.f32.mrb[0].mxu0
        %v844 = vpop.f32.mrb[0].mxu0
        %v845 = vadd.f32 %v376, %v844
        %v846 = vpop.f32.mrb[0].mxu0
        %847 = vmatprep.mubr.bf16.mxu0 0
        %848 = vmatmul.mubr.bf16.gmra.mrb[0].mxu0 %v615
        %v849 = vpop.f32.mrb[0].mxu0
        %v850 = vadd.f32 %v376, %v849
        %v851 = vpop.f32.mrb[0].mxu0
        %v852 = vpop.f32.mrb[0].mxu0
        %v853 = vadd.f32 %v376, %v852
        %v854 = vpop.f32.mrb[0].mxu0
        %855 = vmatprep.mubr.bf16.mxu0 0
        %856 = vmatmul.mubr.bf16.gmra.mrb[0].mxu0 %v618
        %v857 = vpop.f32.mrb[0].mxu0
        %v858 = vadd.f32 %v376, %v857
        %v859 = vpop.f32.mrb[0].mxu0
        %v860 = vpop.f32.mrb[0].mxu0
        %v861 = vadd.f32 %v376, %v860
        %v862 = vpop.f32.mrb[0].mxu0
        %863 = vmatprep.mubr.bf16.mxu0 0
        %864 = vmatmul.mubr.bf16.gmra.mrb[0].mxu0 %v621
        %v865 = vpop.f32.mrb[0].mxu0
        %v866 = vadd.f32 %v376, %v865
        %v867 = vpop.f32.mrb[0].mxu0
        %v868 = vpop.f32.mrb[0].mxu0
        %v869 = vadd.f32 %v376, %v868
        %v870 = vpop.f32.mrb[0].mxu0
        %871 = vmatprep.mubr.bf16.mxu0 0
        %872 = vmatmul.mubr.bf16.gmra.mrb[0].mxu0 %v624
        %v873 = vpop.f32.mrb[0].mxu0
        %v874 = vadd.f32 %v376, %v873
        %v875 = vpop.f32.mrb[0].mxu0
        %v876 = vpop.f32.mrb[0].mxu0
        %v877 = vadd.f32 %v376, %v876
        %v878 = vpop.f32.mrb[0].mxu0
        %879 = vmatprep.mubr.bf16.mxu0 0
        %880 = vmatmul.mubr.bf16.gmra.mrb[0].mxu0 %v627
        %v881 = vpop.f32.mrb[0].mxu0
        %v882 = vadd.f32 %v376, %v881
        %v883 = vpop.f32.mrb[0].mxu0
        %v884 = vpop.f32.mrb[0].mxu0
        %v885 = vadd.f32 %v376, %v884
        %v886 = vpop.f32.mrb[0].mxu0
        %887 = vmatprep.mubr.bf16.mxu0 0
        %888 = vmatmul.mubr.bf16.gmra.mrb[0].mxu0 %v630
        %v889 = vpop.f32.mrb[0].mxu0
        %v890 = vadd.f32 %v376, %v889
        %v891 = vpop.f32.mrb[0].mxu0
        %v892 = vpop.f32.mrb[0].mxu0
        %v893 = vadd.f32 %v376, %v892
        %v894 = vpop.f32.mrb[0].mxu0
        %895 = vmatprep.mubr.bf16.mxu0 0
        %896 = vmatmul.mubr.bf16.gmra.mrb[0].mxu0 %v633
        %v897 = vpop.f32.mrb[0].mxu0
        %v898 = vadd.f32 %v376, %v897
        %v899 = vpop.f32.mrb[0].mxu0
        %v900 = vpop.f32.mrb[0].mxu0
        %v901 = vadd.f32 %v376, %v900
        %v902 = vpop.f32.mrb[0].mxu0
        %903 = vmatprep.mubr.bf16.mxu0 0
        %904 = vmatmul.mubr.bf16.gmra.mrb[0].mxu0 %v636
        %v905 = vpop.f32.mrb[0].mxu0
        %v906 = vadd.f32 %v376, %v905
        %v907 = vpop.f32.mrb[0].mxu0
        %v908 = vpop.f32.mrb[0].mxu0
        %v909 = vadd.f32 %v376, %v908
        %v910 = vpop.f32.mrb[0].mxu0
        %911 = vmatprep.mubr.bf16.mxu0 0
        %912 = vmatmul.mubr.bf16.gmra.mrb[0].mxu0 %v639
        %v913 = vpop.f32.mrb[0].mxu0
        %v914 = vadd.f32 %v376, %v913
        %v915 = vpop.f32.mrb[0].mxu0
        %v916 = vpop.f32.mrb[0].mxu0
        %v917 = vadd.f32 %v376, %v916
        %v918 = vpop.f32.mrb[0].mxu0
        %919 = vmatprep.mubr.bf16.mxu0 0
        %920 = vmatmul.mubr.bf16.gmra.mrb[0].mxu0 %v642
        %v921 = vpop.f32.mrb[0].mxu0
        %v922 = vadd.f32 %v376, %v921
        %v923 = vpop.f32.mrb[0].mxu0
        %v924 = vpop.f32.mrb[0].mxu0
        %v925 = vadd.f32 %v376, %v924
        %v926 = vpop.f32.mrb[0].mxu0
        %927 = vmatprep.mubr.bf16.mxu0 0
        %928 = vmatmul.mubr.bf16.gmra.mrb[0].mxu0 %v645
        %v929 = vpop.f32.mrb[0].mxu0
        %v930 = vadd.f32 %v376, %v929
        %v931 = vpop.f32.mrb[0].mxu0
        %v932 = vpop.f32.mrb[0].mxu0
        %v933 = vadd.f32 %v376, %v932
        %v934 = vpop.f32.mrb[0].mxu0
        %935 = vdwg.mxu0
        %v936 = vmax.f32 %v682, 0.0
        %v937 = vmax.f32 %v685, 0.0
        %v938 = vmax.f32 %v690, 0.0
        %v939 = vmax.f32 %v693, 0.0
        %v940 = vmax.f32 %v698, 0.0
        %v941 = vmax.f32 %v701, 0.0
        %v942 = vmax.f32 %v706, 0.0
        %v943 = vmax.f32 %v709, 0.0
        %v944 = vmax.f32 %v714, 0.0
        %v945 = vmax.f32 %v717, 0.0
        %v946 = vmax.f32 %v722, 0.0
        %v947 = vmax.f32 %v725, 0.0
        %v948 = vmax.f32 %v730, 0.0
        %v949 = vmax.f32 %v733, 0.0
        %v950 = vmax.f32 %v738, 0.0
        %v951 = vmax.f32 %v741, 0.0
        %v952 = vmax.f32 %v746, 0.0
        %v953 = vmax.f32 %v749, 0.0
        %v954 = vmax.f32 %v754, 0.0
        %v955 = vmax.f32 %v757, 0.0
        %v956 = vmax.f32 %v762, 0.0
        %v957 = vmax.f32 %v765, 0.0
        %v958 = vmax.f32 %v770, 0.0
        %v959 = vmax.f32 %v773, 0.0
        %v960 = vmax.f32 %v778, 0.0
        %v961 = vmax.f32 %v781, 0.0
        %v962 = vmax.f32 %v786, 0.0
        %v963 = vmax.f32 %v789, 0.0
        %v964 = vmax.f32 %v794, 0.0
        %v965 = vmax.f32 %v797, 0.0
        %v966 = vmax.f32 %v802, 0.0
        %v967 = vmax.f32 %v805, 0.0
        %v968 = vmax.f32 %v810, 0.0
        %v969 = vmax.f32 %v813, 0.0
        %v970 = vmax.f32 %v818, 0.0
        %v971 = vmax.f32 %v821, 0.0
        %v972 = vmax.f32 %v826, 0.0
        %v973 = vmax.f32 %v829, 0.0
        %v974 = vmax.f32 %v834, 0.0
        %v975 = vmax.f32 %v837, 0.0
        %v976 = vmax.f32 %v842, 0.0
        %v977 = vmax.f32 %v845, 0.0
        %v978 = vmax.f32 %v850, 0.0
        %v979 = vmax.f32 %v853, 0.0
        %v980 = vmax.f32 %v858, 0.0
        %v981 = vmax.f32 %v861, 0.0
        %v982 = vmax.f32 %v866, 0.0
        %v983 = vmax.f32 %v869, 0.0
        %v984 = vmax.f32 %v874, 0.0
        %v985 = vmax.f32 %v877, 0.0
        %v986 = vmax.f32 %v882, 0.0
        %v987 = vmax.f32 %v885, 0.0
        %v988 = vmax.f32 %v890, 0.0
        %v989 = vmax.f32 %v893, 0.0
        %v990 = vmax.f32 %v898, 0.0
        %v991 = vmax.f32 %v901, 0.0
        %v992 = vmax.f32 %v906, 0.0
        %v993 = vmax.f32 %v909, 0.0
        %v994 = vmax.f32 %v914, 0.0
        %v995 = vmax.f32 %v917, 0.0
        %v996 = vmax.f32 %v922, 0.0
        %v997 = vmax.f32 %v925, 0.0
        %v998 = vmax.f32 %v930, 0.0
        %v999 = vmax.f32 %v933, 0.0
        %v1000 = vpack.c.bf16 %v937, %v936
        %v1001 = vpack.c.bf16 %v939, %v938
        %v1002 = vpack.c.bf16 %v941, %v940
        %v1003 = vpack.c.bf16 %v943, %v942
        %v1004 = vpack.c.bf16 %v945, %v944
        %v1005 = vpack.c.bf16 %v947, %v946
        %v1006 = vpack.c.bf16 %v949, %v948
        %v1007 = vpack.c.bf16 %v951, %v950
        %v1008 = vpack.c.bf16 %v953, %v952
        %v1009 = vpack.c.bf16 %v955, %v954
        %v1010 = vpack.c.bf16 %v957, %v956
        %v1011 = vpack.c.bf16 %v959, %v958
        %v1012 = vpack.c.bf16 %v961, %v960
        %v1013 = vpack.c.bf16 %v963, %v962
        %v1014 = vpack.c.bf16 %v965, %v964
        %v1015 = vpack.c.bf16 %v967, %v966
        %v1016 = vpack.c.bf16 %v969, %v968
        %v1017 = vpack.c.bf16 %v971, %v970
        %v1018 = vpack.c.bf16 %v973, %v972
        %v1019 = vpack.c.bf16 %v975, %v974
        %v1020 = vpack.c.bf16 %v977, %v976
        %v1021 = vpack.c.bf16 %v979, %v978
        %v1022 = vpack.c.bf16 %v981, %v980
        %v1023 = vpack.c.bf16 %v983, %v982
        %v1024 = vpack.c.bf16 %v985, %v984
        %v1025 = vpack.c.bf16 %v987, %v986
        %v1026 = vpack.c.bf16 %v989, %v988
        %v1027 = vpack.c.bf16 %v991, %v990
        %v1028 = vpack.c.bf16 %v993, %v992
        %v1029 = vpack.c.bf16 %v995, %v994
        %v1030 = vpack.c.bf16 %v997, %v996
        %v1031 = vpack.c.bf16 %v999, %v998
        %v1032 = vld [vmem:[%s3] sm:$0xf]
        %v1033 = vld [vmem:[%s3 + $0x4] sm:$0xf]
        %v1034 = vld [vmem:[%s3 + $0x8] sm:$0xf]
        %v1035 = vld [vmem:[%s3 + $0xc] sm:$0xf]
        %v1036 = vld [vmem:[%s3 + $0x10] sm:$0xf]
        %v1037 = vld [vmem:[%s3 + $0x14] sm:$0xf]
        %v1038 = vld [vmem:[%s3 + $0x18] sm:$0xf]
        %v1039 = vld [vmem:[%s3 + $0x1c] sm:$0xf]
        %v1040 = vld [vmem:[%s4] sm:$0x1]
        %v1042 = vlaneseq
        %v1043 = vshrl.u32 %v1042, 7
        %v1044 = vsub.s32 0, %v1043
        %v1045 = vrot.slane %v1040, %v1044
        %v1055 = vunpack.c.l.b16 %v1032
        %v1056 = vunpack.c.l.b16 %v1033
        %v1057 = vunpack.c.l.b16 %v1034
        %v1058 = vunpack.c.l.b16 %v1035
        %v1059 = vunpack.c.l.b16 %v1036
        %v1060 = vunpack.c.l.b16 %v1037
        %v1061 = vunpack.c.l.b16 %v1038
        %v1062 = vunpack.c.l.b16 %v1039
        %v1063 = vpack.c.b16 %v1056, %v1055
        %v1064 = vpack.c.b16 %v1058, %v1057
        %v1065 = vpack.c.b16 %v1060, %v1059
        %v1066 = vpack.c.b16 %v1062, %v1061
        %vm1071 = vcmask 523264
        %v1073 = vsel %vm1071, %v1000, 0
        %v1076 = vsel %vm1071, %v1001, 0
        %v1079 = vsel %vm1071, %v1002, 0
        %v1082 = vsel %vm1071, %v1003, 0
        %v1085 = vsel %vm1071, %v1004, 0
        %v1088 = vsel %vm1071, %v1005, 0
        %v1091 = vsel %vm1071, %v1006, 0
        %v1094 = vsel %vm1071, %v1007, 0
        %v1097 = vsel %vm1071, %v1008, 0
        %v1100 = vsel %vm1071, %v1009, 0
        %v1103 = vsel %vm1071, %v1010, 0
        %v1106 = vsel %vm1071, %v1011, 0
        %v1109 = vsel %vm1071, %v1012, 0
        %v1112 = vsel %vm1071, %v1013, 0
        %v1115 = vsel %vm1071, %v1014, 0
        %v1118 = vsel %vm1071, %v1015, 0
        %v1121 = vsel %vm1071, %v1016, 0
        %v1124 = vsel %vm1071, %v1017, 0
        %v1127 = vsel %vm1071, %v1018, 0
        %v1130 = vsel %vm1071, %v1019, 0
        %v1133 = vsel %vm1071, %v1020, 0
        %v1136 = vsel %vm1071, %v1021, 0
        %v1139 = vsel %vm1071, %v1022, 0
        %v1142 = vsel %vm1071, %v1023, 0
        %v1145 = vsel %vm1071, %v1024, 0
        %v1148 = vsel %vm1071, %v1025, 0
        %v1151 = vsel %vm1071, %v1026, 0
        %v1154 = vsel %vm1071, %v1027, 0
        %v1157 = vsel %vm1071, %v1028, 0
        %v1160 = vsel %vm1071, %v1029, 0
        %v1163 = vsel %vm1071, %v1030, 0
        %v1166 = vsel %vm1071, %v1031, 0
        %1168 = vmatprep.subr.bf16.mxu0 0
        %1169 = vmatpush1.bf16.msra.mxu0 %v1063
        %1170 = vmatprep.subr.bf16.mxu0 0
        %1171 = vmatpush1.bf16.msra.mxu0 %v1064
        %1172 = vmatprep.subr.bf16.mxu0 0
        %1173 = vmatpush1.bf16.msra.mxu0 %v1065
        %1174 = vmatprep.subr.bf16.mxu0 0
        %1175 = vmatpush1.bf16.msra.mxu0 %v1066
        %1176 = vmatprep.subr.bf16.mxu0 0
        %1177 = vmatpush1.bf16.msra.mxu0 0
        %1178 = vmatprep.subr.bf16.mxu0 0
        %1179 = vmatpush1.bf16.msra.mxu0 0
        %1180 = vmatprep.subr.bf16.mxu0 0
        %1181 = vmatpush1.bf16.msra.mxu0 0
        %1182 = vmatprep.subr.bf16.mxu0 0
        %1183 = vmatpush1.bf16.msra.mxu0 0
        %1184 = vmatprep.subr.bf16.mxu0 0
        %1185 = vmatpush1.bf16.msra.mxu0 0
        %1186 = vmatprep.subr.bf16.mxu0 0
        %1187 = vmatpush1.bf16.msra.mxu0 0
        %1188 = vmatprep.subr.bf16.mxu0 0
        %1189 = vmatpush1.bf16.msra.mxu0 0
        %1190 = vmatprep.subr.bf16.mxu0 0
        %1191 = vmatpush1.bf16.msra.mxu0 0
        %1192 = vmatprep.subr.bf16.mxu0 0
        %1193 = vmatpush1.bf16.msra.mxu0 0
        %1194 = vmatprep.subr.bf16.mxu0 0
        %1195 = vmatpush1.bf16.msra.mxu0 0
        %1196 = vmatprep.subr.bf16.mxu0 0
        %1197 = vmatpush1.bf16.msra.mxu0 0
        %1198 = vmatprep.subr.bf16.mxu0 0
        %1199 = vmatpush1.bf16.msra.mxu0 0
        %1200 = vmatprep.mubr.bf16.mxu0 0
        %1201 = vmatmul.mubr.bf16.gmra.mrb[0].mxu0 %v1073
        %v1202 = vpop.f32.mrb[0].mxu0
        %v1203 = vadd.f32 %v1045, %v1202
        %v1204 = vpop.f32.mrb[0].mxu0
        %v1205 = vpop.f32.mrb[0].mxu0
        %v1206 = vadd.f32 %v1045, %v1205
        %v1207 = vpop.f32.mrb[0].mxu0
        %1208 = vmatprep.mubr.bf16.mxu0 0
        %1209 = vmatmul.mubr.bf16.gmra.mrb[0].mxu0 %v1076
        %v1210 = vpop.f32.mrb[0].mxu0
        %v1211 = vadd.f32 %v1045, %v1210
        %v1212 = vpop.f32.mrb[0].mxu0
        %v1213 = vpop.f32.mrb[0].mxu0
        %v1214 = vadd.f32 %v1045, %v1213
        %v1215 = vpop.f32.mrb[0].mxu0
        %1216 = vmatprep.mubr.bf16.mxu0 0
        %1217 = vmatmul.mubr.bf16.gmra.mrb[0].mxu0 %v1079
        %v1218 = vpop.f32.mrb[0].mxu0
        %v1219 = vadd.f32 %v1045, %v1218
        %v1220 = vpop.f32.mrb[0].mxu0
        %v1221 = vpop.f32.mrb[0].mxu0
        %v1222 = vadd.f32 %v1045, %v1221
        %v1223 = vpop.f32.mrb[0].mxu0
        %1224 = vmatprep.mubr.bf16.mxu0 0
        %1225 = vmatmul.mubr.bf16.gmra.mrb[0].mxu0 %v1082
        %v1226 = vpop.f32.mrb[0].mxu0
        %v1227 = vadd.f32 %v1045, %v1226
        %v1228 = vpop.f32.mrb[0].mxu0
        %v1229 = vpop.f32.mrb[0].mxu0
        %v1230 = vadd.f32 %v1045, %v1229
        %v1231 = vpop.f32.mrb[0].mxu0
        %1232 = vmatprep.mubr.bf16.mxu0 0
        %1233 = vmatmul.mubr.bf16.gmra.mrb[0].mxu0 %v1085
        %v1234 = vpop.f32.mrb[0].mxu0
        %v1235 = vadd.f32 %v1045, %v1234
        %v1236 = vpop.f32.mrb[0].mxu0
        %v1237 = vpop.f32.mrb[0].mxu0
        %v1238 = vadd.f32 %v1045, %v1237
        %v1239 = vpop.f32.mrb[0].mxu0
        %1240 = vmatprep.mubr.bf16.mxu0 0
        %1241 = vmatmul.mubr.bf16.gmra.mrb[0].mxu0 %v1088
        %v1242 = vpop.f32.mrb[0].mxu0
        %v1243 = vadd.f32 %v1045, %v1242
        %v1244 = vpop.f32.mrb[0].mxu0
        %v1245 = vpop.f32.mrb[0].mxu0
        %v1246 = vadd.f32 %v1045, %v1245
        %v1247 = vpop.f32.mrb[0].mxu0
        %1248 = vmatprep.mubr.bf16.mxu0 0
        %1249 = vmatmul.mubr.bf16.gmra.mrb[0].mxu0 %v1091
        %v1250 = vpop.f32.mrb[0].mxu0
        %v1251 = vadd.f32 %v1045, %v1250
        %v1252 = vpop.f32.mrb[0].mxu0
        %v1253 = vpop.f32.mrb[0].mxu0
        %v1254 = vadd.f32 %v1045, %v1253
        %v1255 = vpop.f32.mrb[0].mxu0
        %1256 = vmatprep.mubr.bf16.mxu0 0
        %1257 = vmatmul.mubr.bf16.gmra.mrb[0].mxu0 %v1094
        %v1258 = vpop.f32.mrb[0].mxu0
        %v1259 = vadd.f32 %v1045, %v1258
        %v1260 = vpop.f32.mrb[0].mxu0
        %v1261 = vpop.f32.mrb[0].mxu0
        %v1262 = vadd.f32 %v1045, %v1261
        %v1263 = vpop.f32.mrb[0].mxu0
        %1264 = vmatprep.mubr.bf16.mxu0 0
        %1265 = vmatmul.mubr.bf16.gmra.mrb[0].mxu0 %v1097
        %v1266 = vpop.f32.mrb[0].mxu0
        %v1267 = vadd.f32 %v1045, %v1266
        %v1268 = vpop.f32.mrb[0].mxu0
        %v1269 = vpop.f32.mrb[0].mxu0
        %v1270 = vadd.f32 %v1045, %v1269
        %v1271 = vpop.f32.mrb[0].mxu0
        %1272 = vmatprep.mubr.bf16.mxu0 0
        %1273 = vmatmul.mubr.bf16.gmra.mrb[0].mxu0 %v1100
        %v1274 = vpop.f32.mrb[0].mxu0
        %v1275 = vadd.f32 %v1045, %v1274
        %v1276 = vpop.f32.mrb[0].mxu0
        %v1277 = vpop.f32.mrb[0].mxu0
        %v1278 = vadd.f32 %v1045, %v1277
        %v1279 = vpop.f32.mrb[0].mxu0
        %1280 = vmatprep.mubr.bf16.mxu0 0
        %1281 = vmatmul.mubr.bf16.gmra.mrb[0].mxu0 %v1103
        %v1282 = vpop.f32.mrb[0].mxu0
        %v1283 = vadd.f32 %v1045, %v1282
        %v1284 = vpop.f32.mrb[0].mxu0
        %v1285 = vpop.f32.mrb[0].mxu0
        %v1286 = vadd.f32 %v1045, %v1285
        %v1287 = vpop.f32.mrb[0].mxu0
        %1288 = vmatprep.mubr.bf16.mxu0 0
        %1289 = vmatmul.mubr.bf16.gmra.mrb[0].mxu0 %v1106
        %v1290 = vpop.f32.mrb[0].mxu0
        %v1291 = vadd.f32 %v1045, %v1290
        %v1292 = vpop.f32.mrb[0].mxu0
        %v1293 = vpop.f32.mrb[0].mxu0
        %v1294 = vadd.f32 %v1045, %v1293
        %v1295 = vpop.f32.mrb[0].mxu0
        %1296 = vmatprep.mubr.bf16.mxu0 0
        %1297 = vmatmul.mubr.bf16.gmra.mrb[0].mxu0 %v1109
        %v1298 = vpop.f32.mrb[0].mxu0
        %v1299 = vadd.f32 %v1045, %v1298
        %v1300 = vpop.f32.mrb[0].mxu0
        %v1301 = vpop.f32.mrb[0].mxu0
        %v1302 = vadd.f32 %v1045, %v1301
        %v1303 = vpop.f32.mrb[0].mxu0
        %1304 = vmatprep.mubr.bf16.mxu0 0
        %1305 = vmatmul.mubr.bf16.gmra.mrb[0].mxu0 %v1112
        %v1306 = vpop.f32.mrb[0].mxu0
        %v1307 = vadd.f32 %v1045, %v1306
        %v1308 = vpop.f32.mrb[0].mxu0
        %v1309 = vpop.f32.mrb[0].mxu0
        %v1310 = vadd.f32 %v1045, %v1309
        %v1311 = vpop.f32.mrb[0].mxu0
        %1312 = vmatprep.mubr.bf16.mxu0 0
        %1313 = vmatmul.mubr.bf16.gmra.mrb[0].mxu0 %v1115
        %v1314 = vpop.f32.mrb[0].mxu0
        %v1315 = vadd.f32 %v1045, %v1314
        %v1316 = vpop.f32.mrb[0].mxu0
        %v1317 = vpop.f32.mrb[0].mxu0
        %v1318 = vadd.f32 %v1045, %v1317
        %v1319 = vpop.f32.mrb[0].mxu0
        %1320 = vmatprep.mubr.bf16.mxu0 0
        %1321 = vmatmul.mubr.bf16.gmra.mrb[0].mxu0 %v1118
        %v1322 = vpop.f32.mrb[0].mxu0
        %v1323 = vadd.f32 %v1045, %v1322
        %v1324 = vpop.f32.mrb[0].mxu0
        %v1325 = vpop.f32.mrb[0].mxu0
        %v1326 = vadd.f32 %v1045, %v1325
        %v1327 = vpop.f32.mrb[0].mxu0
        %1328 = vmatprep.mubr.bf16.mxu0 0
        %1329 = vmatmul.mubr.bf16.gmra.mrb[0].mxu0 %v1121
        %v1330 = vpop.f32.mrb[0].mxu0
        %v1331 = vadd.f32 %v1045, %v1330
        %v1332 = vpop.f32.mrb[0].mxu0
        %v1333 = vpop.f32.mrb[0].mxu0
        %v1334 = vadd.f32 %v1045, %v1333
        %v1335 = vpop.f32.mrb[0].mxu0
        %1336 = vmatprep.mubr.bf16.mxu0 0
        %1337 = vmatmul.mubr.bf16.gmra.mrb[0].mxu0 %v1124
        %v1338 = vpop.f32.mrb[0].mxu0
        %v1339 = vadd.f32 %v1045, %v1338
        %v1340 = vpop.f32.mrb[0].mxu0
        %v1341 = vpop.f32.mrb[0].mxu0
        %v1342 = vadd.f32 %v1045, %v1341
        %v1343 = vpop.f32.mrb[0].mxu0
        %1344 = vmatprep.mubr.bf16.mxu0 0
        %1345 = vmatmul.mubr.bf16.gmra.mrb[0].mxu0 %v1127
        %v1346 = vpop.f32.mrb[0].mxu0
        %v1347 = vadd.f32 %v1045, %v1346
        %v1348 = vpop.f32.mrb[0].mxu0
        %v1349 = vpop.f32.mrb[0].mxu0
        %v1350 = vadd.f32 %v1045, %v1349
        %v1351 = vpop.f32.mrb[0].mxu0
        %1352 = vmatprep.mubr.bf16.mxu0 0
        %1353 = vmatmul.mubr.bf16.gmra.mrb[0].mxu0 %v1130
        %v1354 = vpop.f32.mrb[0].mxu0
        %v1355 = vadd.f32 %v1045, %v1354
        %v1356 = vpop.f32.mrb[0].mxu0
        %v1357 = vpop.f32.mrb[0].mxu0
        %v1358 = vadd.f32 %v1045, %v1357
        %v1359 = vpop.f32.mrb[0].mxu0
        %1360 = vmatprep.mubr.bf16.mxu0 0
        %1361 = vmatmul.mubr.bf16.gmra.mrb[0].mxu0 %v1133
        %v1362 = vpop.f32.mrb[0].mxu0
        %v1363 = vadd.f32 %v1045, %v1362
        %v1364 = vpop.f32.mrb[0].mxu0
        %v1365 = vpop.f32.mrb[0].mxu0
        %v1366 = vadd.f32 %v1045, %v1365
        %v1367 = vpop.f32.mrb[0].mxu0
        %1368 = vmatprep.mubr.bf16.mxu0 0
        %1369 = vmatmul.mubr.bf16.gmra.mrb[0].mxu0 %v1136
        %v1370 = vpop.f32.mrb[0].mxu0
        %v1371 = vadd.f32 %v1045, %v1370
        %v1372 = vpop.f32.mrb[0].mxu0
        %v1373 = vpop.f32.mrb[0].mxu0
        %v1374 = vadd.f32 %v1045, %v1373
        %v1375 = vpop.f32.mrb[0].mxu0
        %1376 = vmatprep.mubr.bf16.mxu0 0
        %1377 = vmatmul.mubr.bf16.gmra.mrb[0].mxu0 %v1139
        %v1378 = vpop.f32.mrb[0].mxu0
        %v1379 = vadd.f32 %v1045, %v1378
        %v1380 = vpop.f32.mrb[0].mxu0
        %v1381 = vpop.f32.mrb[0].mxu0
        %v1382 = vadd.f32 %v1045, %v1381
        %v1383 = vpop.f32.mrb[0].mxu0
        %1384 = vmatprep.mubr.bf16.mxu0 0
        %1385 = vmatmul.mubr.bf16.gmra.mrb[0].mxu0 %v1142
        %v1386 = vpop.f32.mrb[0].mxu0
        %v1387 = vadd.f32 %v1045, %v1386
        %v1388 = vpop.f32.mrb[0].mxu0
        %v1389 = vpop.f32.mrb[0].mxu0
        %v1390 = vadd.f32 %v1045, %v1389
        %v1391 = vpop.f32.mrb[0].mxu0
        %1392 = vmatprep.mubr.bf16.mxu0 0
        %1393 = vmatmul.mubr.bf16.gmra.mrb[0].mxu0 %v1145
        %v1394 = vpop.f32.mrb[0].mxu0
        %v1395 = vadd.f32 %v1045, %v1394
        %v1396 = vpop.f32.mrb[0].mxu0
        %v1397 = vpop.f32.mrb[0].mxu0
        %v1398 = vadd.f32 %v1045, %v1397
        %v1399 = vpop.f32.mrb[0].mxu0
        %1400 = vmatprep.mubr.bf16.mxu0 0
        %1401 = vmatmul.mubr.bf16.gmra.mrb[0].mxu0 %v1148
        %v1402 = vpop.f32.mrb[0].mxu0
        %v1403 = vadd.f32 %v1045, %v1402
        %v1404 = vpop.f32.mrb[0].mxu0
        %v1405 = vpop.f32.mrb[0].mxu0
        %v1406 = vadd.f32 %v1045, %v1405
        %v1407 = vpop.f32.mrb[0].mxu0
        %1408 = vmatprep.mubr.bf16.mxu0 0
        %1409 = vmatmul.mubr.bf16.gmra.mrb[0].mxu0 %v1151
        %v1410 = vpop.f32.mrb[0].mxu0
        %v1411 = vadd.f32 %v1045, %v1410
        %v1412 = vpop.f32.mrb[0].mxu0
        %v1413 = vpop.f32.mrb[0].mxu0
        %v1414 = vadd.f32 %v1045, %v1413
        %v1415 = vpop.f32.mrb[0].mxu0
        %1416 = vmatprep.mubr.bf16.mxu0 0
        %1417 = vmatmul.mubr.bf16.gmra.mrb[0].mxu0 %v1154
        %v1418 = vpop.f32.mrb[0].mxu0
        %v1419 = vadd.f32 %v1045, %v1418
        %v1420 = vpop.f32.mrb[0].mxu0
        %v1421 = vpop.f32.mrb[0].mxu0
        %v1422 = vadd.f32 %v1045, %v1421
        %v1423 = vpop.f32.mrb[0].mxu0
        %1424 = vmatprep.mubr.bf16.mxu0 0
        %1425 = vmatmul.mubr.bf16.gmra.mrb[0].mxu0 %v1157
        %v1426 = vpop.f32.mrb[0].mxu0
        %v1427 = vadd.f32 %v1045, %v1426
        %v1428 = vpop.f32.mrb[0].mxu0
        %v1429 = vpop.f32.mrb[0].mxu0
        %v1430 = vadd.f32 %v1045, %v1429
        %v1431 = vpop.f32.mrb[0].mxu0
        %1432 = vmatprep.mubr.bf16.mxu0 0
        %1433 = vmatmul.mubr.bf16.gmra.mrb[0].mxu0 %v1160
        %v1434 = vpop.f32.mrb[0].mxu0
        %v1435 = vadd.f32 %v1045, %v1434
        %v1436 = vpop.f32.mrb[0].mxu0
        %v1437 = vpop.f32.mrb[0].mxu0
        %v1438 = vadd.f32 %v1045, %v1437
        %v1439 = vpop.f32.mrb[0].mxu0
        %1440 = vmatprep.mubr.bf16.mxu0 0
        %1441 = vmatmul.mubr.bf16.gmra.mrb[0].mxu0 %v1163
        %v1442 = vpop.f32.mrb[0].mxu0
        %v1443 = vadd.f32 %v1045, %v1442
        %v1444 = vpop.f32.mrb[0].mxu0
        %v1445 = vpop.f32.mrb[0].mxu0
        %v1446 = vadd.f32 %v1045, %v1445
        %v1447 = vpop.f32.mrb[0].mxu0
        %1448 = vmatprep.mubr.bf16.mxu0 0
        %1449 = vmatmul.mubr.bf16.gmra.mrb[0].mxu0 %v1166
        %v1450 = vpop.f32.mrb[0].mxu0
        %v1451 = vadd.f32 %v1045, %v1450
        %v1452 = vpop.f32.mrb[0].mxu0
        %v1453 = vpop.f32.mrb[0].mxu0
        %v1454 = vadd.f32 %v1045, %v1453
        %v1455 = vpop.f32.mrb[0].mxu0
        %1456 = vdwg.mxu0
        %v1457 = vmax.f32 %v1203, 0.0
        %v1458 = vmax.f32 %v1206, 0.0
        %v1459 = vmax.f32 %v1211, 0.0
        %v1460 = vmax.f32 %v1214, 0.0
        %v1461 = vmax.f32 %v1219, 0.0
        %v1462 = vmax.f32 %v1222, 0.0
        %v1463 = vmax.f32 %v1227, 0.0
        %v1464 = vmax.f32 %v1230, 0.0
        %v1465 = vmax.f32 %v1235, 0.0
        %v1466 = vmax.f32 %v1238, 0.0
        %v1467 = vmax.f32 %v1243, 0.0
        %v1468 = vmax.f32 %v1246, 0.0
        %v1469 = vmax.f32 %v1251, 0.0
        %v1470 = vmax.f32 %v1254, 0.0
        %v1471 = vmax.f32 %v1259, 0.0
        %v1472 = vmax.f32 %v1262, 0.0
        %v1473 = vmax.f32 %v1267, 0.0
        %v1474 = vmax.f32 %v1270, 0.0
        %v1475 = vmax.f32 %v1275, 0.0
        %v1476 = vmax.f32 %v1278, 0.0
        %v1477 = vmax.f32 %v1283, 0.0
        %v1478 = vmax.f32 %v1286, 0.0
        %v1479 = vmax.f32 %v1291, 0.0
        %v1480 = vmax.f32 %v1294, 0.0
        %v1481 = vmax.f32 %v1299, 0.0
        %v1482 = vmax.f32 %v1302, 0.0
        %v1483 = vmax.f32 %v1307, 0.0
        %v1484 = vmax.f32 %v1310, 0.0
        %v1485 = vmax.f32 %v1315, 0.0
        %v1486 = vmax.f32 %v1318, 0.0
        %v1487 = vmax.f32 %v1323, 0.0
        %v1488 = vmax.f32 %v1326, 0.0
        %v1489 = vmax.f32 %v1331, 0.0
        %v1490 = vmax.f32 %v1334, 0.0
        %v1491 = vmax.f32 %v1339, 0.0
        %v1492 = vmax.f32 %v1342, 0.0
        %v1493 = vmax.f32 %v1347, 0.0
        %v1494 = vmax.f32 %v1350, 0.0
        %v1495 = vmax.f32 %v1355, 0.0
        %v1496 = vmax.f32 %v1358, 0.0
        %v1497 = vmax.f32 %v1363, 0.0
        %v1498 = vmax.f32 %v1366, 0.0
        %v1499 = vmax.f32 %v1371, 0.0
        %v1500 = vmax.f32 %v1374, 0.0
        %v1501 = vmax.f32 %v1379, 0.0
        %v1502 = vmax.f32 %v1382, 0.0
        %v1503 = vmax.f32 %v1387, 0.0
        %v1504 = vmax.f32 %v1390, 0.0
        %v1505 = vmax.f32 %v1395, 0.0
        %v1506 = vmax.f32 %v1398, 0.0
        %v1507 = vmax.f32 %v1403, 0.0
        %v1508 = vmax.f32 %v1406, 0.0
        %v1509 = vmax.f32 %v1411, 0.0
        %v1510 = vmax.f32 %v1414, 0.0
        %v1511 = vmax.f32 %v1419, 0.0
        %v1512 = vmax.f32 %v1422, 0.0
        %v1513 = vmax.f32 %v1427, 0.0
        %v1514 = vmax.f32 %v1430, 0.0
        %v1515 = vmax.f32 %v1435, 0.0
        %v1516 = vmax.f32 %v1438, 0.0
        %v1517 = vmax.f32 %v1443, 0.0
        %v1518 = vmax.f32 %v1446, 0.0
        %v1519 = vmax.f32 %v1451, 0.0
        %v1520 = vmax.f32 %v1454, 0.0
        %v1521 = vpack.c.bf16 %v1458, %v1457
        %v1522 = vpack.c.bf16 %v1460, %v1459
        %v1523 = vpack.c.bf16 %v1462, %v1461
        %v1524 = vpack.c.bf16 %v1464, %v1463
        %v1525 = vpack.c.bf16 %v1466, %v1465
        %v1526 = vpack.c.bf16 %v1468, %v1467
        %v1527 = vpack.c.bf16 %v1470, %v1469
        %v1528 = vpack.c.bf16 %v1472, %v1471
        %v1529 = vpack.c.bf16 %v1474, %v1473
        %v1530 = vpack.c.bf16 %v1476, %v1475
        %v1531 = vpack.c.bf16 %v1478, %v1477
        %v1532 = vpack.c.bf16 %v1480, %v1479
        %v1533 = vpack.c.bf16 %v1482, %v1481
        %v1534 = vpack.c.bf16 %v1484, %v1483
        %v1535 = vpack.c.bf16 %v1486, %v1485
        %v1536 = vpack.c.bf16 %v1488, %v1487
        %v1537 = vpack.c.bf16 %v1490, %v1489
        %v1538 = vpack.c.bf16 %v1492, %v1491
        %v1539 = vpack.c.bf16 %v1494, %v1493
        %v1540 = vpack.c.bf16 %v1496, %v1495
        %v1541 = vpack.c.bf16 %v1498, %v1497
        %v1542 = vpack.c.bf16 %v1500, %v1499
        %v1543 = vpack.c.bf16 %v1502, %v1501
        %v1544 = vpack.c.bf16 %v1504, %v1503
        %v1545 = vpack.c.bf16 %v1506, %v1505
        %v1546 = vpack.c.bf16 %v1508, %v1507
        %v1547 = vpack.c.bf16 %v1510, %v1509
        %v1548 = vpack.c.bf16 %v1512, %v1511
        %v1549 = vpack.c.bf16 %v1514, %v1513
        %v1550 = vpack.c.bf16 %v1516, %v1515
        %v1551 = vpack.c.bf16 %v1518, %v1517
        %v1552 = vpack.c.bf16 %v1520, %v1519
        %v1553 = vld [vmem:[%s5] sm:$0xf]
        %v1555 = vsel %vm1071, %v1553, 0
        %v1558 = vsel %vm1071, %v1521, 0
        %v1561 = vsel %vm1071, %v1522, 0
        %v1564 = vsel %vm1071, %v1523, 0
        %v1567 = vsel %vm1071, %v1524, 0
        %v1570 = vsel %vm1071, %v1525, 0
        %v1573 = vsel %vm1071, %v1526, 0
        %v1576 = vsel %vm1071, %v1527, 0
        %v1579 = vsel %vm1071, %v1528, 0
        %v1582 = vsel %vm1071, %v1529, 0
        %v1585 = vsel %vm1071, %v1530, 0
        %v1588 = vsel %vm1071, %v1531, 0
        %v1591 = vsel %vm1071, %v1532, 0
        %v1594 = vsel %vm1071, %v1533, 0
        %v1597 = vsel %vm1071, %v1534, 0
        %v1600 = vsel %vm1071, %v1535, 0
        %v1603 = vsel %vm1071, %v1536, 0
        %v1606 = vsel %vm1071, %v1537, 0
        %v1609 = vsel %vm1071, %v1538, 0
        %v1612 = vsel %vm1071, %v1539, 0
        %v1615 = vsel %vm1071, %v1540, 0
        %v1618 = vsel %vm1071, %v1541, 0
        %v1621 = vsel %vm1071, %v1542, 0
        %v1624 = vsel %vm1071, %v1543, 0
        %v1627 = vsel %vm1071, %v1544, 0
        %v1630 = vsel %vm1071, %v1545, 0
        %v1633 = vsel %vm1071, %v1546, 0
        %v1636 = vsel %vm1071, %v1547, 0
        %v1639 = vsel %vm1071, %v1548, 0
        %v1642 = vsel %vm1071, %v1549, 0
        %v1645 = vsel %vm1071, %v1550, 0
        %v1648 = vsel %vm1071, %v1551, 0
        %v1651 = vsel %vm1071, %v1552, 0
        %1653 = vmatprep.subr.bf16.mxu0 0
        %1654 = vmatpush1.bf16.xpose.msra.mxu0 %v1558
        %1655 = vmatprep.subr.bf16.mxu0 0
        %1656 = vmatpush1.bf16.xpose.msra.mxu0 %v1561
        %1657 = vmatprep.subr.bf16.mxu0 0
        %1658 = vmatpush1.bf16.xpose.msra.mxu0 %v1564
        %1659 = vmatprep.subr.bf16.mxu0 0
        %1660 = vmatpush1.bf16.xpose.msra.mxu0 %v1567
        %1661 = vmatprep.subr.bf16.mxu0 0
        %1662 = vmatpush1.bf16.xpose.msra.mxu0 %v1570
        %1663 = vmatprep.subr.bf16.mxu0 0
        %1664 = vmatpush1.bf16.xpose.msra.mxu0 %v1573
        %1665 = vmatprep.subr.bf16.mxu0 0
        %1666 = vmatpush1.bf16.xpose.msra.mxu0 %v1576
        %1667 = vmatprep.subr.bf16.mxu0 0
        %1668 = vmatpush1.bf16.xpose.msra.mxu0 %v1579
        %1669 = vmatprep.subr.bf16.mxu0 0
        %1670 = vmatpush1.bf16.xpose.msra.mxu0 %v1582
        %1671 = vmatprep.subr.bf16.mxu0 0
        %1672 = vmatpush1.bf16.xpose.msra.mxu0 %v1585
        %1673 = vmatprep.subr.bf16.mxu0 0
        %1674 = vmatpush1.bf16.xpose.msra.mxu0 %v1588
        %1675 = vmatprep.subr.bf16.mxu0 0
        %1676 = vmatpush1.bf16.xpose.msra.mxu0 %v1591
        %1677 = vmatprep.subr.bf16.mxu0 0
        %1678 = vmatpush1.bf16.xpose.msra.mxu0 %v1594
        %1679 = vmatprep.subr.bf16.mxu0 0
        %1680 = vmatpush1.bf16.xpose.msra.mxu0 %v1597
        %1681 = vmatprep.subr.bf16.mxu0 0
        %1682 = vmatpush1.bf16.xpose.msra.mxu0 %v1600
        %1683 = vmatprep.subr.bf16.mxu0 0
        %1684 = vmatpush1.bf16.xpose.msra.mxu0 %v1603
        %1685 = vmatprep.mubr.bf16.mxu0 0
        %1686 = vmatmul.mubr.bf16.gmra.mrb[0].mxu0 %v1555
        %v1687 = vpop.f32.mrb[0].mxu0
        %v1688 = vadd.f32 0.0, %v1687
        %v1689 = vpop.f32.mrb[0].mxu0
        %v1690 = vadd.f32 0.0, %v1689
        %v1691 = vpop.f32.mrb[0].mxu0
        %v1692 = vpop.f32.mrb[0].mxu0
        %1693 = vdwg.mxu0
        %1694 = vmatprep.subr.bf16.mxu0 0
        %1695 = vmatpush1.bf16.xpose.msra.mxu0 %v1606
        %1696 = vmatprep.subr.bf16.mxu0 0
        %1697 = vmatpush1.bf16.xpose.msra.mxu0 %v1609
        %1698 = vmatprep.subr.bf16.mxu0 0
        %1699 = vmatpush1.bf16.xpose.msra.mxu0 %v1612
        %1700 = vmatprep.subr.bf16.mxu0 0
        %1701 = vmatpush1.bf16.xpose.msra.mxu0 %v1615
        %1702 = vmatprep.subr.bf16.mxu0 0
        %1703 = vmatpush1.bf16.xpose.msra.mxu0 %v1618
        %1704 = vmatprep.subr.bf16.mxu0 0
        %1705 = vmatpush1.bf16.xpose.msra.mxu0 %v1621
        %1706 = vmatprep.subr.bf16.mxu0 0
        %1707 = vmatpush1.bf16.xpose.msra.mxu0 %v1624
        %1708 = vmatprep.subr.bf16.mxu0 0
        %1709 = vmatpush1.bf16.xpose.msra.mxu0 %v1627
        %1710 = vmatprep.subr.bf16.mxu0 0
        %1711 = vmatpush1.bf16.xpose.msra.mxu0 %v1630
        %1712 = vmatprep.subr.bf16.mxu0 0
        %1713 = vmatpush1.bf16.xpose.msra.mxu0 %v1633
        %1714 = vmatprep.subr.bf16.mxu0 0
        %1715 = vmatpush1.bf16.xpose.msra.mxu0 %v1636
        %1716 = vmatprep.subr.bf16.mxu0 0
        %1717 = vmatpush1.bf16.xpose.msra.mxu0 %v1639
        %1718 = vmatprep.subr.bf16.mxu0 0
        %1719 = vmatpush1.bf16.xpose.msra.mxu0 %v1642
        %1720 = vmatprep.subr.bf16.mxu0 0
        %1721 = vmatpush1.bf16.xpose.msra.mxu0 %v1645
        %1722 = vmatprep.subr.bf16.mxu0 0
        %1723 = vmatpush1.bf16.xpose.msra.mxu0 %v1648
        %1724 = vmatprep.subr.bf16.mxu0 0
        %1725 = vmatpush1.bf16.xpose.msra.mxu0 %v1651
        %1726 = vmatprep.mubr.bf16.mxu0 0
        %1727 = vmatmul.mubr.bf16.gmra.mrb[0].mxu0 %v1555
        %v1728 = vpop.f32.mrb[0].mxu0
        %v1729 = vadd.f32 0.0, %v1728
        %v1730 = vpop.f32.mrb[0].mxu0
        %v1731 = vadd.f32 0.0, %v1730
        %v1732 = vpop.f32.mrb[0].mxu0
        %v1733 = vpop.f32.mrb[0].mxu0
        %1734 = vdwg.mxu0
        %v1735 = vld [vmem:[#allocation2] sm:$0x1]
        %1737 = vset.pattern.permute.xlu0 0
        %1738 = vperm.xlu0 %1737, %v1735
        %v1739 = vpop.permute.xlu0 %1738
        %v1741 = vlaneseq
        %v1742 = vshrl.u32 %v1741, 7
        %v1743 = vsub.s32 0, %v1742
        %v1744 = vrot.slane %v1739, %v1743
        %v1745 = vadd.f32 %v1688, %v1744
        %v1746 = vadd.f32 %v1690, %v1744
        %v1747 = vadd.f32 %v1729, %v1744
        %v1748 = vadd.f32 %v1731, %v1744
        %v1749 = vxor.u32 %v1745, 2147483648
        %v1750 = vxor.u32 %v1746, 2147483648
        %v1751 = vxor.u32 %v1747, 2147483648
        %v1752 = vxor.u32 %v1748, 2147483648
        %v1753 = vmul.f32 %v1749, 1.442695
        %v1754 = vpow.pop %v1753
        %v1755 = vmul.f32 %v1750, 1.442695
        %v1756 = vpow.pop %v1755
        %v1757 = vmul.f32 %v1751, 1.442695
        %v1758 = vpow.pop %v1757
        %v1759 = vmul.f32 %v1752, 1.442695
        %v1760 = vpow.pop %v1759
        %v1761 = vadd.f32 %v1754, 1.0
        %v1762 = vadd.f32 %v1756, 1.0
        %v1763 = vadd.f32 %v1758, 1.0
        %v1764 = vadd.f32 %v1760, 1.0
        %v1765 = vrcp.pop %v1761
        %v1766 = vmul.f32 1.0, %v1765
        %v1767 = vrcp.pop %v1762
        %v1768 = vmul.f32 1.0, %v1767
        %v1769 = vrcp.pop %v1763
        %v1770 = vmul.f32 1.0, %v1769
        %v1771 = vrcp.pop %v1764
        %v1772 = vmul.f32 1.0, %v1771
        %v1777 = vcombine.low %v1766, %v1768
        %v1778 = vcombine.low %v1770, %v1772
        %v1780 = vunpack.c.l.s4 1966171168
        %v1781 = vunpack.c.0.s8 %v1780
        %v1782 = vlaneseq
        %v1783 = vshrl.u32 %v1782, 7
        %v1784 = vsub.s32 %v1781, %v1783
        %v1785 = vrot.slane %v1777, %v1784
        %v1787 = vunpack.c.l.s4 1966171168
        %v1788 = vunpack.c.0.s8 %v1787
        %v1789 = vlaneseq
        %v1790 = vshrl.u32 %v1789, 7
        %v1791 = vsub.s32 %v1788, %v1790
        %v1792 = vrot.slane %v1778, %v1791
        %v1793 = vcombine.low %v1785, %v1792
        %v1795 = vunpack.c.l.s4 1966171168
        %v1796 = vunpack.c.0.s8 %v1795
        %v1797 = vlaneseq
        %v1798 = vshrl.u32 %v1797, 7
        %v1799 = vsub.s32 %v1796, %v1798
        %v1800 = vrot.slane %v1793, %v1799
        %v1802 = vlaneseq
        %vm1803 = vcmp.ge.s32.totalorder %v1802, 0
        %vm1804 = vcmp.lt.s32.totalorder %v1802, 512
        %vm1805 = vmand %vm1803, %vm1804
        %1806 = vst.msk [vmem:[%s286] sm:$0xf] %vm1805, %v1800
        %s1807 = sand.u32 %s183, 1
        %s1808 = scalar_lea.sflag [#allocation4], %s1807
        %s1809 = sand.u32 %s183, 1
        %s1810 = smul.addr %s1809, 4
        %s1811 = scalar_lea.vmem [#allocation3], %s1810
        // Predicated region
        $region49: #{tpu_custom_call.1} parent=47 // pred_check
          %p1812 = pneg %p193
        $region50: #{tpu_custom_call.1} parent=47 // pred_check_branch
          %1814 = sbr.rel (%p1812) target = $region52
        $region51: #{tpu_custom_call.1} parent=47 // pred_region
          %s1815 = smul.u32 4, %s23
          %s1817 = ssub.s32 64, 64
          %1818 = vsyncadd %s1808, %s1817
          %s1819 = smul.addr %s1815, 16
          %s1820 = scalar_lea.hbm %s7, %s1819
          %s1822 = sshll.u32 %s1811, 4
          %s1823 = int_to_ptr.vmem [resolvable:$true] %s1822
          %1825 = dma.vmem_to_hbm [thread:$0]  %s1823, 64, %s1820, %s1808
        $region52: #{tpu_custom_call.1} parent=47 // pred_fallthru
          _
      $region48: #{tpu_custom_call.1} parent=5 // pred_fallthru
        _
      %p1826 = scmp.le.s32.totalorder 2, %s18
      // Predicated region
      $region53: #{tpu_custom_call.1} parent=5 // pred_check
        %p1827 = pneg %p1826
      $region54: #{tpu_custom_call.1} parent=5 // pred_check_branch
        %1829 = sbr.rel (%p1827) target = $region56
      $region55: #{tpu_custom_call.1} parent=5 // pred_region
        %s1830 = ssub.s32 %s18, 2
        // Predicated region
        $region57: #{tpu_custom_call.1} parent=55 // pred_check
          %p1831 = pneg %p199
        $region58: #{tpu_custom_call.1} parent=55 // pred_check_branch
          %1833 = sbr.rel (%p1831) target = $region60
        $region59: #{tpu_custom_call.1} parent=55 // pred_region
          %s1834 = sand.u32 %s184, 1
          %s1835 = scalar_lea.sflag [#allocation4], %s1834
          %s1836 = sand.u32 %s184, 1
          %s1837 = smul.addr %s1836, 4
          %s1838 = scalar_lea.vmem [#allocation3], %s1837
          %1839 = dma.done %s1835, 64
        $region60: #{tpu_custom_call.1} parent=55 // pred_fallthru
          _
      $region56: #{tpu_custom_call.1} parent=5 // pred_fallthru
        _
    $region6: #{tpu_custom_call.1} parent=1 // loop_footer
      %s22 = sadd.s32 1, %s18
    $region7: #{tpu_custom_call.1} parent=1 // loop_footer_branch
      %17 = sbr.rel target = $region3
    $region8: #{tpu_custom_call.1} parent=1 // loop_exit
      _
    %1840 = vsyncpa [#allocation4], 1
    %s1841 = scalar_lea.sflag [#allocation4], 1
    %1842 = vsyncpa %s1841, 1

</llo_original>
